<compile_context>
chip_gen: v5e
topology: v5e:2x2
jax: 0.10.0
libtpu: 0.0.40
codegen_flags: <defaults>
</compile_context>

<pallas_src>
import jax
import jax.numpy as jnp
from jax.experimental import pallas as pl
from jax.experimental.pallas import tpu as pltpu


def _round_up(n, m):
    return ((n + m - 1) // m) * m


def encoder_kernel(x_ref, w1_ref, b1_ref, w2_ref, b2_ref, w3_ref, b3_ref, o_ref):
    # Layer 1: Linear(x_dim -> h1) + ReLU   (bf16 operands, f32 accumulate)
    h = jnp.dot(x_ref[...], w1_ref[...], preferred_element_type=jnp.float32)
    h = jnp.maximum(h + b1_ref[...], 0.0)
    # Layer 2: Linear(h1 -> h2) + ReLU
    h = jnp.dot(h.astype(jnp.bfloat16), w2_ref[...], preferred_element_type=jnp.float32)
    h = jnp.maximum(h + b2_ref[...], 0.0)
    # Layer 3: Linear(h2 -> z_pad) + ReLU   (z padded to lane-dense 128 multiple)
    z = jnp.dot(h.astype(jnp.bfloat16), w3_ref[...], preferred_element_type=jnp.float32)
    o_ref[...] = jnp.maximum(z + b3_ref[...], 0.0)


def encoder_forward(x, params, *, tile_b=256):
    """x: [B, x_dim] float32 -> [B, z_dim] float32."""
    w1, b1, w2, b2, w3, b3 = params
    B, x_dim = x.shape
    h1 = w1.shape[1]
    h2 = w2.shape[1]
    z_dim = w3.shape[1]

    # ---- padding / tiling decisions -------------------------------------
    x_dim_p = _round_up(x_dim, 128)          # lane-align the contraction dim
    z_pad = _round_up(z_dim, 128)            # lane-dense output (full-width stores)
    tile_b = max(8, min(tile_b, _round_up(B, 8)))  # don't over-tile tiny batches
    B_p = _round_up(B, tile_b)
    grid = (B_p // tile_b,)

    # ---- prepare operands (bf16 MXU inputs, f32 biases) ------------------
    x_p = x.astype(jnp.bfloat16)
    if x_dim_p != x_dim:
        x_p = jnp.pad(x_p, ((0, 0), (0, x_dim_p - x_dim)))
    if B_p != B:
        x_p = jnp.pad(x_p, ((0, B_p - B), (0, 0)))

    w1_p = w1.astype(jnp.bfloat16)
    if x_dim_p != x_dim:
        w1_p = jnp.pad(w1_p, ((0, x_dim_p - x_dim), (0, 0)))   # zero rows: exact
    w2_p = w2.astype(jnp.bfloat16)
    w3_p = w3.astype(jnp.bfloat16)
    b3_p = b3
    if z_pad != z_dim:
        w3_p = jnp.pad(w3_p, ((0, 0), (0, z_pad - z_dim)))
        b3_p = jnp.pad(b3, ((0, 0), (0, z_pad - z_dim)))

    # ---- cost / VMEM hints ------------------------------------------------
    flops = 2 * B_p * (x_dim_p * h1 + h1 * h2 + h2 * z_pad)
    bytes_accessed = (
        B_p * x_dim_p * 2                                  # x stream (bf16)
        + B_p * z_pad * 4                                  # output stream (f32)
        + (x_dim_p * h1 + h1 * h2 + h2 * z_pad) * 2        # weights (fetched once)
        + (h1 + h2 + z_pad) * 4                            # biases
    )
    cost = pl.CostEstimate(flops=flops, transcendentals=0,
                           bytes_accessed=bytes_accessed)

    # Rough resident-VMEM estimate: double-buffered streamed blocks + weights
    # (double-buffered by default) + f32 intermediates.
    vmem_est = (
        2 * (tile_b * x_dim_p * 2 + tile_b * z_pad * 4)
        + 2 * ((x_dim_p * h1 + h1 * h2 + h2 * z_pad) * 2 + (h1 + h2 + z_pad) * 4)
        + tile_b * (h1 + h2) * 4
    )
    cp_kwargs = dict(dimension_semantics=("parallel",))
    if vmem_est > 12 * 1024 * 1024:
        # Only raise the scoped-VMEM limit when the tile actually needs it
        # (v5e default is 16 MiB; cap well under v7x's 64 MiB physical VMEM).
        cp_kwargs["vmem_limit_bytes"] = min(int(vmem_est * 3 // 2), 48 * 1024 * 1024)
    compiler_params = pltpu.CompilerParams(**cp_kwargs)

    # Weights/biases are small, use a constant index_map so they stay resident
    # in VMEM across the whole batch loop (fetched from HBM exactly once).
    full = lambda shape: pl.BlockSpec(shape, lambda i: tuple(0 for _ in shape))

    out = pl.pallas_call(
        encoder_kernel,
        out_shape=jax.ShapeDtypeStruct((B_p, z_pad), jnp.float32),
        grid_spec=pltpu.PrefetchScalarGridSpec(
            num_scalar_prefetch=0,
            grid=grid,
            in_specs=[
                pl.BlockSpec((tile_b, x_dim_p), lambda i: (i, 0)),
                full((x_dim_p, h1)),
                full((1, h1)),
                full((h1, h2)),
                full((1, h2)),
                full((h2, z_pad)),
                full((1, z_pad)),
            ],
            out_specs=pl.BlockSpec((tile_b, z_pad), lambda i: (i, 0)),
        ),
        compiler_params=compiler_params,
        cost_estimate=cost,
    )(x_p, w1_p, b1, w2_p, b2, w3_p, b3_p)

    return out[:B, :z_dim]


def xavier_normal(key, fan_in, fan_out):
    # Matches torch.nn.init.xavier_normal_: std = sqrt(2 / (fan_in + fan_out))
    std = (2.0 / (fan_in + fan_out)) ** 0.5
    return std * jax.random.normal(key, (fan_in, fan_out), dtype=jnp.float32)


def init_encoder_params(key, x_dim, h_dim, z_dim):
    dims = [x_dim] + list(h_dim) + [z_dim]
    keys = jax.random.split(key, len(dims) - 1)
    params = []
    for k, din, dout in zip(keys, dims[:-1], dims[1:]):
        w = xavier_normal(k, din, dout)        # stored [in, out]
        b = jnp.zeros((1, dout), jnp.float32)  # bias zeroed, as in AE.reset_parameters
        params.extend([w, b])
    return tuple(params)


def encoder_reference_f32(x, params):
    w1, b1, w2, b2, w3, b3 = params
    h = jax.nn.relu(x @ w1 + b1)
    h = jax.nn.relu(h @ w2 + b2)
    return jax.nn.relu(h @ w3 + b3)


def encoder_reference_bf16(x, params):
    # Same numerical path as the kernel: bf16 MXU operands, f32 accumulate,
    # bias-add + ReLU in f32.
    w1, b1, w2, b2, w3, b3 = params
    h = jnp.dot(x.astype(jnp.bfloat16), w1.astype(jnp.bfloat16),
                preferred_element_type=jnp.float32)
    h = jnp.maximum(h + b1, 0.0)
    h = jnp.dot(h.astype(jnp.bfloat16), w2.astype(jnp.bfloat16),
                preferred_element_type=jnp.float32)
    h = jnp.maximum(h + b2, 0.0)
    z = jnp.dot(h.astype(jnp.bfloat16), w3.astype(jnp.bfloat16),
                preferred_element_type=jnp.float32)
    return jnp.maximum(z + b3, 0.0)


if __name__ == "__main__":
    # h_dim = [1024, 128] is fixed by AE.py; x_dim / z_dim kept small.
    # B=512 gives a 2-step grid (tile_b=256) so the batch axis can shard
    # across both TensorCores on v7x.
    B, x_dim, z_dim = 512, 256, 32
    h_dim = [1024, 128]

    key = jax.random.PRNGKey(0)
    kx, kp = jax.random.split(key)
    x = jax.random.uniform(kx, (B, x_dim), dtype=jnp.float32)
    params = init_encoder_params(kp, x_dim, h_dim, z_dim)

    out = encoder_forward(x, params)
    out = jax.block_until_ready(out)
    assert out.shape == (B, z_dim)

    # Tight check against a reference with identical bf16-matmul / f32-accum math.
    ref_bf16 = encoder_reference_bf16(x, params)
    assert jnp.allclose(out, ref_bf16, atol=1e-4, rtol=1e-4), "mismatch vs bf16 reference"

    # Loose check against the pure-f32 PyTorch-equivalent math.
    ref_f32 = encoder_reference_f32(x, params)
    assert jnp.allclose(out, ref_f32, atol=2e-2, rtol=2e-2), "mismatch vs f32 reference"

    print("KERNEL_OK")
</pallas_src>

<mosaic_0001>
module attributes {stable_mosaic.version = 11 : i64} {
  func.func @encoder_kernel(%arg0: i32, %arg1: memref<256x256xbf16, #tpu.memory_space<vmem>>, %arg2: memref<256x1024xbf16, #tpu.memory_space<vmem>>, %arg3: memref<1x1024xf32, #tpu.memory_space<vmem>>, %arg4: memref<1024x128xbf16, #tpu.memory_space<vmem>>, %arg5: memref<1x128xf32, #tpu.memory_space<vmem>>, %arg6: memref<128x128xbf16, #tpu.memory_space<vmem>>, %arg7: memref<1x128xf32, #tpu.memory_space<vmem>>, %arg8: memref<256x128xf32, #tpu.memory_space<vmem>>) attributes {dimension_semantics = [#tpu.dimension_semantics<parallel>], iteration_bounds = array<i64: 2>, scalar_prefetch = 0 : i64, scratch_operands = 0 : i64, tpu.core_type = #tpu.core_type<tc>, window_params = [{transform_indices = @transform_0, window_bounds = array<i64: 256, 256>}, {pipeline_mode = #tpu.pipeline_mode<synchronous>, transform_indices = @transform_1, window_bounds = array<i64: 256, 1024>}, {pipeline_mode = #tpu.pipeline_mode<synchronous>, transform_indices = @transform_2, window_bounds = array<i64: 1, 1024>}, {pipeline_mode = #tpu.pipeline_mode<synchronous>, transform_indices = @transform_3, window_bounds = array<i64: 1024, 128>}, {pipeline_mode = #tpu.pipeline_mode<synchronous>, transform_indices = @transform_4, window_bounds = array<i64: 1, 128>}, {pipeline_mode = #tpu.pipeline_mode<synchronous>, transform_indices = @transform_5, window_bounds = array<i64: 128, 128>}, {pipeline_mode = #tpu.pipeline_mode<synchronous>, transform_indices = @transform_6, window_bounds = array<i64: 1, 128>}, {transform_indices = @transform_7, window_bounds = array<i64: 256, 128>}]} {
    %c0 = arith.constant 0 : index
    %c0_0 = arith.constant 0 : index
    %0 = vector.load %arg1[%c0, %c0_0] : memref<256x256xbf16, #tpu.memory_space<vmem>>, vector<256x256xbf16>
    %c0_1 = arith.constant 0 : index
    %c0_2 = arith.constant 0 : index
    %1 = vector.load %arg2[%c0_1, %c0_2] : memref<256x1024xbf16, #tpu.memory_space<vmem>>, vector<256x1024xbf16>
    %cst = arith.constant dense<0.000000e+00> : vector<256x1024xf32>
    %2 = tpu.matmul %0, %1, %cst {dimension_numbers = #tpu.dot_dimension_numbers<[1], [0], [0], [1], [0, 0, 1, 1], [], []>} : vector<256x256xbf16>, vector<256x1024xbf16>, vector<256x1024xf32> -> vector<256x1024xf32>
    %c0_3 = arith.constant 0 : index
    %c0_4 = arith.constant 0 : index
    %3 = vector.load %arg3[%c0_3, %c0_4] : memref<1x1024xf32, #tpu.memory_space<vmem>>, vector<1x1024xf32>
    %4 = vector.broadcast %3 : vector<1x1024xf32> to vector<256x1024xf32>
    %5 = arith.addf %2, %4 : vector<256x1024xf32>
    %cst_5 = arith.constant 0.000000e+00 : f32
    %6 = vector.broadcast %cst_5 : f32 to vector<256x1024xf32>
    %7 = arith.maximumf %5, %6 : vector<256x1024xf32>
    %8 = arith.truncf %7 : vector<256x1024xf32> to vector<256x1024xbf16>
    %c0_6 = arith.constant 0 : index
    %c0_7 = arith.constant 0 : index
    %9 = vector.load %arg4[%c0_6, %c0_7] : memref<1024x128xbf16, #tpu.memory_space<vmem>>, vector<1024x128xbf16>
    %cst_8 = arith.constant dense<0.000000e+00> : vector<256x128xf32>
    %10 = tpu.matmul %8, %9, %cst_8 {dimension_numbers = #tpu.dot_dimension_numbers<[1], [0], [0], [1], [0, 0, 1, 1], [], []>} : vector<256x1024xbf16>, vector<1024x128xbf16>, vector<256x128xf32> -> vector<256x128xf32>
    %c0_9 = arith.constant 0 : index
    %c0_10 = arith.constant 0 : index
    %11 = vector.load %arg5[%c0_9, %c0_10] : memref<1x128xf32, #tpu.memory_space<vmem>>, vector<1x128xf32>
    %12 = vector.broadcast %11 : vector<1x128xf32> to vector<256x128xf32>
    %13 = arith.addf %10, %12 : vector<256x128xf32>
    %cst_11 = arith.constant 0.000000e+00 : f32
    %14 = vector.broadcast %cst_11 : f32 to vector<256x128xf32>
    %15 = arith.maximumf %13, %14 : vector<256x128xf32>
    %16 = arith.truncf %15 : vector<256x128xf32> to vector<256x128xbf16>
    %c0_12 = arith.constant 0 : index
    %c0_13 = arith.constant 0 : index
    %17 = vector.load %arg6[%c0_12, %c0_13] : memref<128x128xbf16, #tpu.memory_space<vmem>>, vector<128x128xbf16>
    %cst_14 = arith.constant dense<0.000000e+00> : vector<256x128xf32>
    %18 = tpu.matmul %16, %17, %cst_14 {dimension_numbers = #tpu.dot_dimension_numbers<[1], [0], [0], [1], [0, 0, 1, 1], [], []>} : vector<256x128xbf16>, vector<128x128xbf16>, vector<256x128xf32> -> vector<256x128xf32>
    %c0_15 = arith.constant 0 : index
    %c0_16 = arith.constant 0 : index
    %19 = vector.load %arg7[%c0_15, %c0_16] : memref<1x128xf32, #tpu.memory_space<vmem>>, vector<1x128xf32>
    %20 = vector.broadcast %19 : vector<1x128xf32> to vector<256x128xf32>
    %21 = arith.addf %18, %20 : vector<256x128xf32>
    %cst_17 = arith.constant 0.000000e+00 : f32
    %22 = vector.broadcast %cst_17 : f32 to vector<256x128xf32>
    %23 = arith.maximumf %21, %22 : vector<256x128xf32>
    %c0_18 = arith.constant 0 : index
    %c0_19 = arith.constant 0 : index
    %24 = vector.load %arg8[%c0_18, %c0_19] : memref<256x128xf32, #tpu.memory_space<vmem>>, vector<256x128xf32>
    tpu.vector_store %arg8[%c0_18, %c0_19], %23 {strides = array<i32>} : memref<256x128xf32, #tpu.memory_space<vmem>>, vector<256x128xf32>,
    return
  }
  func.func @transform_0(%arg0: i32) -> (i32, i32) {
    %c0_i32 = arith.constant 0 : i32
    %c0_i32_0 = arith.constant 0 : i32
    return %arg0, %c0_i32 : i32, i32
  }
  func.func @transform_1(%arg0: i32) -> (i32, i32) {
    %c0_i32 = arith.constant 0 : i32
    %c0_i32_0 = arith.constant 0 : i32
    %c0_i32_1 = arith.constant 0 : i32
    return %c0_i32, %c0_i32_0 : i32, i32
  }
  func.func @transform_2(%arg0: i32) -> (i32, i32) {
    %c0_i32 = arith.constant 0 : i32
    %c0_i32_0 = arith.constant 0 : i32
    %c0_i32_1 = arith.constant 0 : i32
    return %c0_i32, %c0_i32_0 : i32, i32
  }
  func.func @transform_3(%arg0: i32) -> (i32, i32) {
    %c0_i32 = arith.constant 0 : i32
    %c0_i32_0 = arith.constant 0 : i32
    %c0_i32_1 = arith.constant 0 : i32
    return %c0_i32, %c0_i32_0 : i32, i32
  }
  func.func @transform_4(%arg0: i32) -> (i32, i32) {
    %c0_i32 = arith.constant 0 : i32
    %c0_i32_0 = arith.constant 0 : i32
    %c0_i32_1 = arith.constant 0 : i32
    return %c0_i32, %c0_i32_0 : i32, i32
  }
  func.func @transform_5(%arg0: i32) -> (i32, i32) {
    %c0_i32 = arith.constant 0 : i32
    %c0_i32_0 = arith.constant 0 : i32
    %c0_i32_1 = arith.constant 0 : i32
    return %c0_i32, %c0_i32_0 : i32, i32
  }
  func.func @transform_6(%arg0: i32) -> (i32, i32) {
    %c0_i32 = arith.constant 0 : i32
    %c0_i32_0 = arith.constant 0 : i32
    %c0_i32_1 = arith.constant 0 : i32
    return %c0_i32, %c0_i32_0 : i32, i32
  }
  func.func @transform_7(%arg0: i32) -> (i32, i32) {
    %c0_i32 = arith.constant 0 : i32
    %c0_i32_0 = arith.constant 0 : i32
    return %arg0, %c0_i32 : i32, i32
  }
}

</mosaic_0001>

<llo_original>
// kernel: tpu_custom_call.1
$region0: #{tpu_custom_call.1}
  #allocation0 [shape = 'u32[]', space=smem, size = 0x4, offset = 0x4, fixed_abs, tag = 'smem constant byte address 0x4 - core index']
  #allocation1 [shape = 'u32[72,128]{1,0:T(1,128)}', space=vmem, size = 0x9000, scoped, tag = 'internal scratch']
  %s0 = inlined_call_operand.hbm [shape: bf16[512,256], index: 0, kind: input, shape index: {}]
  %s1 = inlined_call_operand.hbm [shape: bf16[256,1024], index: 1, kind: input, shape index: {}]
  %s2 = inlined_call_operand.hbm [shape: f32[1,1024], index: 2, kind: input, shape index: {}]
  %s3 = inlined_call_operand.hbm [shape: bf16[1024,128], index: 3, kind: input, shape index: {}]
  %s4 = inlined_call_operand.vmem [shape: f32[1,128], index: 4, kind: input, shape index: {}]
  %s5 = inlined_call_operand.hbm [shape: bf16[128,128], index: 5, kind: input, shape index: {}]
  %s6 = inlined_call_operand.vmem [shape: f32[1,128], index: 6, kind: input, shape index: {}]
  %s7 = inlined_call_operand.hbm [shape: f32[512,128], index: 7, kind: output, shape index: {}]
  %s8 = sld [smem:[#allocation0]]
  $region81: #{tpu_custom_call.1} parent=0
    _
  %s10 = ssub.s32 1, %s8
  %s11 = scalar_select 0, %s10, %s8
  $region1: #{tpu_custom_call.1} parent=0
    #allocation2 [shape = 'u8[262144]{0}', space=vmem, size = 0x40000, scoped, tag = 'input window, operand 0']
    #allocation3 [shape = 's32[2]{0}', space=sflag, size = 0x8, scoped, tag = 'scoped memory for tpu_custom_call.1']
    #allocation4 [shape = 's32[2]{0}', space=sflag, size = 0x8, scoped, tag = 'scoped memory for tpu_custom_call.1']
    #allocation5 [shape = 'u8[524288]{0}', space=vmem, size = 0x80000, scoped, tag = 'input window, operand 1, single buffered']
    #allocation6 [shape = 's32[1]{0}', space=sflag, size = 0x4, scoped, tag = 'scoped memory for tpu_custom_call.1']
    #allocation7 [shape = 'u8[4096]{0}', space=vmem, size = 0x1000, scoped, tag = 'input window, operand 2, single buffered']
    #allocation8 [shape = 'u8[262144]{0}', space=vmem, size = 0x40000, scoped, tag = 'input window, operand 3, single buffered']
    #allocation9 [shape = 's32[1]{0}', space=sflag, size = 0x4, scoped, tag = 'scoped memory for tpu_custom_call.1']
    #allocation10 [shape = 'u8[32768]{0}', space=vmem, size = 0x8000, scoped, tag = 'input window, operand 5, single buffered']
    #allocation11 [shape = 'u8[262144]{0}', space=vmem, size = 0x40000, scoped, tag = 'output window, operand 0']
    %12 = vsyncpa [#allocation3], 0
    %s13 = scalar_lea.sflag [#allocation3], 1
    %14 = vsyncpa %s13, 0
    %15 = vsyncpa [#allocation6], 0
    %16 = vsyncpa [#allocation9], 0
    %17 = vsyncpa [#allocation4], 0
    %s18 = scalar_lea.sflag [#allocation4], 1
    %19 = vsyncpa %s18, 0
    loop: start=0, step=1, limit=4
    $region2: #{tpu_custom_call.1} parent=1 // loop_pre_header
      _
    $region3: #{tpu_custom_call.1} parent=1 // loop_header
      %s21 = sphi 0, %s25
      %p22 = scmp.ge.s32.totalorder %s21, 4
      %s31 = sphi 0, %s33
      %s34 = sphi 0, %s31
      %s35 = sphi 0, %s34
      %s51 = sphi 0, %s35
      %s55 = sphi 0, %s55
      %s57 = sphi 0, %s55
      %s58 = sphi 0, %s57
      %s72 = sphi 0, %s58
      %s76 = sphi 0, %s76
      %s78 = sphi 0, %s76
      %s79 = sphi 0, %s78
      %s93 = sphi 0, %s79
      %s97 = sphi 0, %s97
      %s99 = sphi 0, %s97
      %s100 = sphi 0, %s99
      %s114 = sphi 0, %s100
      %s118 = sphi 0, %s118
      %s120 = sphi 0, %s118
      %s121 = sphi 0, %s120
      %s135 = sphi 0, %s121
      %s139 = sphi 0, %s139
      %s141 = sphi 0, %s139
      %s142 = sphi 0, %s141
      %s156 = sphi 0, %s142
      %s160 = sphi 0, %s160
      %s162 = sphi 0, %s160
      %s163 = sphi 0, %s162
      %s177 = sphi 0, %s163
      %s183 = sphi 0, %s185
      %s186 = sphi 0, %s183
      %s187 = sphi 0, %s186
      %s203 = sphi 0, %s187
    $region4: #{tpu_custom_call.1} parent=1 // loop_header_branch
      %24 = sbr.rel (%p22) target = $region8
    $region5: #{tpu_custom_call.1} parent=1 // loop_body
      %s26 = ssub.s32 %s21, 1
      %s27 = ssub.s32 %s21, 2
      %s28 = sadd.s32 %s21, 1
      %s29 = ssub.s32 %s21, %s28
      %p30 = scmp.eq.s32.totalorder %s29, 0
      %s32 = sadd.s32 %s31, 1
      %s33 = scalar_select %p30, %s31, %s32
      %p36 = pneg %p30
      %p37 = scmp.eq.s32.totalorder %s21, 1
      %p38 = por %p36, %p37
      %p39 = scmp.ne.s32.totalorder %s31, %s34
      %p40 = scmp.eq.s32.totalorder %s21, 0
      %p41 = por %p39, %p40
      %p42 = scmp.ne.s32.totalorder %s31, %s34
      %p43 = scmp.eq.s32.totalorder %s26, 1
      %p44 = por %p42, %p43
      %p45 = scmp.ne.s32.totalorder %s34, %s35
      %p46 = scmp.eq.s32.totalorder %s26, 0
      %p47 = por %p45, %p46
      %p48 = scmp.ne.s32.totalorder %s34, %s35
      %p49 = scmp.eq.s32.totalorder %s27, 1
      %p50 = por %p48, %p49
      %p52 = scmp.ne.s32.totalorder %s35, %s51
      %p53 = scmp.eq.s32.totalorder %s27, 0
      %p54 = por %p52, %p53
      %s56 = sadd.s32 %s55, 1
      %p59 = scmp.eq.s32.totalorder %s21, 1
      %p60 = scmp.ne.s32.totalorder %s55, %s57
      %p61 = scmp.eq.s32.totalorder %s21, 0
      %p62 = por %p60, %p61
      %p63 = scmp.ne.s32.totalorder %s55, %s57
      %p64 = scmp.eq.s32.totalorder %s26, 1
      %p65 = por %p63, %p64
      %p66 = scmp.ne.s32.totalorder %s57, %s58
      %p67 = scmp.eq.s32.totalorder %s26, 0
      %p68 = por %p66, %p67
      %p69 = scmp.ne.s32.totalorder %s57, %s58
      %p70 = scmp.eq.s32.totalorder %s27, 1
      %p71 = por %p69, %p70
      %p73 = scmp.ne.s32.totalorder %s58, %s72
      %p74 = scmp.eq.s32.totalorder %s27, 0
      %p75 = por %p73, %p74
      %s77 = sadd.s32 %s76, 1
      %p80 = scmp.eq.s32.totalorder %s21, 1
      %p81 = scmp.ne.s32.totalorder %s76, %s78
      %p82 = scmp.eq.s32.totalorder %s21, 0
      %p83 = por %p81, %p82
      %p84 = scmp.ne.s32.totalorder %s76, %s78
      %p85 = scmp.eq.s32.totalorder %s26, 1
      %p86 = por %p84, %p85
      %p87 = scmp.ne.s32.totalorder %s78, %s79
      %p88 = scmp.eq.s32.totalorder %s26, 0
      %p89 = por %p87, %p88
      %p90 = scmp.ne.s32.totalorder %s78, %s79
      %p91 = scmp.eq.s32.totalorder %s27, 1
      %p92 = por %p90, %p91
      %p94 = scmp.ne.s32.totalorder %s79, %s93
      %p95 = scmp.eq.s32.totalorder %s27, 0
      %p96 = por %p94, %p95
      %s98 = sadd.s32 %s97, 1
      %p101 = scmp.eq.s32.totalorder %s21, 1
      %p102 = scmp.ne.s32.totalorder %s97, %s99
      %p103 = scmp.eq.s32.totalorder %s21, 0
      %p104 = por %p102, %p103
      %p105 = scmp.ne.s32.totalorder %s97, %s99
      %p106 = scmp.eq.s32.totalorder %s26, 1
      %p107 = por %p105, %p106
      %p108 = scmp.ne.s32.totalorder %s99, %s100
      %p109 = scmp.eq.s32.totalorder %s26, 0
      %p110 = por %p108, %p109
      %p111 = scmp.ne.s32.totalorder %s99, %s100
      %p112 = scmp.eq.s32.totalorder %s27, 1
      %p113 = por %p111, %p112
      %p115 = scmp.ne.s32.totalorder %s100, %s114
      %p116 = scmp.eq.s32.totalorder %s27, 0
      %p117 = por %p115, %p116
      %s119 = sadd.s32 %s118, 1
      %p122 = scmp.eq.s32.totalorder %s21, 1
      %p123 = scmp.ne.s32.totalorder %s118, %s120
      %p124 = scmp.eq.s32.totalorder %s21, 0
      %p125 = por %p123, %p124
      %p126 = scmp.ne.s32.totalorder %s118, %s120
      %p127 = scmp.eq.s32.totalorder %s26, 1
      %p128 = por %p126, %p127
      %p129 = scmp.ne.s32.totalorder %s120, %s121
      %p130 = scmp.eq.s32.totalorder %s26, 0
      %p131 = por %p129, %p130
      %p132 = scmp.ne.s32.totalorder %s120, %s121
      %p133 = scmp.eq.s32.totalorder %s27, 1
      %p134 = por %p132, %p133
      %p136 = scmp.ne.s32.totalorder %s121, %s135
      %p137 = scmp.eq.s32.totalorder %s27, 0
      %p138 = por %p136, %p137
      %s140 = sadd.s32 %s139, 1
      %p143 = scmp.eq.s32.totalorder %s21, 1
      %p144 = scmp.ne.s32.totalorder %s139, %s141
      %p145 = scmp.eq.s32.totalorder %s21, 0
      %p146 = por %p144, %p145
      %p147 = scmp.ne.s32.totalorder %s139, %s141
      %p148 = scmp.eq.s32.totalorder %s26, 1
      %p149 = por %p147, %p148
      %p150 = scmp.ne.s32.totalorder %s141, %s142
      %p151 = scmp.eq.s32.totalorder %s26, 0
      %p152 = por %p150, %p151
      %p153 = scmp.ne.s32.totalorder %s141, %s142
      %p154 = scmp.eq.s32.totalorder %s27, 1
      %p155 = por %p153, %p154
      %p157 = scmp.ne.s32.totalorder %s142, %s156
      %p158 = scmp.eq.s32.totalorder %s27, 0
      %p159 = por %p157, %p158
      %s161 = sadd.s32 %s160, 1
      %p164 = scmp.eq.s32.totalorder %s21, 1
      %p165 = scmp.ne.s32.totalorder %s160, %s162
      %p166 = scmp.eq.s32.totalorder %s21, 0
      %p167 = por %p165, %p166
      %p168 = scmp.ne.s32.totalorder %s160, %s162
      %p169 = scmp.eq.s32.totalorder %s26, 1
      %p170 = por %p168, %p169
      %p171 = scmp.ne.s32.totalorder %s162, %s163
      %p172 = scmp.eq.s32.totalorder %s26, 0
      %p173 = por %p171, %p172
      %p174 = scmp.ne.s32.totalorder %s162, %s163
      %p175 = scmp.eq.s32.totalorder %s27, 1
      %p176 = por %p174, %p175
      %p178 = scmp.ne.s32.totalorder %s163, %s177
      %p179 = scmp.eq.s32.totalorder %s27, 0
      %p180 = por %p178, %p179
      %s181 = ssub.s32 %s21, %s28
      %p182 = scmp.eq.s32.totalorder %s181, 0
      %s184 = sadd.s32 %s183, 1
      %s185 = scalar_select %p182, %s183, %s184
      %p188 = pneg %p182
      %p189 = scmp.eq.s32.totalorder %s21, 1
      %p190 = por %p188, %p189
      %p191 = scmp.ne.s32.totalorder %s183, %s186
      %p192 = scmp.eq.s32.totalorder %s21, 0
      %p193 = por %p191, %p192
      %p194 = scmp.ne.s32.totalorder %s183, %s186
      %p195 = scmp.eq.s32.totalorder %s26, 1
      %p196 = por %p194, %p195
      %p197 = scmp.ne.s32.totalorder %s186, %s187
      %p198 = scmp.eq.s32.totalorder %s26, 0
      %p199 = por %p197, %p198
      %p200 = scmp.ne.s32.totalorder %s186, %s187
      %p201 = scmp.eq.s32.totalorder %s27, 1
      %p202 = por %p200, %p201
      %p204 = scmp.ne.s32.totalorder %s187, %s203
      %p205 = scmp.eq.s32.totalorder %s27, 0
      %p206 = por %p204, %p205
      %p207 = scmp.le.s32.totalorder 1, %s21
      %p208 = scmp.lt.s32.totalorder %s21, 3
      %p209 = pnand %p207, %p208
      %p210 = pneg %p209
      // Predicated region
      $region9: #{tpu_custom_call.1} parent=5 // pred_check
        _
      $region10: #{tpu_custom_call.1} parent=5 // pred_check_branch
        %212 = sbr.rel (%p209) target = $region12
      $region11: #{tpu_custom_call.1} parent=5 // pred_region
        %s213 = ssub.s32 %s21, 1
        // Predicated region
        $region13: #{tpu_custom_call.1} parent=11 // pred_check
          %p214 = pneg %p68
        $region14: #{tpu_custom_call.1} parent=11 // pred_check_branch
          %216 = sbr.rel (%p214) target = $region16
        $region15: #{tpu_custom_call.1} parent=11 // pred_region
          %218 = vsyncadd [#allocation6], 0
          %s219 = sshll.u32 %s1, 4
          %s220 = int_to_ptr.hbm [resolvable:$true] %s219
          %s221 = sshll.u32 [#allocation5], 4
          %s222 = int_to_ptr.vmem [resolvable:$true] %s221
          %227 = dma.hbm_to_vmem [thread:$0]  %s220, 16384, %s222, [#allocation6], 512, 512, 32
        $region16: #{tpu_custom_call.1} parent=11 // pred_fallthru
          _
        // Predicated region
        $region17: #{tpu_custom_call.1} parent=11 // pred_check
          %p228 = pneg %p89
        $region18: #{tpu_custom_call.1} parent=11 // pred_check_branch
          %230 = sbr.rel (%p228) target = $region20
        $region19: #{tpu_custom_call.1} parent=11 // pred_region
          %232 = vsyncadd [#allocation6], 0
          %s234 = sshll.u32 %s2, 4
          %s235 = int_to_ptr.hbm [resolvable:$true] %s234
          %s236 = sshll.u32 [#allocation7], 4
          %s237 = int_to_ptr.vmem [resolvable:$true] %s236
          %239 = dma.hbm_to_vmem [thread:$0]  %s235, 128, %s237, [#allocation6]
        $region20: #{tpu_custom_call.1} parent=11 // pred_fallthru
          _
        // Predicated region
        $region21: #{tpu_custom_call.1} parent=11 // pred_check
          %p240 = pneg %p110
        $region22: #{tpu_custom_call.1} parent=11 // pred_check_branch
          %242 = sbr.rel (%p240) target = $region24
        $region23: #{tpu_custom_call.1} parent=11 // pred_region
          %244 = vsyncadd [#allocation9], 0
          %s245 = sshll.u32 %s3, 4
          %s246 = int_to_ptr.hbm [resolvable:$true] %s245
          %s247 = sshll.u32 [#allocation8], 4
          %s248 = int_to_ptr.vmem [resolvable:$true] %s247
          %253 = dma.hbm_to_vmem [thread:$0]  %s246, 8192, %s248, [#allocation9], 64, 64, 4
        $region24: #{tpu_custom_call.1} parent=11 // pred_fallthru
          _
        // Predicated region
        $region25: #{tpu_custom_call.1} parent=11 // pred_check
          %p254 = pneg %p131
        $region26: #{tpu_custom_call.1} parent=11 // pred_check_branch
          %256 = sbr.rel (%p254) target = $region28
        $region27: #{tpu_custom_call.1} parent=11 // pred_region
          _
        $region28: #{tpu_custom_call.1} parent=11 // pred_fallthru
          _
        // Predicated region
        $region29: #{tpu_custom_call.1} parent=11 // pred_check
          %p257 = pneg %p152
        $region30: #{tpu_custom_call.1} parent=11 // pred_check_branch
          %259 = sbr.rel (%p257) target = $region32
        $region31: #{tpu_custom_call.1} parent=11 // pred_region
          %261 = vsyncadd [#allocation9], 0
          %s262 = sshll.u32 %s5, 4
          %s263 = int_to_ptr.hbm [resolvable:$true] %s262
          %s264 = sshll.u32 [#allocation10], 4
          %s265 = int_to_ptr.vmem [resolvable:$true] %s264
          %270 = dma.hbm_to_vmem [thread:$0]  %s263, 1024, %s265, [#allocation9], 64, 64, 4
        $region32: #{tpu_custom_call.1} parent=11 // pred_fallthru
          _
        // Predicated region
        $region33: #{tpu_custom_call.1} parent=11 // pred_check
          %p271 = pneg %p173
        $region34: #{tpu_custom_call.1} parent=11 // pred_check_branch
          %273 = sbr.rel (%p271) target = $region36
        $region35: #{tpu_custom_call.1} parent=11 // pred_region
          _
        $region36: #{tpu_custom_call.1} parent=11 // pred_fallthru
          _
      $region12: #{tpu_custom_call.1} parent=5 // pred_fallthru
        _
      %p274 = scmp.lt.s32.totalorder %s21, 2
      // Predicated region
      $region37: #{tpu_custom_call.1} parent=5 // pred_check
        %p275 = pneg %p274
      $region38: #{tpu_custom_call.1} parent=5 // pred_check_branch
        %277 = sbr.rel (%p275) target = $region40
      $region39: #{tpu_custom_call.1} parent=5 // pred_region
        // Predicated region
        $region41: #{tpu_custom_call.1} parent=39 // pred_check
          %p278 = pneg %p41
        $region42: #{tpu_custom_call.1} parent=39 // pred_check_branch
          %280 = sbr.rel (%p278) target = $region44
        $region43: #{tpu_custom_call.1} parent=39 // pred_region
          %s281 = sand.u32 %s31, 1
          %s282 = scalar_lea.sflag [#allocation3], %s281
          %s283 = sand.u32 %s31, 1
          %s284 = smul.addr %s283, 256
          %s285 = scalar_lea.vmem [#allocation2], %s284
          %s286 = smul.u32 32, %s21
          %288 = vsyncadd %s282, 0
          %s289 = smul.addr %s286, 2
          %s290 = smul.addr %s289, 4
          %s291 = scalar_lea.hbm %s0, %s290
          %s292 = sshll.u32 %s291, 4
          %s293 = int_to_ptr.hbm [resolvable:$true] %s292
          %s294 = sshll.u32 %s285, 4
          %s295 = int_to_ptr.vmem [resolvable:$true] %s294
          %300 = dma.hbm_to_vmem [thread:$0]  %s293, 4096, %s295, %s282, 128, 128, 8
        $region44: #{tpu_custom_call.1} parent=39 // pred_fallthru
          _
      $region40: #{tpu_custom_call.1} parent=5 // pred_fallthru
        _
      %p301 = scmp.le.s32.totalorder 1, %s21
      %p302 = scmp.lt.s32.totalorder %s21, 3
      %p303 = pnand %p301, %p302
      %p304 = pneg %p303
      // Predicated region
      $region45: #{tpu_custom_call.1} parent=5 // pred_check
        _
      $region46: #{tpu_custom_call.1} parent=5 // pred_check_branch
        %306 = sbr.rel (%p303) target = $region48
      $region47: #{tpu_custom_call.1} parent=5 // pred_region
        %s307 = ssub.s32 %s21, 1
        %s308 = sand.u32 %s34, 1
        %s309 = scalar_lea.sflag [#allocation3], %s308
        %s310 = sand.u32 %s34, 1
        %s311 = smul.addr %s310, 256
        %s312 = scalar_lea.vmem [#allocation2], %s311
        // Predicated region
        $region49: #{tpu_custom_call.1} parent=47 // pred_check
          %p313 = pneg %p47
        $region50: #{tpu_custom_call.1} parent=47 // pred_check_branch
          %315 = sbr.rel (%p313) target = $region52
        $region51: #{tpu_custom_call.1} parent=47 // pred_region
          %317 = dma.done %s309, 4096
        $region52: #{tpu_custom_call.1} parent=47 // pred_fallthru
          _
        // Predicated region
        $region53: #{tpu_custom_call.1} parent=47 // pred_check
          %p318 = pneg %p68
        $region54: #{tpu_custom_call.1} parent=47 // pred_check_branch
          %320 = sbr.rel (%p318) target = $region56
        $region55: #{tpu_custom_call.1} parent=47 // pred_region
          %322 = dma.done [#allocation6], 16384
        $region56: #{tpu_custom_call.1} parent=47 // pred_fallthru
          _
        // Predicated region
        $region57: #{tpu_custom_call.1} parent=47 // pred_check
          %p323 = pneg %p89
        $region58: #{tpu_custom_call.1} parent=47 // pred_check_branch
          %325 = sbr.rel (%p323) target = $region60
        $region59: #{tpu_custom_call.1} parent=47 // pred_region
          %327 = dma.done [#allocation6], 128
        $region60: #{tpu_custom_call.1} parent=47 // pred_fallthru
          _
        // Predicated region
        $region61: #{tpu_custom_call.1} parent=47 // pred_check
          %p328 = pneg %p110
        $region62: #{tpu_custom_call.1} parent=47 // pred_check_branch
          %330 = sbr.rel (%p328) target = $region64
        $region63: #{tpu_custom_call.1} parent=47 // pred_region
          %332 = dma.done [#allocation9], 8192
        $region64: #{tpu_custom_call.1} parent=47 // pred_fallthru
          _
        // Predicated region
        $region65: #{tpu_custom_call.1} parent=47 // pred_check
          %p333 = pneg %p152
        $region66: #{tpu_custom_call.1} parent=47 // pred_check_branch
          %335 = sbr.rel (%p333) target = $region68
        $region67: #{tpu_custom_call.1} parent=47 // pred_region
          %337 = dma.done [#allocation9], 1024
        $region68: #{tpu_custom_call.1} parent=47 // pred_fallthru
          _
        %s338 = sand.u32 %s34, 1
        %s339 = scalar_lea.sflag [#allocation3], %s338
        %s340 = sand.u32 %s34, 1
        %s341 = smul.addr %s340, 256
        %s342 = scalar_lea.vmem [#allocation2], %s341
        %p343 = pneg %p47
        %p344 = pneg %p44
        %p345 = pneg %p68
        %p346 = pneg %p65
        %p347 = pneg %p89
        %p348 = pneg %p86
        %p349 = pneg %p110
        %p350 = pneg %p107
        %p351 = pneg %p131
        %p352 = pneg %p128
        %p353 = pneg %p152
        %p354 = pneg %p149
        %p355 = pneg %p173
        %p356 = pneg %p170
        %p357 = pneg %p199
        %p358 = pneg %p196
        %s359 = sand.u32 %s186, 1
        %s360 = scalar_lea.sflag [#allocation4], %s359
        %s361 = sand.u32 %s186, 1
        %s362 = smul.addr %s361, 256
        %s363 = scalar_lea.vmem [#allocation11], %s362
        %s364 = smul.u32 32, %s26
        %s365 = smul.u32 32, %s26
        %v366 = vld [vmem:[%s312] sm:$0xff]
        %v367 = vld [vmem:[%s312 + $0x8] sm:$0xff]
        %v368 = vld [vmem:[%s312 + $0x10] sm:$0xff]
        %v369 = vld [vmem:[%s312 + $0x18] sm:$0xff]
        %v370 = vld [vmem:[%s312 + $0x20] sm:$0xff]
        %v371 = vld [vmem:[%s312 + $0x28] sm:$0xff]
        %v372 = vld [vmem:[%s312 + $0x30] sm:$0xff]
        %v373 = vld [vmem:[%s312 + $0x38] sm:$0xff]
        %v374 = vld [vmem:[%s312 + $0x40] sm:$0xff]
        %v375 = vld [vmem:[%s312 + $0x48] sm:$0xff]
        %v376 = vld [vmem:[%s312 + $0x50] sm:$0xff]
        %v377 = vld [vmem:[%s312 + $0x58] sm:$0xff]
        %v378 = vld [vmem:[%s312 + $0x60] sm:$0xff]
        %v379 = vld [vmem:[%s312 + $0x68] sm:$0xff]
        %v380 = vld [vmem:[%s312 + $0x70] sm:$0xff]
        %v381 = vld [vmem:[%s312 + $0x78] sm:$0xff]
        %v382 = vld [vmem:[%s312 + $0x80] sm:$0xff]
        %v383 = vld [vmem:[%s312 + $0x88] sm:$0xff]
        %v384 = vld [vmem:[%s312 + $0x90] sm:$0xff]
        %v385 = vld [vmem:[%s312 + $0x98] sm:$0xff]
        %v386 = vld [vmem:[%s312 + $0xa0] sm:$0xff]
        %v387 = vld [vmem:[%s312 + $0xa8] sm:$0xff]
        %v388 = vld [vmem:[%s312 + $0xb0] sm:$0xff]
        %v389 = vld [vmem:[%s312 + $0xb8] sm:$0xff]
        %v390 = vld [vmem:[%s312 + $0xc0] sm:$0xff]
        %v391 = vld [vmem:[%s312 + $0xc8] sm:$0xff]
        %v392 = vld [vmem:[%s312 + $0xd0] sm:$0xff]
        %v393 = vld [vmem:[%s312 + $0xd8] sm:$0xff]
        %v394 = vld [vmem:[%s312 + $0xe0] sm:$0xff]
        %v395 = vld [vmem:[%s312 + $0xe8] sm:$0xff]
        %v396 = vld [vmem:[%s312 + $0xf0] sm:$0xff]
        %v397 = vld [vmem:[%s312 + $0xf8] sm:$0xff]
        %v398 = vld [vmem:[#allocation5] sm:$0xff]
        %v399 = vld [vmem:[#allocation5 + $0x8] sm:$0xff]
        %v400 = vld [vmem:[#allocation5 + $0x10] sm:$0xff]
        %v401 = vld [vmem:[#allocation5 + $0x18] sm:$0xff]
        %v402 = vld [vmem:[#allocation5 + $0x20] sm:$0xff]
        %v403 = vld [vmem:[#allocation5 + $0x28] sm:$0xff]
        %v404 = vld [vmem:[#allocation5 + $0x30] sm:$0xff]
        %v405 = vld [vmem:[#allocation5 + $0x38] sm:$0xff]
        %v406 = vld [vmem:[#allocation5 + $0x40] sm:$0xff]
        %v407 = vld [vmem:[#allocation5 + $0x48] sm:$0xff]
        %v408 = vld [vmem:[#allocation5 + $0x50] sm:$0xff]
        %v409 = vld [vmem:[#allocation5 + $0x58] sm:$0xff]
        %v410 = vld [vmem:[#allocation5 + $0x60] sm:$0xff]
        %v411 = vld [vmem:[#allocation5 + $0x68] sm:$0xff]
        %v412 = vld [vmem:[#allocation5 + $0x70] sm:$0xff]
        %v413 = vld [vmem:[#allocation5 + $0x78] sm:$0xff]
        %v414 = vld [vmem:[#allocation5 + $0x80] sm:$0xff]
        %v415 = vld [vmem:[#allocation5 + $0x88] sm:$0xff]
        %v416 = vld [vmem:[#allocation5 + $0x90] sm:$0xff]
        %v417 = vld [vmem:[#allocation5 + $0x98] sm:$0xff]
        %v418 = vld [vmem:[#allocation5 + $0xa0] sm:$0xff]
        %v419 = vld [vmem:[#allocation5 + $0xa8] sm:$0xff]
        %v420 = vld [vmem:[#allocation5 + $0xb0] sm:$0xff]
        %v421 = vld [vmem:[#allocation5 + $0xb8] sm:$0xff]
        %v422 = vld [vmem:[#allocation5 + $0xc0] sm:$0xff]
        %v423 = vld [vmem:[#allocation5 + $0xc8] sm:$0xff]
        %v424 = vld [vmem:[#allocation5 + $0xd0] sm:$0xff]
        %v425 = vld [vmem:[#allocation5 + $0xd8] sm:$0xff]
        %v426 = vld [vmem:[#allocation5 + $0xe0] sm:$0xff]
        %v427 = vld [vmem:[#allocation5 + $0xe8] sm:$0xff]
        %v428 = vld [vmem:[#allocation5 + $0xf0] sm:$0xff]
        %v429 = vld [vmem:[#allocation5 + $0xf8] sm:$0xff]
        %v430 = vld [vmem:[#allocation5 + $0x100] sm:$0xff]
        %v431 = vld [vmem:[#allocation5 + $0x108] sm:$0xff]
        %v432 = vld [vmem:[#allocation5 + $0x110] sm:$0xff]
        %v433 = vld [vmem:[#allocation5 + $0x118] sm:$0xff]
        %v434 = vld [vmem:[#allocation5 + $0x120] sm:$0xff]
        %v435 = vld [vmem:[#allocation5 + $0x128] sm:$0xff]
        %v436 = vld [vmem:[#allocation5 + $0x130] sm:$0xff]
        %v437 = vld [vmem:[#allocation5 + $0x138] sm:$0xff]
        %v438 = vld [vmem:[#allocation5 + $0x140] sm:$0xff]
        %v439 = vld [vmem:[#allocation5 + $0x148] sm:$0xff]
        %v440 = vld [vmem:[#allocation5 + $0x150] sm:$0xff]
        %v441 = vld [vmem:[#allocation5 + $0x158] sm:$0xff]
        %v442 = vld [vmem:[#allocation5 + $0x160] sm:$0xff]
        %v443 = vld [vmem:[#allocation5 + $0x168] sm:$0xff]
        %v444 = vld [vmem:[#allocation5 + $0x170] sm:$0xff]
        %v445 = vld [vmem:[#allocation5 + $0x178] sm:$0xff]
        %v446 = vld [vmem:[#allocation5 + $0x180] sm:$0xff]
        %v447 = vld [vmem:[#allocation5 + $0x188] sm:$0xff]
        %v448 = vld [vmem:[#allocation5 + $0x190] sm:$0xff]
        %v449 = vld [vmem:[#allocation5 + $0x198] sm:$0xff]
        %v450 = vld [vmem:[#allocation5 + $0x1a0] sm:$0xff]
        %v451 = vld [vmem:[#allocation5 + $0x1a8] sm:$0xff]
        %v452 = vld [vmem:[#allocation5 + $0x1b0] sm:$0xff]
        %v453 = vld [vmem:[#allocation5 + $0x1b8] sm:$0xff]
        %v454 = vld [vmem:[#allocation5 + $0x1c0] sm:$0xff]
        %v455 = vld [vmem:[#allocation5 + $0x1c8] sm:$0xff]
        %v456 = vld [vmem:[#allocation5 + $0x1d0] sm:$0xff]
        %v457 = vld [vmem:[#allocation5 + $0x1d8] sm:$0xff]
        %v458 = vld [vmem:[#allocation5 + $0x1e0] sm:$0xff]
        %v459 = vld [vmem:[#allocation5 + $0x1e8] sm:$0xff]
        %v460 = vld [vmem:[#allocation5 + $0x1f0] sm:$0xff]
        %v461 = vld [vmem:[#allocation5 + $0x1f8] sm:$0xff]
        %v462 = vld [vmem:[#allocation5 + $0x200] sm:$0xff]
        %v463 = vld [vmem:[#allocation5 + $0x208] sm:$0xff]
        %v464 = vld [vmem:[#allocation5 + $0x210] sm:$0xff]
        %v465 = vld [vmem:[#allocation5 + $0x218] sm:$0xff]
        %v466 = vld [vmem:[#allocation5 + $0x220] sm:$0xff]
        %v467 = vld [vmem:[#allocation5 + $0x228] sm:$0xff]
        %v468 = vld [vmem:[#allocation5 + $0x230] sm:$0xff]
        %v469 = vld [vmem:[#allocation5 + $0x238] sm:$0xff]
        %v470 = vld [vmem:[#allocation5 + $0x240] sm:$0xff]
        %v471 = vld [vmem:[#allocation5 + $0x248] sm:$0xff]
        %v472 = vld [vmem:[#allocation5 + $0x250] sm:$0xff]
        %v473 = vld [vmem:[#allocation5 + $0x258] sm:$0xff]
        %v474 = vld [vmem:[#allocation5 + $0x260] sm:$0xff]
        %v475 = vld [vmem:[#allocation5 + $0x268] sm:$0xff]
        %v476 = vld [vmem:[#allocation5 + $0x270] sm:$0xff]
        %v477 = vld [vmem:[#allocation5 + $0x278] sm:$0xff]
        %v478 = vld [vmem:[#allocation5 + $0x280] sm:$0xff]
        %v479 = vld [vmem:[#allocation5 + $0x288] sm:$0xff]
        %v480 = vld [vmem:[#allocation5 + $0x290] sm:$0xff]
        %v481 = vld [vmem:[#allocation5 + $0x298] sm:$0xff]
        %v482 = vld [vmem:[#allocation5 + $0x2a0] sm:$0xff]
        %v483 = vld [vmem:[#allocation5 + $0x2a8] sm:$0xff]
        %v484 = vld [vmem:[#allocation5 + $0x2b0] sm:$0xff]
        %v485 = vld [vmem:[#allocation5 + $0x2b8] sm:$0xff]
        %v486 = vld [vmem:[#allocation5 + $0x2c0] sm:$0xff]
        %v487 = vld [vmem:[#allocation5 + $0x2c8] sm:$0xff]
        %v488 = vld [vmem:[#allocation5 + $0x2d0] sm:$0xff]
        %v489 = vld [vmem:[#allocation5 + $0x2d8] sm:$0xff]
        %v490 = vld [vmem:[#allocation5 + $0x2e0] sm:$0xff]
        %v491 = vld [vmem:[#allocation5 + $0x2e8] sm:$0xff]
        %v492 = vld [vmem:[#allocation5 + $0x2f0] sm:$0xff]
        %v493 = vld [vmem:[#allocation5 + $0x2f8] sm:$0xff]
        %v494 = vld [vmem:[#allocation5 + $0x300] sm:$0xff]
        %v495 = vld [vmem:[#allocation5 + $0x308] sm:$0xff]
        %v496 = vld [vmem:[#allocation5 + $0x310] sm:$0xff]
        %v497 = vld [vmem:[#allocation5 + $0x318] sm:$0xff]
        %v498 = vld [vmem:[#allocation5 + $0x320] sm:$0xff]
        %v499 = vld [vmem:[#allocation5 + $0x328] sm:$0xff]
        %v500 = vld [vmem:[#allocation5 + $0x330] sm:$0xff]
        %v501 = vld [vmem:[#allocation5 + $0x338] sm:$0xff]
        %v502 = vld [vmem:[#allocation5 + $0x340] sm:$0xff]
        %v503 = vld [vmem:[#allocation5 + $0x348] sm:$0xff]
        %v504 = vld [vmem:[#allocation5 + $0x350] sm:$0xff]
        %v505 = vld [vmem:[#allocation5 + $0x358] sm:$0xff]
        %v506 = vld [vmem:[#allocation5 + $0x360] sm:$0xff]
        %v507 = vld [vmem:[#allocation5 + $0x368] sm:$0xff]
        %v508 = vld [vmem:[#allocation5 + $0x370] sm:$0xff]
        %v509 = vld [vmem:[#allocation5 + $0x378] sm:$0xff]
        %v510 = vld [vmem:[#allocation5 + $0x380] sm:$0xff]
        %v511 = vld [vmem:[#allocation5 + $0x388] sm:$0xff]
        %v512 = vld [vmem:[#allocation5 + $0x390] sm:$0xff]
        %v513 = vld [vmem:[#allocation5 + $0x398] sm:$0xff]
        %v514 = vld [vmem:[#allocation5 + $0x3a0] sm:$0xff]
        %v515 = vld [vmem:[#allocation5 + $0x3a8] sm:$0xff]
        %v516 = vld [vmem:[#allocation5 + $0x3b0] sm:$0xff]
        %v517 = vld [vmem:[#allocation5 + $0x3b8] sm:$0xff]
        %v518 = vld [vmem:[#allocation5 + $0x3c0] sm:$0xff]
        %v519 = vld [vmem:[#allocation5 + $0x3c8] sm:$0xff]
        %v520 = vld [vmem:[#allocation5 + $0x3d0] sm:$0xff]
        %v521 = vld [vmem:[#allocation5 + $0x3d8] sm:$0xff]
        %v522 = vld [vmem:[#allocation5 + $0x3e0] sm:$0xff]
        %v523 = vld [vmem:[#allocation5 + $0x3e8] sm:$0xff]
        %v524 = vld [vmem:[#allocation5 + $0x3f0] sm:$0xff]
        %v525 = vld [vmem:[#allocation5 + $0x3f8] sm:$0xff]
        %v526 = vld [vmem:[#allocation7] sm:$0xff]
        %v528 = vperm.slane %v526, 0
        %v529 = vperm.slane %v526, 1
        %v530 = vperm.slane %v526, 2
        %v531 = vperm.slane %v526, 3
        %v532 = vperm.slane %v526, 4
        %v533 = vperm.slane %v526, 5
        %v534 = vperm.slane %v526, 6
        %v535 = vperm.slane %v526, 7
        %v576 = vunpack.c.l.b16 %v366
        %v577 = vunpack.c.h.b16 %v366
        %v578 = vunpack.c.l.b16 %v367
        %v579 = vunpack.c.h.b16 %v367
        %v580 = vunpack.c.l.b16 %v368
        %v581 = vunpack.c.h.b16 %v368
        %v582 = vunpack.c.l.b16 %v369
        %v583 = vunpack.c.h.b16 %v369
        %v584 = vunpack.c.l.b16 %v370
        %v585 = vunpack.c.h.b16 %v370
        %v586 = vunpack.c.l.b16 %v371
        %v587 = vunpack.c.h.b16 %v371
        %v588 = vunpack.c.l.b16 %v372
        %v589 = vunpack.c.h.b16 %v372
        %v590 = vunpack.c.l.b16 %v373
        %v591 = vunpack.c.h.b16 %v373
        %v592 = vunpack.c.l.b16 %v374
        %v593 = vunpack.c.h.b16 %v374
        %v594 = vunpack.c.l.b16 %v375
        %v595 = vunpack.c.h.b16 %v375
        %v596 = vunpack.c.l.b16 %v376
        %v597 = vunpack.c.h.b16 %v376
        %v598 = vunpack.c.l.b16 %v377
        %v599 = vunpack.c.h.b16 %v377
        %v600 = vunpack.c.l.b16 %v378
        %v601 = vunpack.c.h.b16 %v378
        %v602 = vunpack.c.l.b16 %v379
        %v603 = vunpack.c.h.b16 %v379
        %v604 = vunpack.c.l.b16 %v380
        %v605 = vunpack.c.h.b16 %v380
        %v606 = vunpack.c.l.b16 %v381
        %v607 = vunpack.c.h.b16 %v381
        %v608 = vunpack.c.l.b16 %v382
        %v609 = vunpack.c.h.b16 %v382
        %v610 = vunpack.c.l.b16 %v383
        %v611 = vunpack.c.h.b16 %v383
        %v612 = vunpack.c.l.b16 %v384
        %v613 = vunpack.c.h.b16 %v384
        %v614 = vunpack.c.l.b16 %v385
        %v615 = vunpack.c.h.b16 %v385
        %v616 = vunpack.c.l.b16 %v386
        %v617 = vunpack.c.h.b16 %v386
        %v618 = vunpack.c.l.b16 %v387
        %v619 = vunpack.c.h.b16 %v387
        %v620 = vunpack.c.l.b16 %v388
        %v621 = vunpack.c.h.b16 %v388
        %v622 = vunpack.c.l.b16 %v389
        %v623 = vunpack.c.h.b16 %v389
        %v624 = vunpack.c.l.b16 %v390
        %v625 = vunpack.c.h.b16 %v390
        %v626 = vunpack.c.l.b16 %v391
        %v627 = vunpack.c.h.b16 %v391
        %v628 = vunpack.c.l.b16 %v392
        %v629 = vunpack.c.h.b16 %v392
        %v630 = vunpack.c.l.b16 %v393
        %v631 = vunpack.c.h.b16 %v393
        %v632 = vunpack.c.l.b16 %v394
        %v633 = vunpack.c.h.b16 %v394
        %v634 = vunpack.c.l.b16 %v395
        %v635 = vunpack.c.h.b16 %v395
        %v636 = vunpack.c.l.b16 %v396
        %v637 = vunpack.c.h.b16 %v396
        %v638 = vunpack.c.l.b16 %v397
        %v639 = vunpack.c.h.b16 %v397
        %v640 = vpack.c.b16 %v578, %v576
        %v641 = vpack.c.b16 %v579, %v577
        %v642 = vpack.c.b16 %v582, %v580
        %v643 = vpack.c.b16 %v583, %v581
        %v644 = vpack.c.b16 %v586, %v584
        %v645 = vpack.c.b16 %v587, %v585
        %v646 = vpack.c.b16 %v590, %v588
        %v647 = vpack.c.b16 %v591, %v589
        %v648 = vpack.c.b16 %v594, %v592
        %v649 = vpack.c.b16 %v595, %v593
        %v650 = vpack.c.b16 %v598, %v596
        %v651 = vpack.c.b16 %v599, %v597
        %v652 = vpack.c.b16 %v602, %v600
        %v653 = vpack.c.b16 %v603, %v601
        %v654 = vpack.c.b16 %v606, %v604
        %v655 = vpack.c.b16 %v607, %v605
        %v656 = vpack.c.b16 %v610, %v608
        %v657 = vpack.c.b16 %v611, %v609
        %v658 = vpack.c.b16 %v614, %v612
        %v659 = vpack.c.b16 %v615, %v613
        %v660 = vpack.c.b16 %v618, %v616
        %v661 = vpack.c.b16 %v619, %v617
        %v662 = vpack.c.b16 %v622, %v620
        %v663 = vpack.c.b16 %v623, %v621
        %v664 = vpack.c.b16 %v626, %v624
        %v665 = vpack.c.b16 %v627, %v625
        %v666 = vpack.c.b16 %v630, %v628
        %v667 = vpack.c.b16 %v631, %v629
        %v668 = vpack.c.b16 %v634, %v632
        %v669 = vpack.c.b16 %v635, %v633
        %v670 = vpack.c.b16 %v638, %v636
        %v671 = vpack.c.b16 %v639, %v637
        %v832 = vunpack.c.l.b16 %v398
        %v833 = vunpack.c.h.b16 %v398
        %v834 = vunpack.c.l.b16 %v399
        %v835 = vunpack.c.h.b16 %v399
        %v836 = vunpack.c.l.b16 %v400
        %v837 = vunpack.c.h.b16 %v400
        %v838 = vunpack.c.l.b16 %v401
        %v839 = vunpack.c.h.b16 %v401
        %v840 = vunpack.c.l.b16 %v402
        %v841 = vunpack.c.h.b16 %v402
        %v842 = vunpack.c.l.b16 %v403
        %v843 = vunpack.c.h.b16 %v403
        %v844 = vunpack.c.l.b16 %v404
        %v845 = vunpack.c.h.b16 %v404
        %v846 = vunpack.c.l.b16 %v405
        %v847 = vunpack.c.h.b16 %v405
        %v848 = vunpack.c.l.b16 %v406
        %v849 = vunpack.c.h.b16 %v406
        %v850 = vunpack.c.l.b16 %v407
        %v851 = vunpack.c.h.b16 %v407
        %v852 = vunpack.c.l.b16 %v408
        %v853 = vunpack.c.h.b16 %v408
        %v854 = vunpack.c.l.b16 %v409
        %v855 = vunpack.c.h.b16 %v409
        %v856 = vunpack.c.l.b16 %v410
        %v857 = vunpack.c.h.b16 %v410
        %v858 = vunpack.c.l.b16 %v411
        %v859 = vunpack.c.h.b16 %v411
        %v860 = vunpack.c.l.b16 %v412
        %v861 = vunpack.c.h.b16 %v412
        %v862 = vunpack.c.l.b16 %v413
        %v863 = vunpack.c.h.b16 %v413
        %v864 = vunpack.c.l.b16 %v414
        %v865 = vunpack.c.h.b16 %v414
        %v866 = vunpack.c.l.b16 %v415
        %v867 = vunpack.c.h.b16 %v415
        %v868 = vunpack.c.l.b16 %v416
        %v869 = vunpack.c.h.b16 %v416
        %v870 = vunpack.c.l.b16 %v417
        %v871 = vunpack.c.h.b16 %v417
        %v872 = vunpack.c.l.b16 %v418
        %v873 = vunpack.c.h.b16 %v418
        %v874 = vunpack.c.l.b16 %v419
        %v875 = vunpack.c.h.b16 %v419
        %v876 = vunpack.c.l.b16 %v420
        %v877 = vunpack.c.h.b16 %v420
        %v878 = vunpack.c.l.b16 %v421
        %v879 = vunpack.c.h.b16 %v421
        %v880 = vunpack.c.l.b16 %v422
        %v881 = vunpack.c.h.b16 %v422
        %v882 = vunpack.c.l.b16 %v423
        %v883 = vunpack.c.h.b16 %v423
        %v884 = vunpack.c.l.b16 %v424
        %v885 = vunpack.c.h.b16 %v424
        %v886 = vunpack.c.l.b16 %v425
        %v887 = vunpack.c.h.b16 %v425
        %v888 = vunpack.c.l.b16 %v426
        %v889 = vunpack.c.h.b16 %v426
        %v890 = vunpack.c.l.b16 %v427
        %v891 = vunpack.c.h.b16 %v427
        %v892 = vunpack.c.l.b16 %v428
        %v893 = vunpack.c.h.b16 %v428
        %v894 = vunpack.c.l.b16 %v429
        %v895 = vunpack.c.h.b16 %v429
        %v896 = vunpack.c.l.b16 %v430
        %v897 = vunpack.c.h.b16 %v430
        %v898 = vunpack.c.l.b16 %v431
        %v899 = vunpack.c.h.b16 %v431
        %v900 = vunpack.c.l.b16 %v432
        %v901 = vunpack.c.h.b16 %v432
        %v902 = vunpack.c.l.b16 %v433
        %v903 = vunpack.c.h.b16 %v433
        %v904 = vunpack.c.l.b16 %v434
        %v905 = vunpack.c.h.b16 %v434
        %v906 = vunpack.c.l.b16 %v435
        %v907 = vunpack.c.h.b16 %v435
        %v908 = vunpack.c.l.b16 %v436
        %v909 = vunpack.c.h.b16 %v436
        %v910 = vunpack.c.l.b16 %v437
        %v911 = vunpack.c.h.b16 %v437
        %v912 = vunpack.c.l.b16 %v438
        %v913 = vunpack.c.h.b16 %v438
        %v914 = vunpack.c.l.b16 %v439
        %v915 = vunpack.c.h.b16 %v439
        %v916 = vunpack.c.l.b16 %v440
        %v917 = vunpack.c.h.b16 %v440
        %v918 = vunpack.c.l.b16 %v441
        %v919 = vunpack.c.h.b16 %v441
        %v920 = vunpack.c.l.b16 %v442
        %v921 = vunpack.c.h.b16 %v442
        %v922 = vunpack.c.l.b16 %v443
        %v923 = vunpack.c.h.b16 %v443
        %v924 = vunpack.c.l.b16 %v444
        %v925 = vunpack.c.h.b16 %v444
        %v926 = vunpack.c.l.b16 %v445
        %v927 = vunpack.c.h.b16 %v445
        %v928 = vunpack.c.l.b16 %v446
        %v929 = vunpack.c.h.b16 %v446
        %v930 = vunpack.c.l.b16 %v447
        %v931 = vunpack.c.h.b16 %v447
        %v932 = vunpack.c.l.b16 %v448
        %v933 = vunpack.c.h.b16 %v448
        %v934 = vunpack.c.l.b16 %v449
        %v935 = vunpack.c.h.b16 %v449
        %v936 = vunpack.c.l.b16 %v450
        %v937 = vunpack.c.h.b16 %v450
        %v938 = vunpack.c.l.b16 %v451
        %v939 = vunpack.c.h.b16 %v451
        %v940 = vunpack.c.l.b16 %v452
        %v941 = vunpack.c.h.b16 %v452
        %v942 = vunpack.c.l.b16 %v453
        %v943 = vunpack.c.h.b16 %v453
        %v944 = vunpack.c.l.b16 %v454
        %v945 = vunpack.c.h.b16 %v454
        %v946 = vunpack.c.l.b16 %v455
        %v947 = vunpack.c.h.b16 %v455
        %v948 = vunpack.c.l.b16 %v456
        %v949 = vunpack.c.h.b16 %v456
        %v950 = vunpack.c.l.b16 %v457
        %v951 = vunpack.c.h.b16 %v457
        %v952 = vunpack.c.l.b16 %v458
        %v953 = vunpack.c.h.b16 %v458
        %v954 = vunpack.c.l.b16 %v459
        %v955 = vunpack.c.h.b16 %v459
        %v956 = vunpack.c.l.b16 %v460
        %v957 = vunpack.c.h.b16 %v460
        %v958 = vunpack.c.l.b16 %v461
        %v959 = vunpack.c.h.b16 %v461
        %v960 = vunpack.c.l.b16 %v462
        %v961 = vunpack.c.h.b16 %v462
        %v962 = vunpack.c.l.b16 %v463
        %v963 = vunpack.c.h.b16 %v463
        %v964 = vunpack.c.l.b16 %v464
        %v965 = vunpack.c.h.b16 %v464
        %v966 = vunpack.c.l.b16 %v465
        %v967 = vunpack.c.h.b16 %v465
        %v968 = vunpack.c.l.b16 %v466
        %v969 = vunpack.c.h.b16 %v466
        %v970 = vunpack.c.l.b16 %v467
        %v971 = vunpack.c.h.b16 %v467
        %v972 = vunpack.c.l.b16 %v468
        %v973 = vunpack.c.h.b16 %v468
        %v974 = vunpack.c.l.b16 %v469
        %v975 = vunpack.c.h.b16 %v469
        %v976 = vunpack.c.l.b16 %v470
        %v977 = vunpack.c.h.b16 %v470
        %v978 = vunpack.c.l.b16 %v471
        %v979 = vunpack.c.h.b16 %v471
        %v980 = vunpack.c.l.b16 %v472
        %v981 = vunpack.c.h.b16 %v472
        %v982 = vunpack.c.l.b16 %v473
        %v983 = vunpack.c.h.b16 %v473
        %v984 = vunpack.c.l.b16 %v474
        %v985 = vunpack.c.h.b16 %v474
        %v986 = vunpack.c.l.b16 %v475
        %v987 = vunpack.c.h.b16 %v475
        %v988 = vunpack.c.l.b16 %v476
        %v989 = vunpack.c.h.b16 %v476
        %v990 = vunpack.c.l.b16 %v477
        %v991 = vunpack.c.h.b16 %v477
        %v992 = vunpack.c.l.b16 %v478
        %v993 = vunpack.c.h.b16 %v478
        %v994 = vunpack.c.l.b16 %v479
        %v995 = vunpack.c.h.b16 %v479
        %v996 = vunpack.c.l.b16 %v480
        %v997 = vunpack.c.h.b16 %v480
        %v998 = vunpack.c.l.b16 %v481
        %v999 = vunpack.c.h.b16 %v481
        %v1000 = vunpack.c.l.b16 %v482
        %v1001 = vunpack.c.h.b16 %v482
        %v1002 = vunpack.c.l.b16 %v483
        %v1003 = vunpack.c.h.b16 %v483
        %v1004 = vunpack.c.l.b16 %v484
        %v1005 = vunpack.c.h.b16 %v484
        %v1006 = vunpack.c.l.b16 %v485
        %v1007 = vunpack.c.h.b16 %v485
        %v1008 = vunpack.c.l.b16 %v486
        %v1009 = vunpack.c.h.b16 %v486
        %v1010 = vunpack.c.l.b16 %v487
        %v1011 = vunpack.c.h.b16 %v487
        %v1012 = vunpack.c.l.b16 %v488
        %v1013 = vunpack.c.h.b16 %v488
        %v1014 = vunpack.c.l.b16 %v489
        %v1015 = vunpack.c.h.b16 %v489
        %v1016 = vunpack.c.l.b16 %v490
        %v1017 = vunpack.c.h.b16 %v490
        %v1018 = vunpack.c.l.b16 %v491
        %v1019 = vunpack.c.h.b16 %v491
        %v1020 = vunpack.c.l.b16 %v492
        %v1021 = vunpack.c.h.b16 %v492
        %v1022 = vunpack.c.l.b16 %v493
        %v1023 = vunpack.c.h.b16 %v493
        %v1024 = vunpack.c.l.b16 %v494
        %v1025 = vunpack.c.h.b16 %v494
        %v1026 = vunpack.c.l.b16 %v495
        %v1027 = vunpack.c.h.b16 %v495
        %v1028 = vunpack.c.l.b16 %v496
        %v1029 = vunpack.c.h.b16 %v496
        %v1030 = vunpack.c.l.b16 %v497
        %v1031 = vunpack.c.h.b16 %v497
        %v1032 = vunpack.c.l.b16 %v498
        %v1033 = vunpack.c.h.b16 %v498
        %v1034 = vunpack.c.l.b16 %v499
        %v1035 = vunpack.c.h.b16 %v499
        %v1036 = vunpack.c.l.b16 %v500
        %v1037 = vunpack.c.h.b16 %v500
        %v1038 = vunpack.c.l.b16 %v501
        %v1039 = vunpack.c.h.b16 %v501
        %v1040 = vunpack.c.l.b16 %v502
        %v1041 = vunpack.c.h.b16 %v502
        %v1042 = vunpack.c.l.b16 %v503
        %v1043 = vunpack.c.h.b16 %v503
        %v1044 = vunpack.c.l.b16 %v504
        %v1045 = vunpack.c.h.b16 %v504
        %v1046 = vunpack.c.l.b16 %v505
        %v1047 = vunpack.c.h.b16 %v505
        %v1048 = vunpack.c.l.b16 %v506
        %v1049 = vunpack.c.h.b16 %v506
        %v1050 = vunpack.c.l.b16 %v507
        %v1051 = vunpack.c.h.b16 %v507
        %v1052 = vunpack.c.l.b16 %v508
        %v1053 = vunpack.c.h.b16 %v508
        %v1054 = vunpack.c.l.b16 %v509
        %v1055 = vunpack.c.h.b16 %v509
        %v1056 = vunpack.c.l.b16 %v510
        %v1057 = vunpack.c.h.b16 %v510
        %v1058 = vunpack.c.l.b16 %v511
        %v1059 = vunpack.c.h.b16 %v511
        %v1060 = vunpack.c.l.b16 %v512
        %v1061 = vunpack.c.h.b16 %v512
        %v1062 = vunpack.c.l.b16 %v513
        %v1063 = vunpack.c.h.b16 %v513
        %v1064 = vunpack.c.l.b16 %v514
        %v1065 = vunpack.c.h.b16 %v514
        %v1066 = vunpack.c.l.b16 %v515
        %v1067 = vunpack.c.h.b16 %v515
        %v1068 = vunpack.c.l.b16 %v516
        %v1069 = vunpack.c.h.b16 %v516
        %v1070 = vunpack.c.l.b16 %v517
        %v1071 = vunpack.c.h.b16 %v517
        %v1072 = vunpack.c.l.b16 %v518
        %v1073 = vunpack.c.h.b16 %v518
        %v1074 = vunpack.c.l.b16 %v519
        %v1075 = vunpack.c.h.b16 %v519
        %v1076 = vunpack.c.l.b16 %v520
        %v1077 = vunpack.c.h.b16 %v520
        %v1078 = vunpack.c.l.b16 %v521
        %v1079 = vunpack.c.h.b16 %v521
        %v1080 = vunpack.c.l.b16 %v522
        %v1081 = vunpack.c.h.b16 %v522
        %v1082 = vunpack.c.l.b16 %v523
        %v1083 = vunpack.c.h.b16 %v523
        %v1084 = vunpack.c.l.b16 %v524
        %v1085 = vunpack.c.h.b16 %v524
        %v1086 = vunpack.c.l.b16 %v525
        %v1087 = vunpack.c.h.b16 %v525
        %v1088 = vpack.c.b16 %v840, %v832
        %v1089 = vpack.c.b16 %v841, %v833
        %v1090 = vpack.c.b16 %v842, %v834
        %v1091 = vpack.c.b16 %v843, %v835
        %v1092 = vpack.c.b16 %v844, %v836
        %v1093 = vpack.c.b16 %v845, %v837
        %v1094 = vpack.c.b16 %v846, %v838
        %v1095 = vpack.c.b16 %v847, %v839
        %v1096 = vpack.c.b16 %v856, %v848
        %v1097 = vpack.c.b16 %v857, %v849
        %v1098 = vpack.c.b16 %v858, %v850
        %v1099 = vpack.c.b16 %v859, %v851
        %v1100 = vpack.c.b16 %v860, %v852
        %v1101 = vpack.c.b16 %v861, %v853
        %v1102 = vpack.c.b16 %v862, %v854
        %v1103 = vpack.c.b16 %v863, %v855
        %v1104 = vpack.c.b16 %v872, %v864
        %v1105 = vpack.c.b16 %v873, %v865
        %v1106 = vpack.c.b16 %v874, %v866
        %v1107 = vpack.c.b16 %v875, %v867
        %v1108 = vpack.c.b16 %v876, %v868
        %v1109 = vpack.c.b16 %v877, %v869
        %v1110 = vpack.c.b16 %v878, %v870
        %v1111 = vpack.c.b16 %v879, %v871
        %v1112 = vpack.c.b16 %v888, %v880
        %v1113 = vpack.c.b16 %v889, %v881
        %v1114 = vpack.c.b16 %v890, %v882
        %v1115 = vpack.c.b16 %v891, %v883
        %v1116 = vpack.c.b16 %v892, %v884
        %v1117 = vpack.c.b16 %v893, %v885
        %v1118 = vpack.c.b16 %v894, %v886
        %v1119 = vpack.c.b16 %v895, %v887
        %v1120 = vpack.c.b16 %v904, %v896
        %v1121 = vpack.c.b16 %v905, %v897
        %v1122 = vpack.c.b16 %v906, %v898
        %v1123 = vpack.c.b16 %v907, %v899
        %v1124 = vpack.c.b16 %v908, %v900
        %v1125 = vpack.c.b16 %v909, %v901
        %v1126 = vpack.c.b16 %v910, %v902
        %v1127 = vpack.c.b16 %v911, %v903
        %v1128 = vpack.c.b16 %v920, %v912
        %v1129 = vpack.c.b16 %v921, %v913
        %v1130 = vpack.c.b16 %v922, %v914
        %v1131 = vpack.c.b16 %v923, %v915
        %v1132 = vpack.c.b16 %v924, %v916
        %v1133 = vpack.c.b16 %v925, %v917
        %v1134 = vpack.c.b16 %v926, %v918
        %v1135 = vpack.c.b16 %v927, %v919
        %v1136 = vpack.c.b16 %v936, %v928
        %v1137 = vpack.c.b16 %v937, %v929
        %v1138 = vpack.c.b16 %v938, %v930
        %v1139 = vpack.c.b16 %v939, %v931
        %v1140 = vpack.c.b16 %v940, %v932
        %v1141 = vpack.c.b16 %v941, %v933
        %v1142 = vpack.c.b16 %v942, %v934
        %v1143 = vpack.c.b16 %v943, %v935
        %v1144 = vpack.c.b16 %v952, %v944
        %v1145 = vpack.c.b16 %v953, %v945
        %v1146 = vpack.c.b16 %v954, %v946
        %v1147 = vpack.c.b16 %v955, %v947
        %v1148 = vpack.c.b16 %v956, %v948
        %v1149 = vpack.c.b16 %v957, %v949
        %v1150 = vpack.c.b16 %v958, %v950
        %v1151 = vpack.c.b16 %v959, %v951
        %v1152 = vpack.c.b16 %v968, %v960
        %v1153 = vpack.c.b16 %v969, %v961
        %v1154 = vpack.c.b16 %v970, %v962
        %v1155 = vpack.c.b16 %v971, %v963
        %v1156 = vpack.c.b16 %v972, %v964
        %v1157 = vpack.c.b16 %v973, %v965
        %v1158 = vpack.c.b16 %v974, %v966
        %v1159 = vpack.c.b16 %v975, %v967
        %v1160 = vpack.c.b16 %v984, %v976
        %v1161 = vpack.c.b16 %v985, %v977
        %v1162 = vpack.c.b16 %v986, %v978
        %v1163 = vpack.c.b16 %v987, %v979
        %v1164 = vpack.c.b16 %v988, %v980
        %v1165 = vpack.c.b16 %v989, %v981
        %v1166 = vpack.c.b16 %v990, %v982
        %v1167 = vpack.c.b16 %v991, %v983
        %v1168 = vpack.c.b16 %v1000, %v992
        %v1169 = vpack.c.b16 %v1001, %v993
        %v1170 = vpack.c.b16 %v1002, %v994
        %v1171 = vpack.c.b16 %v1003, %v995
        %v1172 = vpack.c.b16 %v1004, %v996
        %v1173 = vpack.c.b16 %v1005, %v997
        %v1174 = vpack.c.b16 %v1006, %v998
        %v1175 = vpack.c.b16 %v1007, %v999
        %v1176 = vpack.c.b16 %v1016, %v1008
        %v1177 = vpack.c.b16 %v1017, %v1009
        %v1178 = vpack.c.b16 %v1018, %v1010
        %v1179 = vpack.c.b16 %v1019, %v1011
        %v1180 = vpack.c.b16 %v1020, %v1012
        %v1181 = vpack.c.b16 %v1021, %v1013
        %v1182 = vpack.c.b16 %v1022, %v1014
        %v1183 = vpack.c.b16 %v1023, %v1015
        %v1184 = vpack.c.b16 %v1032, %v1024
        %v1185 = vpack.c.b16 %v1033, %v1025
        %v1186 = vpack.c.b16 %v1034, %v1026
        %v1187 = vpack.c.b16 %v1035, %v1027
        %v1188 = vpack.c.b16 %v1036, %v1028
        %v1189 = vpack.c.b16 %v1037, %v1029
        %v1190 = vpack.c.b16 %v1038, %v1030
        %v1191 = vpack.c.b16 %v1039, %v1031
        %v1192 = vpack.c.b16 %v1048, %v1040
        %v1193 = vpack.c.b16 %v1049, %v1041
        %v1194 = vpack.c.b16 %v1050, %v1042
        %v1195 = vpack.c.b16 %v1051, %v1043
        %v1196 = vpack.c.b16 %v1052, %v1044
        %v1197 = vpack.c.b16 %v1053, %v1045
        %v1198 = vpack.c.b16 %v1054, %v1046
        %v1199 = vpack.c.b16 %v1055, %v1047
        %v1200 = vpack.c.b16 %v1064, %v1056
        %v1201 = vpack.c.b16 %v1065, %v1057
        %v1202 = vpack.c.b16 %v1066, %v1058
        %v1203 = vpack.c.b16 %v1067, %v1059
        %v1204 = vpack.c.b16 %v1068, %v1060
        %v1205 = vpack.c.b16 %v1069, %v1061
        %v1206 = vpack.c.b16 %v1070, %v1062
        %v1207 = vpack.c.b16 %v1071, %v1063
        %v1208 = vpack.c.b16 %v1080, %v1072
        %v1209 = vpack.c.b16 %v1081, %v1073
        %v1210 = vpack.c.b16 %v1082, %v1074
        %v1211 = vpack.c.b16 %v1083, %v1075
        %v1212 = vpack.c.b16 %v1084, %v1076
        %v1213 = vpack.c.b16 %v1085, %v1077
        %v1214 = vpack.c.b16 %v1086, %v1078
        %v1215 = vpack.c.b16 %v1087, %v1079
        %1344 = vmatpush.bf16.msra.mxu0 %v1144
        %1345 = vmatpush.bf16.msra.mxu0 %v1136
        %1346 = vmatpush.bf16.msra.mxu0 %v1128
        %1347 = vmatpush.bf16.msra.mxu0 %v1120
        %1348 = vmatpush.bf16.msra.mxu0 %v1112
        %1349 = vmatpush.bf16.msra.mxu0 %v1104
        %1350 = vmatpush.bf16.msra.mxu0 %v1096
        %1351 = vmatpush.bf16.msra.mxu0 %v1088
        %1352 = vmatmul.bf16.gmra.mxu0 %v640
        %v1353 = vpop.f32.mrf.mxu0
        %v1354 = vadd.f32 %v528, %v1353
        %v1355 = vpop.f32.mrf.mxu0
        %v1356 = vadd.f32 %v528, %v1355
        %1357 = vmatmul.bf16.gmra.mxu0 %v642
        %v1358 = vpop.f32.mrf.mxu0
        %v1359 = vadd.f32 %v528, %v1358
        %v1360 = vpop.f32.mrf.mxu0
        %v1361 = vadd.f32 %v528, %v1360
        %1362 = vmatmul.bf16.gmra.mxu0 %v644
        %v1363 = vpop.f32.mrf.mxu0
        %v1364 = vadd.f32 %v528, %v1363
        %v1365 = vpop.f32.mrf.mxu0
        %v1366 = vadd.f32 %v528, %v1365
        %1367 = vmatmul.bf16.gmra.mxu0 %v646
        %v1368 = vpop.f32.mrf.mxu0
        %v1369 = vadd.f32 %v528, %v1368
        %v1370 = vpop.f32.mrf.mxu0
        %v1371 = vadd.f32 %v528, %v1370
        %1372 = vmatmul.bf16.gmra.mxu0 %v648
        %v1373 = vpop.f32.mrf.mxu0
        %v1374 = vadd.f32 %v528, %v1373
        %v1375 = vpop.f32.mrf.mxu0
        %v1376 = vadd.f32 %v528, %v1375
        %1377 = vmatmul.bf16.gmra.mxu0 %v650
        %v1378 = vpop.f32.mrf.mxu0
        %v1379 = vadd.f32 %v528, %v1378
        %v1380 = vpop.f32.mrf.mxu0
        %v1381 = vadd.f32 %v528, %v1380
        %1382 = vmatmul.bf16.gmra.mxu0 %v652
        %v1383 = vpop.f32.mrf.mxu0
        %v1384 = vadd.f32 %v528, %v1383
        %v1385 = vpop.f32.mrf.mxu0
        %v1386 = vadd.f32 %v528, %v1385
        %1387 = vmatmul.bf16.gmra.mxu0 %v654
        %v1388 = vpop.f32.mrf.mxu0
        %v1389 = vadd.f32 %v528, %v1388
        %v1390 = vpop.f32.mrf.mxu0
        %v1391 = vadd.f32 %v528, %v1390
        %1392 = vmatmul.bf16.gmra.mxu0 %v656
        %v1393 = vpop.f32.mrf.mxu0
        %v1394 = vadd.f32 %v528, %v1393
        %v1395 = vpop.f32.mrf.mxu0
        %v1396 = vadd.f32 %v528, %v1395
        %1397 = vmatmul.bf16.gmra.mxu0 %v658
        %v1398 = vpop.f32.mrf.mxu0
        %v1399 = vadd.f32 %v528, %v1398
        %v1400 = vpop.f32.mrf.mxu0
        %v1401 = vadd.f32 %v528, %v1400
        %1402 = vmatmul.bf16.gmra.mxu0 %v660
        %v1403 = vpop.f32.mrf.mxu0
        %v1404 = vadd.f32 %v528, %v1403
        %v1405 = vpop.f32.mrf.mxu0
        %v1406 = vadd.f32 %v528, %v1405
        %1407 = vmatmul.bf16.gmra.mxu0 %v662
        %v1408 = vpop.f32.mrf.mxu0
        %v1409 = vadd.f32 %v528, %v1408
        %v1410 = vpop.f32.mrf.mxu0
        %v1411 = vadd.f32 %v528, %v1410
        %1412 = vmatmul.bf16.gmra.mxu0 %v664
        %v1413 = vpop.f32.mrf.mxu0
        %v1414 = vadd.f32 %v528, %v1413
        %v1415 = vpop.f32.mrf.mxu0
        %v1416 = vadd.f32 %v528, %v1415
        %1417 = vmatmul.bf16.gmra.mxu0 %v666
        %v1418 = vpop.f32.mrf.mxu0
        %v1419 = vadd.f32 %v528, %v1418
        %v1420 = vpop.f32.mrf.mxu0
        %v1421 = vadd.f32 %v528, %v1420
        %1422 = vmatmul.bf16.gmra.mxu0 %v668
        %v1423 = vpop.f32.mrf.mxu0
        %v1424 = vadd.f32 %v528, %v1423
        %v1425 = vpop.f32.mrf.mxu0
        %v1426 = vadd.f32 %v528, %v1425
        %1427 = vmatmul.bf16.gmra.mxu0 %v670
        %v1428 = vpop.f32.mrf.mxu0
        %v1429 = vadd.f32 %v528, %v1428
        %v1430 = vpop.f32.mrf.mxu0
        %v1431 = vadd.f32 %v528, %v1430
        %1432 = vdwg.mxu0
        %1433 = vmatpush.bf16.msra.mxu0 %v1208
        %1434 = vmatpush.bf16.msra.mxu0 %v1200
        %1435 = vmatpush.bf16.msra.mxu0 %v1192
        %1436 = vmatpush.bf16.msra.mxu0 %v1184
        %1437 = vmatpush.bf16.msra.mxu0 %v1176
        %1438 = vmatpush.bf16.msra.mxu0 %v1168
        %1439 = vmatpush.bf16.msra.mxu0 %v1160
        %1440 = vmatpush.bf16.msra.mxu0 %v1152
        %1441 = vmatmul.bf16.gmra.mxu0 %v641
        %v1442 = vpop.f32.mrf.mxu0
        %v1443 = vadd.f32 %v1354, %v1442
        %v1444 = vpop.f32.mrf.mxu0
        %v1445 = vadd.f32 %v1356, %v1444
        %1446 = vmatmul.bf16.gmra.mxu0 %v643
        %v1447 = vpop.f32.mrf.mxu0
        %v1448 = vadd.f32 %v1359, %v1447
        %v1449 = vpop.f32.mrf.mxu0
        %v1450 = vadd.f32 %v1361, %v1449
        %1451 = vmatmul.bf16.gmra.mxu0 %v645
        %v1452 = vpop.f32.mrf.mxu0
        %v1453 = vadd.f32 %v1364, %v1452
        %v1454 = vpop.f32.mrf.mxu0
        %v1455 = vadd.f32 %v1366, %v1454
        %1456 = vmatmul.bf16.gmra.mxu0 %v647
        %v1457 = vpop.f32.mrf.mxu0
        %v1458 = vadd.f32 %v1369, %v1457
        %v1459 = vpop.f32.mrf.mxu0
        %v1460 = vadd.f32 %v1371, %v1459
        %1461 = vmatmul.bf16.gmra.mxu0 %v649
        %v1462 = vpop.f32.mrf.mxu0
        %v1463 = vadd.f32 %v1374, %v1462
        %v1464 = vpop.f32.mrf.mxu0
        %v1465 = vadd.f32 %v1376, %v1464
        %1466 = vmatmul.bf16.gmra.mxu0 %v651
        %v1467 = vpop.f32.mrf.mxu0
        %v1468 = vadd.f32 %v1379, %v1467
        %v1469 = vpop.f32.mrf.mxu0
        %v1470 = vadd.f32 %v1381, %v1469
        %1471 = vmatmul.bf16.gmra.mxu0 %v653
        %v1472 = vpop.f32.mrf.mxu0
        %v1473 = vadd.f32 %v1384, %v1472
        %v1474 = vpop.f32.mrf.mxu0
        %v1475 = vadd.f32 %v1386, %v1474
        %1476 = vmatmul.bf16.gmra.mxu0 %v655
        %v1477 = vpop.f32.mrf.mxu0
        %v1478 = vadd.f32 %v1389, %v1477
        %v1479 = vpop.f32.mrf.mxu0
        %v1480 = vadd.f32 %v1391, %v1479
        %1481 = vmatmul.bf16.gmra.mxu0 %v657
        %v1482 = vpop.f32.mrf.mxu0
        %v1483 = vadd.f32 %v1394, %v1482
        %v1484 = vpop.f32.mrf.mxu0
        %v1485 = vadd.f32 %v1396, %v1484
        %1486 = vmatmul.bf16.gmra.mxu0 %v659
        %v1487 = vpop.f32.mrf.mxu0
        %v1488 = vadd.f32 %v1399, %v1487
        %v1489 = vpop.f32.mrf.mxu0
        %v1490 = vadd.f32 %v1401, %v1489
        %1491 = vmatmul.bf16.gmra.mxu0 %v661
        %v1492 = vpop.f32.mrf.mxu0
        %v1493 = vadd.f32 %v1404, %v1492
        %v1494 = vpop.f32.mrf.mxu0
        %v1495 = vadd.f32 %v1406, %v1494
        %1496 = vmatmul.bf16.gmra.mxu0 %v663
        %v1497 = vpop.f32.mrf.mxu0
        %v1498 = vadd.f32 %v1409, %v1497
        %v1499 = vpop.f32.mrf.mxu0
        %v1500 = vadd.f32 %v1411, %v1499
        %1501 = vmatmul.bf16.gmra.mxu0 %v665
        %v1502 = vpop.f32.mrf.mxu0
        %v1503 = vadd.f32 %v1414, %v1502
        %v1504 = vpop.f32.mrf.mxu0
        %v1505 = vadd.f32 %v1416, %v1504
        %1506 = vmatmul.bf16.gmra.mxu0 %v667
        %v1507 = vpop.f32.mrf.mxu0
        %v1508 = vadd.f32 %v1419, %v1507
        %v1509 = vpop.f32.mrf.mxu0
        %v1510 = vadd.f32 %v1421, %v1509
        %1511 = vmatmul.bf16.gmra.mxu0 %v669
        %v1512 = vpop.f32.mrf.mxu0
        %v1513 = vadd.f32 %v1424, %v1512
        %v1514 = vpop.f32.mrf.mxu0
        %v1515 = vadd.f32 %v1426, %v1514
        %1516 = vmatmul.bf16.gmra.mxu0 %v671
        %v1517 = vpop.f32.mrf.mxu0
        %v1518 = vadd.f32 %v1429, %v1517
        %v1519 = vpop.f32.mrf.mxu0
        %v1520 = vadd.f32 %v1431, %v1519
        %1521 = vdwg.mxu0
        %1522 = vmatpush.bf16.msra.mxu0 %v1145
        %1523 = vmatpush.bf16.msra.mxu0 %v1137
        %1524 = vmatpush.bf16.msra.mxu0 %v1129
        %1525 = vmatpush.bf16.msra.mxu0 %v1121
        %1526 = vmatpush.bf16.msra.mxu0 %v1113
        %1527 = vmatpush.bf16.msra.mxu0 %v1105
        %1528 = vmatpush.bf16.msra.mxu0 %v1097
        %1529 = vmatpush.bf16.msra.mxu0 %v1089
        %1530 = vmatmul.bf16.gmra.mxu0 %v640
        %v1531 = vpop.f32.mrf.mxu0
        %v1532 = vadd.f32 %v529, %v1531
        %v1533 = vpop.f32.mrf.mxu0
        %v1534 = vadd.f32 %v529, %v1533
        %1535 = vmatmul.bf16.gmra.mxu0 %v642
        %v1536 = vpop.f32.mrf.mxu0
        %v1537 = vadd.f32 %v529, %v1536
        %v1538 = vpop.f32.mrf.mxu0
        %v1539 = vadd.f32 %v529, %v1538
        %1540 = vmatmul.bf16.gmra.mxu0 %v644
        %v1541 = vpop.f32.mrf.mxu0
        %v1542 = vadd.f32 %v529, %v1541
        %v1543 = vpop.f32.mrf.mxu0
        %v1544 = vadd.f32 %v529, %v1543
        %1545 = vmatmul.bf16.gmra.mxu0 %v646
        %v1546 = vpop.f32.mrf.mxu0
        %v1547 = vadd.f32 %v529, %v1546
        %v1548 = vpop.f32.mrf.mxu0
        %v1549 = vadd.f32 %v529, %v1548
        %1550 = vmatmul.bf16.gmra.mxu0 %v648
        %v1551 = vpop.f32.mrf.mxu0
        %v1552 = vadd.f32 %v529, %v1551
        %v1553 = vpop.f32.mrf.mxu0
        %v1554 = vadd.f32 %v529, %v1553
        %1555 = vmatmul.bf16.gmra.mxu0 %v650
        %v1556 = vpop.f32.mrf.mxu0
        %v1557 = vadd.f32 %v529, %v1556
        %v1558 = vpop.f32.mrf.mxu0
        %v1559 = vadd.f32 %v529, %v1558
        %1560 = vmatmul.bf16.gmra.mxu0 %v652
        %v1561 = vpop.f32.mrf.mxu0
        %v1562 = vadd.f32 %v529, %v1561
        %v1563 = vpop.f32.mrf.mxu0
        %v1564 = vadd.f32 %v529, %v1563
        %1565 = vmatmul.bf16.gmra.mxu0 %v654
        %v1566 = vpop.f32.mrf.mxu0
        %v1567 = vadd.f32 %v529, %v1566
        %v1568 = vpop.f32.mrf.mxu0
        %v1569 = vadd.f32 %v529, %v1568
        %1570 = vmatmul.bf16.gmra.mxu0 %v656
        %v1571 = vpop.f32.mrf.mxu0
        %v1572 = vadd.f32 %v529, %v1571
        %v1573 = vpop.f32.mrf.mxu0
        %v1574 = vadd.f32 %v529, %v1573
        %1575 = vmatmul.bf16.gmra.mxu0 %v658
        %v1576 = vpop.f32.mrf.mxu0
        %v1577 = vadd.f32 %v529, %v1576
        %v1578 = vpop.f32.mrf.mxu0
        %v1579 = vadd.f32 %v529, %v1578
        %1580 = vmatmul.bf16.gmra.mxu0 %v660
        %v1581 = vpop.f32.mrf.mxu0
        %v1582 = vadd.f32 %v529, %v1581
        %v1583 = vpop.f32.mrf.mxu0
        %v1584 = vadd.f32 %v529, %v1583
        %1585 = vmatmul.bf16.gmra.mxu0 %v662
        %v1586 = vpop.f32.mrf.mxu0
        %v1587 = vadd.f32 %v529, %v1586
        %v1588 = vpop.f32.mrf.mxu0
        %v1589 = vadd.f32 %v529, %v1588
        %1590 = vmatmul.bf16.gmra.mxu0 %v664
        %v1591 = vpop.f32.mrf.mxu0
        %v1592 = vadd.f32 %v529, %v1591
        %v1593 = vpop.f32.mrf.mxu0
        %v1594 = vadd.f32 %v529, %v1593
        %1595 = vmatmul.bf16.gmra.mxu0 %v666
        %v1596 = vpop.f32.mrf.mxu0
        %v1597 = vadd.f32 %v529, %v1596
        %v1598 = vpop.f32.mrf.mxu0
        %v1599 = vadd.f32 %v529, %v1598
        %1600 = vmatmul.bf16.gmra.mxu0 %v668
        %v1601 = vpop.f32.mrf.mxu0
        %v1602 = vadd.f32 %v529, %v1601
        %v1603 = vpop.f32.mrf.mxu0
        %v1604 = vadd.f32 %v529, %v1603
        %1605 = vmatmul.bf16.gmra.mxu0 %v670
        %v1606 = vpop.f32.mrf.mxu0
        %v1607 = vadd.f32 %v529, %v1606
        %v1608 = vpop.f32.mrf.mxu0
        %v1609 = vadd.f32 %v529, %v1608
        %1610 = vdwg.mxu0
        %1611 = vmatpush.bf16.msra.mxu0 %v1209
        %1612 = vmatpush.bf16.msra.mxu0 %v1201
        %1613 = vmatpush.bf16.msra.mxu0 %v1193
        %1614 = vmatpush.bf16.msra.mxu0 %v1185
        %1615 = vmatpush.bf16.msra.mxu0 %v1177
        %1616 = vmatpush.bf16.msra.mxu0 %v1169
        %1617 = vmatpush.bf16.msra.mxu0 %v1161
        %1618 = vmatpush.bf16.msra.mxu0 %v1153
        %1619 = vmatmul.bf16.gmra.mxu0 %v641
        %v1620 = vpop.f32.mrf.mxu0
        %v1621 = vadd.f32 %v1532, %v1620
        %v1622 = vpop.f32.mrf.mxu0
        %v1623 = vadd.f32 %v1534, %v1622
        %1624 = vmatmul.bf16.gmra.mxu0 %v643
        %v1625 = vpop.f32.mrf.mxu0
        %v1626 = vadd.f32 %v1537, %v1625
        %v1627 = vpop.f32.mrf.mxu0
        %v1628 = vadd.f32 %v1539, %v1627
        %1629 = vmatmul.bf16.gmra.mxu0 %v645
        %v1630 = vpop.f32.mrf.mxu0
        %v1631 = vadd.f32 %v1542, %v1630
        %v1632 = vpop.f32.mrf.mxu0
        %v1633 = vadd.f32 %v1544, %v1632
        %1634 = vmatmul.bf16.gmra.mxu0 %v647
        %v1635 = vpop.f32.mrf.mxu0
        %v1636 = vadd.f32 %v1547, %v1635
        %v1637 = vpop.f32.mrf.mxu0
        %v1638 = vadd.f32 %v1549, %v1637
        %1639 = vmatmul.bf16.gmra.mxu0 %v649
        %v1640 = vpop.f32.mrf.mxu0
        %v1641 = vadd.f32 %v1552, %v1640
        %v1642 = vpop.f32.mrf.mxu0
        %v1643 = vadd.f32 %v1554, %v1642
        %1644 = vmatmul.bf16.gmra.mxu0 %v651
        %v1645 = vpop.f32.mrf.mxu0
        %v1646 = vadd.f32 %v1557, %v1645
        %v1647 = vpop.f32.mrf.mxu0
        %v1648 = vadd.f32 %v1559, %v1647
        %1649 = vmatmul.bf16.gmra.mxu0 %v653
        %v1650 = vpop.f32.mrf.mxu0
        %v1651 = vadd.f32 %v1562, %v1650
        %v1652 = vpop.f32.mrf.mxu0
        %v1653 = vadd.f32 %v1564, %v1652
        %1654 = vmatmul.bf16.gmra.mxu0 %v655
        %v1655 = vpop.f32.mrf.mxu0
        %v1656 = vadd.f32 %v1567, %v1655
        %v1657 = vpop.f32.mrf.mxu0
        %v1658 = vadd.f32 %v1569, %v1657
        %1659 = vmatmul.bf16.gmra.mxu0 %v657
        %v1660 = vpop.f32.mrf.mxu0
        %v1661 = vadd.f32 %v1572, %v1660
        %v1662 = vpop.f32.mrf.mxu0
        %v1663 = vadd.f32 %v1574, %v1662
        %1664 = vmatmul.bf16.gmra.mxu0 %v659
        %v1665 = vpop.f32.mrf.mxu0
        %v1666 = vadd.f32 %v1577, %v1665
        %v1667 = vpop.f32.mrf.mxu0
        %v1668 = vadd.f32 %v1579, %v1667
        %1669 = vmatmul.bf16.gmra.mxu0 %v661
        %v1670 = vpop.f32.mrf.mxu0
        %v1671 = vadd.f32 %v1582, %v1670
        %v1672 = vpop.f32.mrf.mxu0
        %v1673 = vadd.f32 %v1584, %v1672
        %1674 = vmatmul.bf16.gmra.mxu0 %v663
        %v1675 = vpop.f32.mrf.mxu0
        %v1676 = vadd.f32 %v1587, %v1675
        %v1677 = vpop.f32.mrf.mxu0
        %v1678 = vadd.f32 %v1589, %v1677
        %1679 = vmatmul.bf16.gmra.mxu0 %v665
        %v1680 = vpop.f32.mrf.mxu0
        %v1681 = vadd.f32 %v1592, %v1680
        %v1682 = vpop.f32.mrf.mxu0
        %v1683 = vadd.f32 %v1594, %v1682
        %1684 = vmatmul.bf16.gmra.mxu0 %v667
        %v1685 = vpop.f32.mrf.mxu0
        %v1686 = vadd.f32 %v1597, %v1685
        %v1687 = vpop.f32.mrf.mxu0
        %v1688 = vadd.f32 %v1599, %v1687
        %1689 = vmatmul.bf16.gmra.mxu0 %v669
        %v1690 = vpop.f32.mrf.mxu0
        %v1691 = vadd.f32 %v1602, %v1690
        %v1692 = vpop.f32.mrf.mxu0
        %v1693 = vadd.f32 %v1604, %v1692
        %1694 = vmatmul.bf16.gmra.mxu0 %v671
        %v1695 = vpop.f32.mrf.mxu0
        %v1696 = vadd.f32 %v1607, %v1695
        %v1697 = vpop.f32.mrf.mxu0
        %v1698 = vadd.f32 %v1609, %v1697
        %1699 = vdwg.mxu0
        %1700 = vmatpush.bf16.msra.mxu0 %v1146
        %1701 = vmatpush.bf16.msra.mxu0 %v1138
        %1702 = vmatpush.bf16.msra.mxu0 %v1130
        %1703 = vmatpush.bf16.msra.mxu0 %v1122
        %1704 = vmatpush.bf16.msra.mxu0 %v1114
        %1705 = vmatpush.bf16.msra.mxu0 %v1106
        %1706 = vmatpush.bf16.msra.mxu0 %v1098
        %1707 = vmatpush.bf16.msra.mxu0 %v1090
        %1708 = vmatmul.bf16.gmra.mxu0 %v640
        %v1709 = vpop.f32.mrf.mxu0
        %v1710 = vadd.f32 %v530, %v1709
        %v1711 = vpop.f32.mrf.mxu0
        %v1712 = vadd.f32 %v530, %v1711
        %1713 = vmatmul.bf16.gmra.mxu0 %v642
        %v1714 = vpop.f32.mrf.mxu0
        %v1715 = vadd.f32 %v530, %v1714
        %v1716 = vpop.f32.mrf.mxu0
        %v1717 = vadd.f32 %v530, %v1716
        %1718 = vmatmul.bf16.gmra.mxu0 %v644
        %v1719 = vpop.f32.mrf.mxu0
        %v1720 = vadd.f32 %v530, %v1719
        %v1721 = vpop.f32.mrf.mxu0
        %v1722 = vadd.f32 %v530, %v1721
        %1723 = vmatmul.bf16.gmra.mxu0 %v646
        %v1724 = vpop.f32.mrf.mxu0
        %v1725 = vadd.f32 %v530, %v1724
        %v1726 = vpop.f32.mrf.mxu0
        %v1727 = vadd.f32 %v530, %v1726
        %1728 = vmatmul.bf16.gmra.mxu0 %v648
        %v1729 = vpop.f32.mrf.mxu0
        %v1730 = vadd.f32 %v530, %v1729
        %v1731 = vpop.f32.mrf.mxu0
        %v1732 = vadd.f32 %v530, %v1731
        %1733 = vmatmul.bf16.gmra.mxu0 %v650
        %v1734 = vpop.f32.mrf.mxu0
        %v1735 = vadd.f32 %v530, %v1734
        %v1736 = vpop.f32.mrf.mxu0
        %v1737 = vadd.f32 %v530, %v1736
        %1738 = vmatmul.bf16.gmra.mxu0 %v652
        %v1739 = vpop.f32.mrf.mxu0
        %v1740 = vadd.f32 %v530, %v1739
        %v1741 = vpop.f32.mrf.mxu0
        %v1742 = vadd.f32 %v530, %v1741
        %1743 = vmatmul.bf16.gmra.mxu0 %v654
        %v1744 = vpop.f32.mrf.mxu0
        %v1745 = vadd.f32 %v530, %v1744
        %v1746 = vpop.f32.mrf.mxu0
        %v1747 = vadd.f32 %v530, %v1746
        %1748 = vmatmul.bf16.gmra.mxu0 %v656
        %v1749 = vpop.f32.mrf.mxu0
        %v1750 = vadd.f32 %v530, %v1749
        %v1751 = vpop.f32.mrf.mxu0
        %v1752 = vadd.f32 %v530, %v1751
        %1753 = vmatmul.bf16.gmra.mxu0 %v658
        %v1754 = vpop.f32.mrf.mxu0
        %v1755 = vadd.f32 %v530, %v1754
        %v1756 = vpop.f32.mrf.mxu0
        %v1757 = vadd.f32 %v530, %v1756
        %1758 = vmatmul.bf16.gmra.mxu0 %v660
        %v1759 = vpop.f32.mrf.mxu0
        %v1760 = vadd.f32 %v530, %v1759
        %v1761 = vpop.f32.mrf.mxu0
        %v1762 = vadd.f32 %v530, %v1761
        %1763 = vmatmul.bf16.gmra.mxu0 %v662
        %v1764 = vpop.f32.mrf.mxu0
        %v1765 = vadd.f32 %v530, %v1764
        %v1766 = vpop.f32.mrf.mxu0
        %v1767 = vadd.f32 %v530, %v1766
        %1768 = vmatmul.bf16.gmra.mxu0 %v664
        %v1769 = vpop.f32.mrf.mxu0
        %v1770 = vadd.f32 %v530, %v1769
        %v1771 = vpop.f32.mrf.mxu0
        %v1772 = vadd.f32 %v530, %v1771
        %1773 = vmatmul.bf16.gmra.mxu0 %v666
        %v1774 = vpop.f32.mrf.mxu0
        %v1775 = vadd.f32 %v530, %v1774
        %v1776 = vpop.f32.mrf.mxu0
        %v1777 = vadd.f32 %v530, %v1776
        %1778 = vmatmul.bf16.gmra.mxu0 %v668
        %v1779 = vpop.f32.mrf.mxu0
        %v1780 = vadd.f32 %v530, %v1779
        %v1781 = vpop.f32.mrf.mxu0
        %v1782 = vadd.f32 %v530, %v1781
        %1783 = vmatmul.bf16.gmra.mxu0 %v670
        %v1784 = vpop.f32.mrf.mxu0
        %v1785 = vadd.f32 %v530, %v1784
        %v1786 = vpop.f32.mrf.mxu0
        %v1787 = vadd.f32 %v530, %v1786
        %1788 = vdwg.mxu0
        %1789 = vmatpush.bf16.msra.mxu0 %v1210
        %1790 = vmatpush.bf16.msra.mxu0 %v1202
        %1791 = vmatpush.bf16.msra.mxu0 %v1194
        %1792 = vmatpush.bf16.msra.mxu0 %v1186
        %1793 = vmatpush.bf16.msra.mxu0 %v1178
        %1794 = vmatpush.bf16.msra.mxu0 %v1170
        %1795 = vmatpush.bf16.msra.mxu0 %v1162
        %1796 = vmatpush.bf16.msra.mxu0 %v1154
        %1797 = vmatmul.bf16.gmra.mxu0 %v641
        %v1798 = vpop.f32.mrf.mxu0
        %v1799 = vadd.f32 %v1710, %v1798
        %v1800 = vpop.f32.mrf.mxu0
        %v1801 = vadd.f32 %v1712, %v1800
        %1802 = vmatmul.bf16.gmra.mxu0 %v643
        %v1803 = vpop.f32.mrf.mxu0
        %v1804 = vadd.f32 %v1715, %v1803
        %v1805 = vpop.f32.mrf.mxu0
        %v1806 = vadd.f32 %v1717, %v1805
        %1807 = vmatmul.bf16.gmra.mxu0 %v645
        %v1808 = vpop.f32.mrf.mxu0
        %v1809 = vadd.f32 %v1720, %v1808
        %v1810 = vpop.f32.mrf.mxu0
        %v1811 = vadd.f32 %v1722, %v1810
        %1812 = vmatmul.bf16.gmra.mxu0 %v647
        %v1813 = vpop.f32.mrf.mxu0
        %v1814 = vadd.f32 %v1725, %v1813
        %v1815 = vpop.f32.mrf.mxu0
        %v1816 = vadd.f32 %v1727, %v1815
        %1817 = vmatmul.bf16.gmra.mxu0 %v649
        %v1818 = vpop.f32.mrf.mxu0
        %v1819 = vadd.f32 %v1730, %v1818
        %v1820 = vpop.f32.mrf.mxu0
        %v1821 = vadd.f32 %v1732, %v1820
        %1822 = vmatmul.bf16.gmra.mxu0 %v651
        %v1823 = vpop.f32.mrf.mxu0
        %v1824 = vadd.f32 %v1735, %v1823
        %v1825 = vpop.f32.mrf.mxu0
        %v1826 = vadd.f32 %v1737, %v1825
        %1827 = vmatmul.bf16.gmra.mxu0 %v653
        %v1828 = vpop.f32.mrf.mxu0
        %v1829 = vadd.f32 %v1740, %v1828
        %v1830 = vpop.f32.mrf.mxu0
        %v1831 = vadd.f32 %v1742, %v1830
        %1832 = vmatmul.bf16.gmra.mxu0 %v655
        %v1833 = vpop.f32.mrf.mxu0
        %v1834 = vadd.f32 %v1745, %v1833
        %v1835 = vpop.f32.mrf.mxu0
        %v1836 = vadd.f32 %v1747, %v1835
        %1837 = vmatmul.bf16.gmra.mxu0 %v657
        %v1838 = vpop.f32.mrf.mxu0
        %v1839 = vadd.f32 %v1750, %v1838
        %v1840 = vpop.f32.mrf.mxu0
        %v1841 = vadd.f32 %v1752, %v1840
        %1842 = vmatmul.bf16.gmra.mxu0 %v659
        %v1843 = vpop.f32.mrf.mxu0
        %v1844 = vadd.f32 %v1755, %v1843
        %v1845 = vpop.f32.mrf.mxu0
        %v1846 = vadd.f32 %v1757, %v1845
        %1847 = vmatmul.bf16.gmra.mxu0 %v661
        %v1848 = vpop.f32.mrf.mxu0
        %v1849 = vadd.f32 %v1760, %v1848
        %v1850 = vpop.f32.mrf.mxu0
        %v1851 = vadd.f32 %v1762, %v1850
        %1852 = vmatmul.bf16.gmra.mxu0 %v663
        %v1853 = vpop.f32.mrf.mxu0
        %v1854 = vadd.f32 %v1765, %v1853
        %v1855 = vpop.f32.mrf.mxu0
        %v1856 = vadd.f32 %v1767, %v1855
        %1857 = vmatmul.bf16.gmra.mxu0 %v665
        %v1858 = vpop.f32.mrf.mxu0
        %v1859 = vadd.f32 %v1770, %v1858
        %v1860 = vpop.f32.mrf.mxu0
        %v1861 = vadd.f32 %v1772, %v1860
        %1862 = vmatmul.bf16.gmra.mxu0 %v667
        %v1863 = vpop.f32.mrf.mxu0
        %v1864 = vadd.f32 %v1775, %v1863
        %v1865 = vpop.f32.mrf.mxu0
        %v1866 = vadd.f32 %v1777, %v1865
        %1867 = vmatmul.bf16.gmra.mxu0 %v669
        %v1868 = vpop.f32.mrf.mxu0
        %v1869 = vadd.f32 %v1780, %v1868
        %v1870 = vpop.f32.mrf.mxu0
        %v1871 = vadd.f32 %v1782, %v1870
        %1872 = vmatmul.bf16.gmra.mxu0 %v671
        %v1873 = vpop.f32.mrf.mxu0
        %v1874 = vadd.f32 %v1785, %v1873
        %v1875 = vpop.f32.mrf.mxu0
        %v1876 = vadd.f32 %v1787, %v1875
        %1877 = vdwg.mxu0
        %1878 = vmatpush.bf16.msra.mxu0 %v1147
        %1879 = vmatpush.bf16.msra.mxu0 %v1139
        %1880 = vmatpush.bf16.msra.mxu0 %v1131
        %1881 = vmatpush.bf16.msra.mxu0 %v1123
        %1882 = vmatpush.bf16.msra.mxu0 %v1115
        %1883 = vmatpush.bf16.msra.mxu0 %v1107
        %1884 = vmatpush.bf16.msra.mxu0 %v1099
        %1885 = vmatpush.bf16.msra.mxu0 %v1091
        %1886 = vmatmul.bf16.gmra.mxu0 %v640
        %v1887 = vpop.f32.mrf.mxu0
        %v1888 = vadd.f32 %v531, %v1887
        %v1889 = vpop.f32.mrf.mxu0
        %v1890 = vadd.f32 %v531, %v1889
        %1891 = vmatmul.bf16.gmra.mxu0 %v642
        %v1892 = vpop.f32.mrf.mxu0
        %v1893 = vadd.f32 %v531, %v1892
        %v1894 = vpop.f32.mrf.mxu0
        %v1895 = vadd.f32 %v531, %v1894
        %1896 = vmatmul.bf16.gmra.mxu0 %v644
        %v1897 = vpop.f32.mrf.mxu0
        %v1898 = vadd.f32 %v531, %v1897
        %v1899 = vpop.f32.mrf.mxu0
        %v1900 = vadd.f32 %v531, %v1899
        %1901 = vmatmul.bf16.gmra.mxu0 %v646
        %v1902 = vpop.f32.mrf.mxu0
        %v1903 = vadd.f32 %v531, %v1902
        %v1904 = vpop.f32.mrf.mxu0
        %v1905 = vadd.f32 %v531, %v1904
        %1906 = vmatmul.bf16.gmra.mxu0 %v648
        %v1907 = vpop.f32.mrf.mxu0
        %v1908 = vadd.f32 %v531, %v1907
        %v1909 = vpop.f32.mrf.mxu0
        %v1910 = vadd.f32 %v531, %v1909
        %1911 = vmatmul.bf16.gmra.mxu0 %v650
        %v1912 = vpop.f32.mrf.mxu0
        %v1913 = vadd.f32 %v531, %v1912
        %v1914 = vpop.f32.mrf.mxu0
        %v1915 = vadd.f32 %v531, %v1914
        %1916 = vmatmul.bf16.gmra.mxu0 %v652
        %v1917 = vpop.f32.mrf.mxu0
        %v1918 = vadd.f32 %v531, %v1917
        %v1919 = vpop.f32.mrf.mxu0
        %v1920 = vadd.f32 %v531, %v1919
        %1921 = vmatmul.bf16.gmra.mxu0 %v654
        %v1922 = vpop.f32.mrf.mxu0
        %v1923 = vadd.f32 %v531, %v1922
        %v1924 = vpop.f32.mrf.mxu0
        %v1925 = vadd.f32 %v531, %v1924
        %1926 = vmatmul.bf16.gmra.mxu0 %v656
        %v1927 = vpop.f32.mrf.mxu0
        %v1928 = vadd.f32 %v531, %v1927
        %v1929 = vpop.f32.mrf.mxu0
        %v1930 = vadd.f32 %v531, %v1929
        %1931 = vmatmul.bf16.gmra.mxu0 %v658
        %v1932 = vpop.f32.mrf.mxu0
        %v1933 = vadd.f32 %v531, %v1932
        %v1934 = vpop.f32.mrf.mxu0
        %v1935 = vadd.f32 %v531, %v1934
        %1936 = vmatmul.bf16.gmra.mxu0 %v660
        %v1937 = vpop.f32.mrf.mxu0
        %v1938 = vadd.f32 %v531, %v1937
        %v1939 = vpop.f32.mrf.mxu0
        %v1940 = vadd.f32 %v531, %v1939
        %1941 = vmatmul.bf16.gmra.mxu0 %v662
        %v1942 = vpop.f32.mrf.mxu0
        %v1943 = vadd.f32 %v531, %v1942
        %v1944 = vpop.f32.mrf.mxu0
        %v1945 = vadd.f32 %v531, %v1944
        %1946 = vmatmul.bf16.gmra.mxu0 %v664
        %v1947 = vpop.f32.mrf.mxu0
        %v1948 = vadd.f32 %v531, %v1947
        %v1949 = vpop.f32.mrf.mxu0
        %v1950 = vadd.f32 %v531, %v1949
        %1951 = vmatmul.bf16.gmra.mxu0 %v666
        %v1952 = vpop.f32.mrf.mxu0
        %v1953 = vadd.f32 %v531, %v1952
        %v1954 = vpop.f32.mrf.mxu0
        %v1955 = vadd.f32 %v531, %v1954
        %1956 = vmatmul.bf16.gmra.mxu0 %v668
        %v1957 = vpop.f32.mrf.mxu0
        %v1958 = vadd.f32 %v531, %v1957
        %v1959 = vpop.f32.mrf.mxu0
        %v1960 = vadd.f32 %v531, %v1959
        %1961 = vmatmul.bf16.gmra.mxu0 %v670
        %v1962 = vpop.f32.mrf.mxu0
        %v1963 = vadd.f32 %v531, %v1962
        %v1964 = vpop.f32.mrf.mxu0
        %v1965 = vadd.f32 %v531, %v1964
        %1966 = vdwg.mxu0
        %1967 = vmatpush.bf16.msra.mxu0 %v1211
        %1968 = vmatpush.bf16.msra.mxu0 %v1203
        %1969 = vmatpush.bf16.msra.mxu0 %v1195
        %1970 = vmatpush.bf16.msra.mxu0 %v1187
        %1971 = vmatpush.bf16.msra.mxu0 %v1179
        %1972 = vmatpush.bf16.msra.mxu0 %v1171
        %1973 = vmatpush.bf16.msra.mxu0 %v1163
        %1974 = vmatpush.bf16.msra.mxu0 %v1155
        %1975 = vmatmul.bf16.gmra.mxu0 %v641
        %v1976 = vpop.f32.mrf.mxu0
        %v1977 = vadd.f32 %v1888, %v1976
        %v1978 = vpop.f32.mrf.mxu0
        %v1979 = vadd.f32 %v1890, %v1978
        %1980 = vmatmul.bf16.gmra.mxu0 %v643
        %v1981 = vpop.f32.mrf.mxu0
        %v1982 = vadd.f32 %v1893, %v1981
        %v1983 = vpop.f32.mrf.mxu0
        %v1984 = vadd.f32 %v1895, %v1983
        %1985 = vmatmul.bf16.gmra.mxu0 %v645
        %v1986 = vpop.f32.mrf.mxu0
        %v1987 = vadd.f32 %v1898, %v1986
        %v1988 = vpop.f32.mrf.mxu0
        %v1989 = vadd.f32 %v1900, %v1988
        %1990 = vmatmul.bf16.gmra.mxu0 %v647
        %v1991 = vpop.f32.mrf.mxu0
        %v1992 = vadd.f32 %v1903, %v1991
        %v1993 = vpop.f32.mrf.mxu0
        %v1994 = vadd.f32 %v1905, %v1993
        %1995 = vmatmul.bf16.gmra.mxu0 %v649
        %v1996 = vpop.f32.mrf.mxu0
        %v1997 = vadd.f32 %v1908, %v1996
        %v1998 = vpop.f32.mrf.mxu0
        %v1999 = vadd.f32 %v1910, %v1998
        %2000 = vmatmul.bf16.gmra.mxu0 %v651
        %v2001 = vpop.f32.mrf.mxu0
        %v2002 = vadd.f32 %v1913, %v2001
        %v2003 = vpop.f32.mrf.mxu0
        %v2004 = vadd.f32 %v1915, %v2003
        %2005 = vmatmul.bf16.gmra.mxu0 %v653
        %v2006 = vpop.f32.mrf.mxu0
        %v2007 = vadd.f32 %v1918, %v2006
        %v2008 = vpop.f32.mrf.mxu0
        %v2009 = vadd.f32 %v1920, %v2008
        %2010 = vmatmul.bf16.gmra.mxu0 %v655
        %v2011 = vpop.f32.mrf.mxu0
        %v2012 = vadd.f32 %v1923, %v2011
        %v2013 = vpop.f32.mrf.mxu0
        %v2014 = vadd.f32 %v1925, %v2013
        %2015 = vmatmul.bf16.gmra.mxu0 %v657
        %v2016 = vpop.f32.mrf.mxu0
        %v2017 = vadd.f32 %v1928, %v2016
        %v2018 = vpop.f32.mrf.mxu0
        %v2019 = vadd.f32 %v1930, %v2018
        %2020 = vmatmul.bf16.gmra.mxu0 %v659
        %v2021 = vpop.f32.mrf.mxu0
        %v2022 = vadd.f32 %v1933, %v2021
        %v2023 = vpop.f32.mrf.mxu0
        %v2024 = vadd.f32 %v1935, %v2023
        %2025 = vmatmul.bf16.gmra.mxu0 %v661
        %v2026 = vpop.f32.mrf.mxu0
        %v2027 = vadd.f32 %v1938, %v2026
        %v2028 = vpop.f32.mrf.mxu0
        %v2029 = vadd.f32 %v1940, %v2028
        %2030 = vmatmul.bf16.gmra.mxu0 %v663
        %v2031 = vpop.f32.mrf.mxu0
        %v2032 = vadd.f32 %v1943, %v2031
        %v2033 = vpop.f32.mrf.mxu0
        %v2034 = vadd.f32 %v1945, %v2033
        %2035 = vmatmul.bf16.gmra.mxu0 %v665
        %v2036 = vpop.f32.mrf.mxu0
        %v2037 = vadd.f32 %v1948, %v2036
        %v2038 = vpop.f32.mrf.mxu0
        %v2039 = vadd.f32 %v1950, %v2038
        %2040 = vmatmul.bf16.gmra.mxu0 %v667
        %v2041 = vpop.f32.mrf.mxu0
        %v2042 = vadd.f32 %v1953, %v2041
        %v2043 = vpop.f32.mrf.mxu0
        %v2044 = vadd.f32 %v1955, %v2043
        %2045 = vmatmul.bf16.gmra.mxu0 %v669
        %v2046 = vpop.f32.mrf.mxu0
        %v2047 = vadd.f32 %v1958, %v2046
        %v2048 = vpop.f32.mrf.mxu0
        %v2049 = vadd.f32 %v1960, %v2048
        %2050 = vmatmul.bf16.gmra.mxu0 %v671
        %v2051 = vpop.f32.mrf.mxu0
        %v2052 = vadd.f32 %v1963, %v2051
        %v2053 = vpop.f32.mrf.mxu0
        %v2054 = vadd.f32 %v1965, %v2053
        %2055 = vdwg.mxu0
        %2056 = vmatpush.bf16.msra.mxu0 %v1148
        %2057 = vmatpush.bf16.msra.mxu0 %v1140
        %2058 = vmatpush.bf16.msra.mxu0 %v1132
        %2059 = vmatpush.bf16.msra.mxu0 %v1124
        %2060 = vmatpush.bf16.msra.mxu0 %v1116
        %2061 = vmatpush.bf16.msra.mxu0 %v1108
        %2062 = vmatpush.bf16.msra.mxu0 %v1100
        %2063 = vmatpush.bf16.msra.mxu0 %v1092
        %2064 = vmatmul.bf16.gmra.mxu0 %v640
        %v2065 = vpop.f32.mrf.mxu0
        %v2066 = vadd.f32 %v532, %v2065
        %v2067 = vpop.f32.mrf.mxu0
        %v2068 = vadd.f32 %v532, %v2067
        %2069 = vmatmul.bf16.gmra.mxu0 %v642
        %v2070 = vpop.f32.mrf.mxu0
        %v2071 = vadd.f32 %v532, %v2070
        %v2072 = vpop.f32.mrf.mxu0
        %v2073 = vadd.f32 %v532, %v2072
        %2074 = vmatmul.bf16.gmra.mxu0 %v644
        %v2075 = vpop.f32.mrf.mxu0
        %v2076 = vadd.f32 %v532, %v2075
        %v2077 = vpop.f32.mrf.mxu0
        %v2078 = vadd.f32 %v532, %v2077
        %2079 = vmatmul.bf16.gmra.mxu0 %v646
        %v2080 = vpop.f32.mrf.mxu0
        %v2081 = vadd.f32 %v532, %v2080
        %v2082 = vpop.f32.mrf.mxu0
        %v2083 = vadd.f32 %v532, %v2082
        %2084 = vmatmul.bf16.gmra.mxu0 %v648
        %v2085 = vpop.f32.mrf.mxu0
        %v2086 = vadd.f32 %v532, %v2085
        %v2087 = vpop.f32.mrf.mxu0
        %v2088 = vadd.f32 %v532, %v2087
        %2089 = vmatmul.bf16.gmra.mxu0 %v650
        %v2090 = vpop.f32.mrf.mxu0
        %v2091 = vadd.f32 %v532, %v2090
        %v2092 = vpop.f32.mrf.mxu0
        %v2093 = vadd.f32 %v532, %v2092
        %2094 = vmatmul.bf16.gmra.mxu0 %v652
        %v2095 = vpop.f32.mrf.mxu0
        %v2096 = vadd.f32 %v532, %v2095
        %v2097 = vpop.f32.mrf.mxu0
        %v2098 = vadd.f32 %v532, %v2097
        %2099 = vmatmul.bf16.gmra.mxu0 %v654
        %v2100 = vpop.f32.mrf.mxu0
        %v2101 = vadd.f32 %v532, %v2100
        %v2102 = vpop.f32.mrf.mxu0
        %v2103 = vadd.f32 %v532, %v2102
        %2104 = vmatmul.bf16.gmra.mxu0 %v656
        %v2105 = vpop.f32.mrf.mxu0
        %v2106 = vadd.f32 %v532, %v2105
        %v2107 = vpop.f32.mrf.mxu0
        %v2108 = vadd.f32 %v532, %v2107
        %2109 = vmatmul.bf16.gmra.mxu0 %v658
        %v2110 = vpop.f32.mrf.mxu0
        %v2111 = vadd.f32 %v532, %v2110
        %v2112 = vpop.f32.mrf.mxu0
        %v2113 = vadd.f32 %v532, %v2112
        %2114 = vmatmul.bf16.gmra.mxu0 %v660
        %v2115 = vpop.f32.mrf.mxu0
        %v2116 = vadd.f32 %v532, %v2115
        %v2117 = vpop.f32.mrf.mxu0
        %v2118 = vadd.f32 %v532, %v2117
        %2119 = vmatmul.bf16.gmra.mxu0 %v662
        %v2120 = vpop.f32.mrf.mxu0
        %v2121 = vadd.f32 %v532, %v2120
        %v2122 = vpop.f32.mrf.mxu0
        %v2123 = vadd.f32 %v532, %v2122
        %2124 = vmatmul.bf16.gmra.mxu0 %v664
        %v2125 = vpop.f32.mrf.mxu0
        %v2126 = vadd.f32 %v532, %v2125
        %v2127 = vpop.f32.mrf.mxu0
        %v2128 = vadd.f32 %v532, %v2127
        %2129 = vmatmul.bf16.gmra.mxu0 %v666
        %v2130 = vpop.f32.mrf.mxu0
        %v2131 = vadd.f32 %v532, %v2130
        %v2132 = vpop.f32.mrf.mxu0
        %v2133 = vadd.f32 %v532, %v2132
        %2134 = vmatmul.bf16.gmra.mxu0 %v668
        %v2135 = vpop.f32.mrf.mxu0
        %v2136 = vadd.f32 %v532, %v2135
        %v2137 = vpop.f32.mrf.mxu0
        %v2138 = vadd.f32 %v532, %v2137
        %2139 = vmatmul.bf16.gmra.mxu0 %v670
        %v2140 = vpop.f32.mrf.mxu0
        %v2141 = vadd.f32 %v532, %v2140
        %v2142 = vpop.f32.mrf.mxu0
        %v2143 = vadd.f32 %v532, %v2142
        %2144 = vdwg.mxu0
        %2145 = vmatpush.bf16.msra.mxu0 %v1212
        %2146 = vmatpush.bf16.msra.mxu0 %v1204
        %2147 = vmatpush.bf16.msra.mxu0 %v1196
        %2148 = vmatpush.bf16.msra.mxu0 %v1188
        %2149 = vmatpush.bf16.msra.mxu0 %v1180
        %2150 = vmatpush.bf16.msra.mxu0 %v1172
        %2151 = vmatpush.bf16.msra.mxu0 %v1164
        %2152 = vmatpush.bf16.msra.mxu0 %v1156
        %2153 = vmatmul.bf16.gmra.mxu0 %v641
        %v2154 = vpop.f32.mrf.mxu0
        %v2155 = vadd.f32 %v2066, %v2154
        %v2156 = vpop.f32.mrf.mxu0
        %v2157 = vadd.f32 %v2068, %v2156
        %2158 = vmatmul.bf16.gmra.mxu0 %v643
        %v2159 = vpop.f32.mrf.mxu0
        %v2160 = vadd.f32 %v2071, %v2159
        %v2161 = vpop.f32.mrf.mxu0
        %v2162 = vadd.f32 %v2073, %v2161
        %2163 = vmatmul.bf16.gmra.mxu0 %v645
        %v2164 = vpop.f32.mrf.mxu0
        %v2165 = vadd.f32 %v2076, %v2164
        %v2166 = vpop.f32.mrf.mxu0
        %v2167 = vadd.f32 %v2078, %v2166
        %2168 = vmatmul.bf16.gmra.mxu0 %v647
        %v2169 = vpop.f32.mrf.mxu0
        %v2170 = vadd.f32 %v2081, %v2169
        %v2171 = vpop.f32.mrf.mxu0
        %v2172 = vadd.f32 %v2083, %v2171
        %2173 = vmatmul.bf16.gmra.mxu0 %v649
        %v2174 = vpop.f32.mrf.mxu0
        %v2175 = vadd.f32 %v2086, %v2174
        %v2176 = vpop.f32.mrf.mxu0
        %v2177 = vadd.f32 %v2088, %v2176
        %2178 = vmatmul.bf16.gmra.mxu0 %v651
        %v2179 = vpop.f32.mrf.mxu0
        %v2180 = vadd.f32 %v2091, %v2179
        %v2181 = vpop.f32.mrf.mxu0
        %v2182 = vadd.f32 %v2093, %v2181
        %2183 = vmatmul.bf16.gmra.mxu0 %v653
        %v2184 = vpop.f32.mrf.mxu0
        %v2185 = vadd.f32 %v2096, %v2184
        %v2186 = vpop.f32.mrf.mxu0
        %v2187 = vadd.f32 %v2098, %v2186
        %2188 = vmatmul.bf16.gmra.mxu0 %v655
        %v2189 = vpop.f32.mrf.mxu0
        %v2190 = vadd.f32 %v2101, %v2189
        %v2191 = vpop.f32.mrf.mxu0
        %v2192 = vadd.f32 %v2103, %v2191
        %2193 = vmatmul.bf16.gmra.mxu0 %v657
        %v2194 = vpop.f32.mrf.mxu0
        %v2195 = vadd.f32 %v2106, %v2194
        %v2196 = vpop.f32.mrf.mxu0
        %v2197 = vadd.f32 %v2108, %v2196
        %2198 = vmatmul.bf16.gmra.mxu0 %v659
        %v2199 = vpop.f32.mrf.mxu0
        %v2200 = vadd.f32 %v2111, %v2199
        %v2201 = vpop.f32.mrf.mxu0
        %v2202 = vadd.f32 %v2113, %v2201
        %2203 = vmatmul.bf16.gmra.mxu0 %v661
        %v2204 = vpop.f32.mrf.mxu0
        %v2205 = vadd.f32 %v2116, %v2204
        %v2206 = vpop.f32.mrf.mxu0
        %v2207 = vadd.f32 %v2118, %v2206
        %2208 = vmatmul.bf16.gmra.mxu0 %v663
        %v2209 = vpop.f32.mrf.mxu0
        %v2210 = vadd.f32 %v2121, %v2209
        %v2211 = vpop.f32.mrf.mxu0
        %v2212 = vadd.f32 %v2123, %v2211
        %2213 = vmatmul.bf16.gmra.mxu0 %v665
        %v2214 = vpop.f32.mrf.mxu0
        %v2215 = vadd.f32 %v2126, %v2214
        %v2216 = vpop.f32.mrf.mxu0
        %v2217 = vadd.f32 %v2128, %v2216
        %2218 = vmatmul.bf16.gmra.mxu0 %v667
        %v2219 = vpop.f32.mrf.mxu0
        %v2220 = vadd.f32 %v2131, %v2219
        %v2221 = vpop.f32.mrf.mxu0
        %v2222 = vadd.f32 %v2133, %v2221
        %2223 = vmatmul.bf16.gmra.mxu0 %v669
        %v2224 = vpop.f32.mrf.mxu0
        %v2225 = vadd.f32 %v2136, %v2224
        %v2226 = vpop.f32.mrf.mxu0
        %v2227 = vadd.f32 %v2138, %v2226
        %2228 = vmatmul.bf16.gmra.mxu0 %v671
        %v2229 = vpop.f32.mrf.mxu0
        %v2230 = vadd.f32 %v2141, %v2229
        %v2231 = vpop.f32.mrf.mxu0
        %v2232 = vadd.f32 %v2143, %v2231
        %2233 = vdwg.mxu0
        %2234 = vmatpush.bf16.msra.mxu0 %v1149
        %2235 = vmatpush.bf16.msra.mxu0 %v1141
        %2236 = vmatpush.bf16.msra.mxu0 %v1133
        %2237 = vmatpush.bf16.msra.mxu0 %v1125
        %2238 = vmatpush.bf16.msra.mxu0 %v1117
        %2239 = vmatpush.bf16.msra.mxu0 %v1109
        %2240 = vmatpush.bf16.msra.mxu0 %v1101
        %2241 = vmatpush.bf16.msra.mxu0 %v1093
        %2242 = vmatmul.bf16.gmra.mxu0 %v640
        %v2243 = vpop.f32.mrf.mxu0
        %v2244 = vadd.f32 %v533, %v2243
        %v2245 = vpop.f32.mrf.mxu0
        %v2246 = vadd.f32 %v533, %v2245
        %2247 = vmatmul.bf16.gmra.mxu0 %v642
        %v2248 = vpop.f32.mrf.mxu0
        %v2249 = vadd.f32 %v533, %v2248
        %v2250 = vpop.f32.mrf.mxu0
        %v2251 = vadd.f32 %v533, %v2250
        %2252 = vmatmul.bf16.gmra.mxu0 %v644
        %v2253 = vpop.f32.mrf.mxu0
        %v2254 = vadd.f32 %v533, %v2253
        %v2255 = vpop.f32.mrf.mxu0
        %v2256 = vadd.f32 %v533, %v2255
        %2257 = vmatmul.bf16.gmra.mxu0 %v646
        %v2258 = vpop.f32.mrf.mxu0
        %v2259 = vadd.f32 %v533, %v2258
        %v2260 = vpop.f32.mrf.mxu0
        %v2261 = vadd.f32 %v533, %v2260
        %2262 = vmatmul.bf16.gmra.mxu0 %v648
        %v2263 = vpop.f32.mrf.mxu0
        %v2264 = vadd.f32 %v533, %v2263
        %v2265 = vpop.f32.mrf.mxu0
        %v2266 = vadd.f32 %v533, %v2265
        %2267 = vmatmul.bf16.gmra.mxu0 %v650
        %v2268 = vpop.f32.mrf.mxu0
        %v2269 = vadd.f32 %v533, %v2268
        %v2270 = vpop.f32.mrf.mxu0
        %v2271 = vadd.f32 %v533, %v2270
        %2272 = vmatmul.bf16.gmra.mxu0 %v652
        %v2273 = vpop.f32.mrf.mxu0
        %v2274 = vadd.f32 %v533, %v2273
        %v2275 = vpop.f32.mrf.mxu0
        %v2276 = vadd.f32 %v533, %v2275
        %2277 = vmatmul.bf16.gmra.mxu0 %v654
        %v2278 = vpop.f32.mrf.mxu0
        %v2279 = vadd.f32 %v533, %v2278
        %v2280 = vpop.f32.mrf.mxu0
        %v2281 = vadd.f32 %v533, %v2280
        %2282 = vmatmul.bf16.gmra.mxu0 %v656
        %v2283 = vpop.f32.mrf.mxu0
        %v2284 = vadd.f32 %v533, %v2283
        %v2285 = vpop.f32.mrf.mxu0
        %v2286 = vadd.f32 %v533, %v2285
        %2287 = vmatmul.bf16.gmra.mxu0 %v658
        %v2288 = vpop.f32.mrf.mxu0
        %v2289 = vadd.f32 %v533, %v2288
        %v2290 = vpop.f32.mrf.mxu0
        %v2291 = vadd.f32 %v533, %v2290
        %2292 = vmatmul.bf16.gmra.mxu0 %v660
        %v2293 = vpop.f32.mrf.mxu0
        %v2294 = vadd.f32 %v533, %v2293
        %v2295 = vpop.f32.mrf.mxu0
        %v2296 = vadd.f32 %v533, %v2295
        %2297 = vmatmul.bf16.gmra.mxu0 %v662
        %v2298 = vpop.f32.mrf.mxu0
        %v2299 = vadd.f32 %v533, %v2298
        %v2300 = vpop.f32.mrf.mxu0
        %v2301 = vadd.f32 %v533, %v2300
        %2302 = vmatmul.bf16.gmra.mxu0 %v664
        %v2303 = vpop.f32.mrf.mxu0
        %v2304 = vadd.f32 %v533, %v2303
        %v2305 = vpop.f32.mrf.mxu0
        %v2306 = vadd.f32 %v533, %v2305
        %2307 = vmatmul.bf16.gmra.mxu0 %v666
        %v2308 = vpop.f32.mrf.mxu0
        %v2309 = vadd.f32 %v533, %v2308
        %v2310 = vpop.f32.mrf.mxu0
        %v2311 = vadd.f32 %v533, %v2310
        %2312 = vmatmul.bf16.gmra.mxu0 %v668
        %v2313 = vpop.f32.mrf.mxu0
        %v2314 = vadd.f32 %v533, %v2313
        %v2315 = vpop.f32.mrf.mxu0
        %v2316 = vadd.f32 %v533, %v2315
        %2317 = vmatmul.bf16.gmra.mxu0 %v670
        %v2318 = vpop.f32.mrf.mxu0
        %v2319 = vadd.f32 %v533, %v2318
        %v2320 = vpop.f32.mrf.mxu0
        %v2321 = vadd.f32 %v533, %v2320
        %2322 = vdwg.mxu0
        %2323 = vmatpush.bf16.msra.mxu0 %v1213
        %2324 = vmatpush.bf16.msra.mxu0 %v1205
        %2325 = vmatpush.bf16.msra.mxu0 %v1197
        %2326 = vmatpush.bf16.msra.mxu0 %v1189
        %2327 = vmatpush.bf16.msra.mxu0 %v1181
        %2328 = vmatpush.bf16.msra.mxu0 %v1173
        %2329 = vmatpush.bf16.msra.mxu0 %v1165
        %2330 = vmatpush.bf16.msra.mxu0 %v1157
        %2331 = vmatmul.bf16.gmra.mxu0 %v641
        %v2332 = vpop.f32.mrf.mxu0
        %v2333 = vadd.f32 %v2244, %v2332
        %v2334 = vpop.f32.mrf.mxu0
        %v2335 = vadd.f32 %v2246, %v2334
        %2336 = vmatmul.bf16.gmra.mxu0 %v643
        %v2337 = vpop.f32.mrf.mxu0
        %v2338 = vadd.f32 %v2249, %v2337
        %v2339 = vpop.f32.mrf.mxu0
        %v2340 = vadd.f32 %v2251, %v2339
        %2341 = vmatmul.bf16.gmra.mxu0 %v645
        %v2342 = vpop.f32.mrf.mxu0
        %v2343 = vadd.f32 %v2254, %v2342
        %v2344 = vpop.f32.mrf.mxu0
        %v2345 = vadd.f32 %v2256, %v2344
        %2346 = vmatmul.bf16.gmra.mxu0 %v647
        %v2347 = vpop.f32.mrf.mxu0
        %v2348 = vadd.f32 %v2259, %v2347
        %v2349 = vpop.f32.mrf.mxu0
        %v2350 = vadd.f32 %v2261, %v2349
        %2351 = vmatmul.bf16.gmra.mxu0 %v649
        %v2352 = vpop.f32.mrf.mxu0
        %v2353 = vadd.f32 %v2264, %v2352
        %v2354 = vpop.f32.mrf.mxu0
        %v2355 = vadd.f32 %v2266, %v2354
        %2356 = vmatmul.bf16.gmra.mxu0 %v651
        %v2357 = vpop.f32.mrf.mxu0
        %v2358 = vadd.f32 %v2269, %v2357
        %v2359 = vpop.f32.mrf.mxu0
        %v2360 = vadd.f32 %v2271, %v2359
        %2361 = vmatmul.bf16.gmra.mxu0 %v653
        %v2362 = vpop.f32.mrf.mxu0
        %v2363 = vadd.f32 %v2274, %v2362
        %v2364 = vpop.f32.mrf.mxu0
        %v2365 = vadd.f32 %v2276, %v2364
        %2366 = vmatmul.bf16.gmra.mxu0 %v655
        %v2367 = vpop.f32.mrf.mxu0
        %v2368 = vadd.f32 %v2279, %v2367
        %v2369 = vpop.f32.mrf.mxu0
        %v2370 = vadd.f32 %v2281, %v2369
        %2371 = vmatmul.bf16.gmra.mxu0 %v657
        %v2372 = vpop.f32.mrf.mxu0
        %v2373 = vadd.f32 %v2284, %v2372
        %v2374 = vpop.f32.mrf.mxu0
        %v2375 = vadd.f32 %v2286, %v2374
        %2376 = vmatmul.bf16.gmra.mxu0 %v659
        %v2377 = vpop.f32.mrf.mxu0
        %v2378 = vadd.f32 %v2289, %v2377
        %v2379 = vpop.f32.mrf.mxu0
        %v2380 = vadd.f32 %v2291, %v2379
        %2381 = vmatmul.bf16.gmra.mxu0 %v661
        %v2382 = vpop.f32.mrf.mxu0
        %v2383 = vadd.f32 %v2294, %v2382
        %v2384 = vpop.f32.mrf.mxu0
        %v2385 = vadd.f32 %v2296, %v2384
        %2386 = vmatmul.bf16.gmra.mxu0 %v663
        %v2387 = vpop.f32.mrf.mxu0
        %v2388 = vadd.f32 %v2299, %v2387
        %v2389 = vpop.f32.mrf.mxu0
        %v2390 = vadd.f32 %v2301, %v2389
        %2391 = vmatmul.bf16.gmra.mxu0 %v665
        %v2392 = vpop.f32.mrf.mxu0
        %v2393 = vadd.f32 %v2304, %v2392
        %v2394 = vpop.f32.mrf.mxu0
        %v2395 = vadd.f32 %v2306, %v2394
        %2396 = vmatmul.bf16.gmra.mxu0 %v667
        %v2397 = vpop.f32.mrf.mxu0
        %v2398 = vadd.f32 %v2309, %v2397
        %v2399 = vpop.f32.mrf.mxu0
        %v2400 = vadd.f32 %v2311, %v2399
        %2401 = vmatmul.bf16.gmra.mxu0 %v669
        %v2402 = vpop.f32.mrf.mxu0
        %v2403 = vadd.f32 %v2314, %v2402
        %v2404 = vpop.f32.mrf.mxu0
        %v2405 = vadd.f32 %v2316, %v2404
        %2406 = vmatmul.bf16.gmra.mxu0 %v671
        %v2407 = vpop.f32.mrf.mxu0
        %v2408 = vadd.f32 %v2319, %v2407
        %v2409 = vpop.f32.mrf.mxu0
        %v2410 = vadd.f32 %v2321, %v2409
        %2411 = vdwg.mxu0
        %2412 = vmatpush.bf16.msra.mxu0 %v1150
        %2413 = vmatpush.bf16.msra.mxu0 %v1142
        %2414 = vmatpush.bf16.msra.mxu0 %v1134
        %2415 = vmatpush.bf16.msra.mxu0 %v1126
        %2416 = vmatpush.bf16.msra.mxu0 %v1118
        %2417 = vmatpush.bf16.msra.mxu0 %v1110
        %2418 = vmatpush.bf16.msra.mxu0 %v1102
        %2419 = vmatpush.bf16.msra.mxu0 %v1094
        %2420 = vmatmul.bf16.gmra.mxu0 %v640
        %v2421 = vpop.f32.mrf.mxu0
        %v2422 = vadd.f32 %v534, %v2421
        %v2423 = vpop.f32.mrf.mxu0
        %v2424 = vadd.f32 %v534, %v2423
        %2425 = vmatmul.bf16.gmra.mxu0 %v642
        %v2426 = vpop.f32.mrf.mxu0
        %v2427 = vadd.f32 %v534, %v2426
        %v2428 = vpop.f32.mrf.mxu0
        %v2429 = vadd.f32 %v534, %v2428
        %2430 = vmatmul.bf16.gmra.mxu0 %v644
        %v2431 = vpop.f32.mrf.mxu0
        %v2432 = vadd.f32 %v534, %v2431
        %v2433 = vpop.f32.mrf.mxu0
        %v2434 = vadd.f32 %v534, %v2433
        %2435 = vmatmul.bf16.gmra.mxu0 %v646
        %v2436 = vpop.f32.mrf.mxu0
        %v2437 = vadd.f32 %v534, %v2436
        %v2438 = vpop.f32.mrf.mxu0
        %v2439 = vadd.f32 %v534, %v2438
        %2440 = vmatmul.bf16.gmra.mxu0 %v648
        %v2441 = vpop.f32.mrf.mxu0
        %v2442 = vadd.f32 %v534, %v2441
        %v2443 = vpop.f32.mrf.mxu0
        %v2444 = vadd.f32 %v534, %v2443
        %2445 = vmatmul.bf16.gmra.mxu0 %v650
        %v2446 = vpop.f32.mrf.mxu0
        %v2447 = vadd.f32 %v534, %v2446
        %v2448 = vpop.f32.mrf.mxu0
        %v2449 = vadd.f32 %v534, %v2448
        %2450 = vmatmul.bf16.gmra.mxu0 %v652
        %v2451 = vpop.f32.mrf.mxu0
        %v2452 = vadd.f32 %v534, %v2451
        %v2453 = vpop.f32.mrf.mxu0
        %v2454 = vadd.f32 %v534, %v2453
        %2455 = vmatmul.bf16.gmra.mxu0 %v654
        %v2456 = vpop.f32.mrf.mxu0
        %v2457 = vadd.f32 %v534, %v2456
        %v2458 = vpop.f32.mrf.mxu0
        %v2459 = vadd.f32 %v534, %v2458
        %2460 = vmatmul.bf16.gmra.mxu0 %v656
        %v2461 = vpop.f32.mrf.mxu0
        %v2462 = vadd.f32 %v534, %v2461
        %v2463 = vpop.f32.mrf.mxu0
        %v2464 = vadd.f32 %v534, %v2463
        %2465 = vmatmul.bf16.gmra.mxu0 %v658
        %v2466 = vpop.f32.mrf.mxu0
        %v2467 = vadd.f32 %v534, %v2466
        %v2468 = vpop.f32.mrf.mxu0
        %v2469 = vadd.f32 %v534, %v2468
        %2470 = vmatmul.bf16.gmra.mxu0 %v660
        %v2471 = vpop.f32.mrf.mxu0
        %v2472 = vadd.f32 %v534, %v2471
        %v2473 = vpop.f32.mrf.mxu0
        %v2474 = vadd.f32 %v534, %v2473
        %2475 = vmatmul.bf16.gmra.mxu0 %v662
        %v2476 = vpop.f32.mrf.mxu0
        %v2477 = vadd.f32 %v534, %v2476
        %v2478 = vpop.f32.mrf.mxu0
        %v2479 = vadd.f32 %v534, %v2478
        %2480 = vmatmul.bf16.gmra.mxu0 %v664
        %v2481 = vpop.f32.mrf.mxu0
        %v2482 = vadd.f32 %v534, %v2481
        %v2483 = vpop.f32.mrf.mxu0
        %v2484 = vadd.f32 %v534, %v2483
        %2485 = vmatmul.bf16.gmra.mxu0 %v666
        %v2486 = vpop.f32.mrf.mxu0
        %v2487 = vadd.f32 %v534, %v2486
        %v2488 = vpop.f32.mrf.mxu0
        %v2489 = vadd.f32 %v534, %v2488
        %2490 = vmatmul.bf16.gmra.mxu0 %v668
        %v2491 = vpop.f32.mrf.mxu0
        %v2492 = vadd.f32 %v534, %v2491
        %v2493 = vpop.f32.mrf.mxu0
        %v2494 = vadd.f32 %v534, %v2493
        %2495 = vmatmul.bf16.gmra.mxu0 %v670
        %v2496 = vpop.f32.mrf.mxu0
        %v2497 = vadd.f32 %v534, %v2496
        %v2498 = vpop.f32.mrf.mxu0
        %v2499 = vadd.f32 %v534, %v2498
        %2500 = vdwg.mxu0
        %2501 = vmatpush.bf16.msra.mxu0 %v1214
        %2502 = vmatpush.bf16.msra.mxu0 %v1206
        %2503 = vmatpush.bf16.msra.mxu0 %v1198
        %2504 = vmatpush.bf16.msra.mxu0 %v1190
        %2505 = vmatpush.bf16.msra.mxu0 %v1182
        %2506 = vmatpush.bf16.msra.mxu0 %v1174
        %2507 = vmatpush.bf16.msra.mxu0 %v1166
        %2508 = vmatpush.bf16.msra.mxu0 %v1158
        %2509 = vmatmul.bf16.gmra.mxu0 %v641
        %v2510 = vpop.f32.mrf.mxu0
        %v2511 = vadd.f32 %v2422, %v2510
        %v2512 = vpop.f32.mrf.mxu0
        %v2513 = vadd.f32 %v2424, %v2512
        %2514 = vmatmul.bf16.gmra.mxu0 %v643
        %v2515 = vpop.f32.mrf.mxu0
        %v2516 = vadd.f32 %v2427, %v2515
        %v2517 = vpop.f32.mrf.mxu0
        %v2518 = vadd.f32 %v2429, %v2517
        %2519 = vmatmul.bf16.gmra.mxu0 %v645
        %v2520 = vpop.f32.mrf.mxu0
        %v2521 = vadd.f32 %v2432, %v2520
        %v2522 = vpop.f32.mrf.mxu0
        %v2523 = vadd.f32 %v2434, %v2522
        %2524 = vmatmul.bf16.gmra.mxu0 %v647
        %v2525 = vpop.f32.mrf.mxu0
        %v2526 = vadd.f32 %v2437, %v2525
        %v2527 = vpop.f32.mrf.mxu0
        %v2528 = vadd.f32 %v2439, %v2527
        %2529 = vmatmul.bf16.gmra.mxu0 %v649
        %v2530 = vpop.f32.mrf.mxu0
        %v2531 = vadd.f32 %v2442, %v2530
        %v2532 = vpop.f32.mrf.mxu0
        %v2533 = vadd.f32 %v2444, %v2532
        %2534 = vmatmul.bf16.gmra.mxu0 %v651
        %v2535 = vpop.f32.mrf.mxu0
        %v2536 = vadd.f32 %v2447, %v2535
        %v2537 = vpop.f32.mrf.mxu0
        %v2538 = vadd.f32 %v2449, %v2537
        %2539 = vmatmul.bf16.gmra.mxu0 %v653
        %v2540 = vpop.f32.mrf.mxu0
        %v2541 = vadd.f32 %v2452, %v2540
        %v2542 = vpop.f32.mrf.mxu0
        %v2543 = vadd.f32 %v2454, %v2542
        %2544 = vmatmul.bf16.gmra.mxu0 %v655
        %v2545 = vpop.f32.mrf.mxu0
        %v2546 = vadd.f32 %v2457, %v2545
        %v2547 = vpop.f32.mrf.mxu0
        %v2548 = vadd.f32 %v2459, %v2547
        %2549 = vmatmul.bf16.gmra.mxu0 %v657
        %v2550 = vpop.f32.mrf.mxu0
        %v2551 = vadd.f32 %v2462, %v2550
        %v2552 = vpop.f32.mrf.mxu0
        %v2553 = vadd.f32 %v2464, %v2552
        %2554 = vmatmul.bf16.gmra.mxu0 %v659
        %v2555 = vpop.f32.mrf.mxu0
        %v2556 = vadd.f32 %v2467, %v2555
        %v2557 = vpop.f32.mrf.mxu0
        %v2558 = vadd.f32 %v2469, %v2557
        %2559 = vmatmul.bf16.gmra.mxu0 %v661
        %v2560 = vpop.f32.mrf.mxu0
        %v2561 = vadd.f32 %v2472, %v2560
        %v2562 = vpop.f32.mrf.mxu0
        %v2563 = vadd.f32 %v2474, %v2562
        %2564 = vmatmul.bf16.gmra.mxu0 %v663
        %v2565 = vpop.f32.mrf.mxu0
        %v2566 = vadd.f32 %v2477, %v2565
        %v2567 = vpop.f32.mrf.mxu0
        %v2568 = vadd.f32 %v2479, %v2567
        %2569 = vmatmul.bf16.gmra.mxu0 %v665
        %v2570 = vpop.f32.mrf.mxu0
        %v2571 = vadd.f32 %v2482, %v2570
        %v2572 = vpop.f32.mrf.mxu0
        %v2573 = vadd.f32 %v2484, %v2572
        %2574 = vmatmul.bf16.gmra.mxu0 %v667
        %v2575 = vpop.f32.mrf.mxu0
        %v2576 = vadd.f32 %v2487, %v2575
        %v2577 = vpop.f32.mrf.mxu0
        %v2578 = vadd.f32 %v2489, %v2577
        %2579 = vmatmul.bf16.gmra.mxu0 %v669
        %v2580 = vpop.f32.mrf.mxu0
        %v2581 = vadd.f32 %v2492, %v2580
        %v2582 = vpop.f32.mrf.mxu0
        %v2583 = vadd.f32 %v2494, %v2582
        %2584 = vmatmul.bf16.gmra.mxu0 %v671
        %v2585 = vpop.f32.mrf.mxu0
        %v2586 = vadd.f32 %v2497, %v2585
        %v2587 = vpop.f32.mrf.mxu0
        %v2588 = vadd.f32 %v2499, %v2587
        %2589 = vdwg.mxu0
        %2590 = vmatpush.bf16.msra.mxu0 %v1151
        %2591 = vmatpush.bf16.msra.mxu0 %v1143
        %2592 = vmatpush.bf16.msra.mxu0 %v1135
        %2593 = vmatpush.bf16.msra.mxu0 %v1127
        %2594 = vmatpush.bf16.msra.mxu0 %v1119
        %2595 = vmatpush.bf16.msra.mxu0 %v1111
        %2596 = vmatpush.bf16.msra.mxu0 %v1103
        %2597 = vmatpush.bf16.msra.mxu0 %v1095
        %2598 = vmatmul.bf16.gmra.mxu0 %v640
        %v2599 = vpop.f32.mrf.mxu0
        %v2600 = vadd.f32 %v535, %v2599
        %v2601 = vpop.f32.mrf.mxu0
        %v2602 = vadd.f32 %v535, %v2601
        %2603 = vmatmul.bf16.gmra.mxu0 %v642
        %v2604 = vpop.f32.mrf.mxu0
        %v2605 = vadd.f32 %v535, %v2604
        %v2606 = vpop.f32.mrf.mxu0
        %v2607 = vadd.f32 %v535, %v2606
        %2608 = vmatmul.bf16.gmra.mxu0 %v644
        %v2609 = vpop.f32.mrf.mxu0
        %v2610 = vadd.f32 %v535, %v2609
        %v2611 = vpop.f32.mrf.mxu0
        %v2612 = vadd.f32 %v535, %v2611
        %2613 = vmatmul.bf16.gmra.mxu0 %v646
        %v2614 = vpop.f32.mrf.mxu0
        %v2615 = vadd.f32 %v535, %v2614
        %v2616 = vpop.f32.mrf.mxu0
        %v2617 = vadd.f32 %v535, %v2616
        %2618 = vmatmul.bf16.gmra.mxu0 %v648
        %v2619 = vpop.f32.mrf.mxu0
        %v2620 = vadd.f32 %v535, %v2619
        %v2621 = vpop.f32.mrf.mxu0
        %v2622 = vadd.f32 %v535, %v2621
        %2623 = vmatmul.bf16.gmra.mxu0 %v650
        %v2624 = vpop.f32.mrf.mxu0
        %v2625 = vadd.f32 %v535, %v2624
        %v2626 = vpop.f32.mrf.mxu0
        %v2627 = vadd.f32 %v535, %v2626
        %2628 = vmatmul.bf16.gmra.mxu0 %v652
        %v2629 = vpop.f32.mrf.mxu0
        %v2630 = vadd.f32 %v535, %v2629
        %v2631 = vpop.f32.mrf.mxu0
        %v2632 = vadd.f32 %v535, %v2631
        %2633 = vmatmul.bf16.gmra.mxu0 %v654
        %v2634 = vpop.f32.mrf.mxu0
        %v2635 = vadd.f32 %v535, %v2634
        %v2636 = vpop.f32.mrf.mxu0
        %v2637 = vadd.f32 %v535, %v2636
        %2638 = vmatmul.bf16.gmra.mxu0 %v656
        %v2639 = vpop.f32.mrf.mxu0
        %v2640 = vadd.f32 %v535, %v2639
        %v2641 = vpop.f32.mrf.mxu0
        %v2642 = vadd.f32 %v535, %v2641
        %2643 = vmatmul.bf16.gmra.mxu0 %v658
        %v2644 = vpop.f32.mrf.mxu0
        %v2645 = vadd.f32 %v535, %v2644
        %v2646 = vpop.f32.mrf.mxu0
        %v2647 = vadd.f32 %v535, %v2646
        %2648 = vmatmul.bf16.gmra.mxu0 %v660
        %v2649 = vpop.f32.mrf.mxu0
        %v2650 = vadd.f32 %v535, %v2649
        %v2651 = vpop.f32.mrf.mxu0
        %v2652 = vadd.f32 %v535, %v2651
        %2653 = vmatmul.bf16.gmra.mxu0 %v662
        %v2654 = vpop.f32.mrf.mxu0
        %v2655 = vadd.f32 %v535, %v2654
        %v2656 = vpop.f32.mrf.mxu0
        %v2657 = vadd.f32 %v535, %v2656
        %2658 = vmatmul.bf16.gmra.mxu0 %v664
        %v2659 = vpop.f32.mrf.mxu0
        %v2660 = vadd.f32 %v535, %v2659
        %v2661 = vpop.f32.mrf.mxu0
        %v2662 = vadd.f32 %v535, %v2661
        %2663 = vmatmul.bf16.gmra.mxu0 %v666
        %v2664 = vpop.f32.mrf.mxu0
        %v2665 = vadd.f32 %v535, %v2664
        %v2666 = vpop.f32.mrf.mxu0
        %v2667 = vadd.f32 %v535, %v2666
        %2668 = vmatmul.bf16.gmra.mxu0 %v668
        %v2669 = vpop.f32.mrf.mxu0
        %v2670 = vadd.f32 %v535, %v2669
        %v2671 = vpop.f32.mrf.mxu0
        %v2672 = vadd.f32 %v535, %v2671
        %2673 = vmatmul.bf16.gmra.mxu0 %v670
        %v2674 = vpop.f32.mrf.mxu0
        %v2675 = vadd.f32 %v535, %v2674
        %v2676 = vpop.f32.mrf.mxu0
        %v2677 = vadd.f32 %v535, %v2676
        %2678 = vdwg.mxu0
        %2679 = vmatpush.bf16.msra.mxu0 %v1215
        %2680 = vmatpush.bf16.msra.mxu0 %v1207
        %2681 = vmatpush.bf16.msra.mxu0 %v1199
        %2682 = vmatpush.bf16.msra.mxu0 %v1191
        %2683 = vmatpush.bf16.msra.mxu0 %v1183
        %2684 = vmatpush.bf16.msra.mxu0 %v1175
        %2685 = vmatpush.bf16.msra.mxu0 %v1167
        %2686 = vmatpush.bf16.msra.mxu0 %v1159
        %2687 = vmatmul.bf16.gmra.mxu0 %v641
        %v2688 = vpop.f32.mrf.mxu0
        %v2689 = vadd.f32 %v2600, %v2688
        %v2690 = vpop.f32.mrf.mxu0
        %v2691 = vadd.f32 %v2602, %v2690
        %2692 = vmatmul.bf16.gmra.mxu0 %v643
        %v2693 = vpop.f32.mrf.mxu0
        %v2694 = vadd.f32 %v2605, %v2693
        %v2695 = vpop.f32.mrf.mxu0
        %v2696 = vadd.f32 %v2607, %v2695
        %2697 = vmatmul.bf16.gmra.mxu0 %v645
        %v2698 = vpop.f32.mrf.mxu0
        %v2699 = vadd.f32 %v2610, %v2698
        %v2700 = vpop.f32.mrf.mxu0
        %v2701 = vadd.f32 %v2612, %v2700
        %2702 = vmatmul.bf16.gmra.mxu0 %v647
        %v2703 = vpop.f32.mrf.mxu0
        %v2704 = vadd.f32 %v2615, %v2703
        %v2705 = vpop.f32.mrf.mxu0
        %v2706 = vadd.f32 %v2617, %v2705
        %2707 = vmatmul.bf16.gmra.mxu0 %v649
        %v2708 = vpop.f32.mrf.mxu0
        %v2709 = vadd.f32 %v2620, %v2708
        %v2710 = vpop.f32.mrf.mxu0
        %v2711 = vadd.f32 %v2622, %v2710
        %2712 = vmatmul.bf16.gmra.mxu0 %v651
        %v2713 = vpop.f32.mrf.mxu0
        %v2714 = vadd.f32 %v2625, %v2713
        %v2715 = vpop.f32.mrf.mxu0
        %v2716 = vadd.f32 %v2627, %v2715
        %2717 = vmatmul.bf16.gmra.mxu0 %v653
        %v2718 = vpop.f32.mrf.mxu0
        %v2719 = vadd.f32 %v2630, %v2718
        %v2720 = vpop.f32.mrf.mxu0
        %v2721 = vadd.f32 %v2632, %v2720
        %2722 = vmatmul.bf16.gmra.mxu0 %v655
        %v2723 = vpop.f32.mrf.mxu0
        %v2724 = vadd.f32 %v2635, %v2723
        %v2725 = vpop.f32.mrf.mxu0
        %v2726 = vadd.f32 %v2637, %v2725
        %2727 = vmatmul.bf16.gmra.mxu0 %v657
        %v2728 = vpop.f32.mrf.mxu0
        %v2729 = vadd.f32 %v2640, %v2728
        %v2730 = vpop.f32.mrf.mxu0
        %v2731 = vadd.f32 %v2642, %v2730
        %2732 = vmatmul.bf16.gmra.mxu0 %v659
        %v2733 = vpop.f32.mrf.mxu0
        %v2734 = vadd.f32 %v2645, %v2733
        %v2735 = vpop.f32.mrf.mxu0
        %v2736 = vadd.f32 %v2647, %v2735
        %2737 = vmatmul.bf16.gmra.mxu0 %v661
        %v2738 = vpop.f32.mrf.mxu0
        %v2739 = vadd.f32 %v2650, %v2738
        %v2740 = vpop.f32.mrf.mxu0
        %v2741 = vadd.f32 %v2652, %v2740
        %2742 = vmatmul.bf16.gmra.mxu0 %v663
        %v2743 = vpop.f32.mrf.mxu0
        %v2744 = vadd.f32 %v2655, %v2743
        %v2745 = vpop.f32.mrf.mxu0
        %v2746 = vadd.f32 %v2657, %v2745
        %2747 = vmatmul.bf16.gmra.mxu0 %v665
        %v2748 = vpop.f32.mrf.mxu0
        %v2749 = vadd.f32 %v2660, %v2748
        %v2750 = vpop.f32.mrf.mxu0
        %v2751 = vadd.f32 %v2662, %v2750
        %2752 = vmatmul.bf16.gmra.mxu0 %v667
        %v2753 = vpop.f32.mrf.mxu0
        %v2754 = vadd.f32 %v2665, %v2753
        %v2755 = vpop.f32.mrf.mxu0
        %v2756 = vadd.f32 %v2667, %v2755
        %2757 = vmatmul.bf16.gmra.mxu0 %v669
        %v2758 = vpop.f32.mrf.mxu0
        %v2759 = vadd.f32 %v2670, %v2758
        %v2760 = vpop.f32.mrf.mxu0
        %v2761 = vadd.f32 %v2672, %v2760
        %2762 = vmatmul.bf16.gmra.mxu0 %v671
        %v2763 = vpop.f32.mrf.mxu0
        %v2764 = vadd.f32 %v2675, %v2763
        %v2765 = vpop.f32.mrf.mxu0
        %v2766 = vadd.f32 %v2677, %v2765
        %2767 = vdwg.mxu0
        %v2768 = vmax.f32 %v1443, 0.0
        %v2769 = vmax.f32 %v1621, 0.0
        %v2770 = vmax.f32 %v1799, 0.0
        %v2771 = vmax.f32 %v1977, 0.0
        %v2772 = vmax.f32 %v2155, 0.0
        %v2773 = vmax.f32 %v2333, 0.0
        %v2774 = vmax.f32 %v2511, 0.0
        %v2775 = vmax.f32 %v2689, 0.0
        %v2776 = vmax.f32 %v1445, 0.0
        %v2777 = vmax.f32 %v1623, 0.0
        %v2778 = vmax.f32 %v1801, 0.0
        %v2779 = vmax.f32 %v1979, 0.0
        %v2780 = vmax.f32 %v2157, 0.0
        %v2781 = vmax.f32 %v2335, 0.0
        %v2782 = vmax.f32 %v2513, 0.0
        %v2783 = vmax.f32 %v2691, 0.0
        %v2784 = vmax.f32 %v1448, 0.0
        %v2785 = vmax.f32 %v1626, 0.0
        %v2786 = vmax.f32 %v1804, 0.0
        %v2787 = vmax.f32 %v1982, 0.0
        %v2788 = vmax.f32 %v2160, 0.0
        %v2789 = vmax.f32 %v2338, 0.0
        %v2790 = vmax.f32 %v2516, 0.0
        %v2791 = vmax.f32 %v2694, 0.0
        %v2792 = vmax.f32 %v1450, 0.0
        %v2793 = vmax.f32 %v1628, 0.0
        %v2794 = vmax.f32 %v1806, 0.0
        %v2795 = vmax.f32 %v1984, 0.0
        %v2796 = vmax.f32 %v2162, 0.0
        %v2797 = vmax.f32 %v2340, 0.0
        %v2798 = vmax.f32 %v2518, 0.0
        %v2799 = vmax.f32 %v2696, 0.0
        %v2800 = vmax.f32 %v1453, 0.0
        %v2801 = vmax.f32 %v1631, 0.0
        %v2802 = vmax.f32 %v1809, 0.0
        %v2803 = vmax.f32 %v1987, 0.0
        %v2804 = vmax.f32 %v2165, 0.0
        %v2805 = vmax.f32 %v2343, 0.0
        %v2806 = vmax.f32 %v2521, 0.0
        %v2807 = vmax.f32 %v2699, 0.0
        %v2808 = vmax.f32 %v1455, 0.0
        %v2809 = vmax.f32 %v1633, 0.0
        %v2810 = vmax.f32 %v1811, 0.0
        %v2811 = vmax.f32 %v1989, 0.0
        %v2812 = vmax.f32 %v2167, 0.0
        %v2813 = vmax.f32 %v2345, 0.0
        %v2814 = vmax.f32 %v2523, 0.0
        %v2815 = vmax.f32 %v2701, 0.0
        %v2816 = vmax.f32 %v1458, 0.0
        %v2817 = vmax.f32 %v1636, 0.0
        %v2818 = vmax.f32 %v1814, 0.0
        %v2819 = vmax.f32 %v1992, 0.0
        %v2820 = vmax.f32 %v2170, 0.0
        %v2821 = vmax.f32 %v2348, 0.0
        %v2822 = vmax.f32 %v2526, 0.0
        %v2823 = vmax.f32 %v2704, 0.0
        %v2824 = vmax.f32 %v1460, 0.0
        %v2825 = vmax.f32 %v1638, 0.0
        %v2826 = vmax.f32 %v1816, 0.0
        %v2827 = vmax.f32 %v1994, 0.0
        %v2828 = vmax.f32 %v2172, 0.0
        %v2829 = vmax.f32 %v2350, 0.0
        %v2830 = vmax.f32 %v2528, 0.0
        %v2831 = vmax.f32 %v2706, 0.0
        %v2832 = vmax.f32 %v1463, 0.0
        %v2833 = vmax.f32 %v1641, 0.0
        %v2834 = vmax.f32 %v1819, 0.0
        %v2835 = vmax.f32 %v1997, 0.0
        %v2836 = vmax.f32 %v2175, 0.0
        %v2837 = vmax.f32 %v2353, 0.0
        %v2838 = vmax.f32 %v2531, 0.0
        %v2839 = vmax.f32 %v2709, 0.0
        %v2840 = vmax.f32 %v1465, 0.0
        %v2841 = vmax.f32 %v1643, 0.0
        %v2842 = vmax.f32 %v1821, 0.0
        %v2843 = vmax.f32 %v1999, 0.0
        %v2844 = vmax.f32 %v2177, 0.0
        %v2845 = vmax.f32 %v2355, 0.0
        %v2846 = vmax.f32 %v2533, 0.0
        %v2847 = vmax.f32 %v2711, 0.0
        %v2848 = vmax.f32 %v1468, 0.0
        %v2849 = vmax.f32 %v1646, 0.0
        %v2850 = vmax.f32 %v1824, 0.0
        %v2851 = vmax.f32 %v2002, 0.0
        %v2852 = vmax.f32 %v2180, 0.0
        %v2853 = vmax.f32 %v2358, 0.0
        %v2854 = vmax.f32 %v2536, 0.0
        %v2855 = vmax.f32 %v2714, 0.0
        %v2856 = vmax.f32 %v1470, 0.0
        %v2857 = vmax.f32 %v1648, 0.0
        %v2858 = vmax.f32 %v1826, 0.0
        %v2859 = vmax.f32 %v2004, 0.0
        %v2860 = vmax.f32 %v2182, 0.0
        %v2861 = vmax.f32 %v2360, 0.0
        %v2862 = vmax.f32 %v2538, 0.0
        %v2863 = vmax.f32 %v2716, 0.0
        %v2864 = vmax.f32 %v1473, 0.0
        %v2865 = vmax.f32 %v1651, 0.0
        %v2866 = vmax.f32 %v1829, 0.0
        %v2867 = vmax.f32 %v2007, 0.0
        %v2868 = vmax.f32 %v2185, 0.0
        %v2869 = vmax.f32 %v2363, 0.0
        %v2870 = vmax.f32 %v2541, 0.0
        %v2871 = vmax.f32 %v2719, 0.0
        %v2872 = vmax.f32 %v1475, 0.0
        %v2873 = vmax.f32 %v1653, 0.0
        %v2874 = vmax.f32 %v1831, 0.0
        %v2875 = vmax.f32 %v2009, 0.0
        %v2876 = vmax.f32 %v2187, 0.0
        %v2877 = vmax.f32 %v2365, 0.0
        %v2878 = vmax.f32 %v2543, 0.0
        %v2879 = vmax.f32 %v2721, 0.0
        %v2880 = vmax.f32 %v1478, 0.0
        %v2881 = vmax.f32 %v1656, 0.0
        %v2882 = vmax.f32 %v1834, 0.0
        %v2883 = vmax.f32 %v2012, 0.0
        %v2884 = vmax.f32 %v2190, 0.0
        %v2885 = vmax.f32 %v2368, 0.0
        %v2886 = vmax.f32 %v2546, 0.0
        %v2887 = vmax.f32 %v2724, 0.0
        %v2888 = vmax.f32 %v1480, 0.0
        %v2889 = vmax.f32 %v1658, 0.0
        %v2890 = vmax.f32 %v1836, 0.0
        %v2891 = vmax.f32 %v2014, 0.0
        %v2892 = vmax.f32 %v2192, 0.0
        %v2893 = vmax.f32 %v2370, 0.0
        %v2894 = vmax.f32 %v2548, 0.0
        %v2895 = vmax.f32 %v2726, 0.0
        %v2896 = vmax.f32 %v1483, 0.0
        %v2897 = vmax.f32 %v1661, 0.0
        %v2898 = vmax.f32 %v1839, 0.0
        %v2899 = vmax.f32 %v2017, 0.0
        %v2900 = vmax.f32 %v2195, 0.0
        %v2901 = vmax.f32 %v2373, 0.0
        %v2902 = vmax.f32 %v2551, 0.0
        %v2903 = vmax.f32 %v2729, 0.0
        %v2904 = vmax.f32 %v1485, 0.0
        %v2905 = vmax.f32 %v1663, 0.0
        %v2906 = vmax.f32 %v1841, 0.0
        %v2907 = vmax.f32 %v2019, 0.0
        %v2908 = vmax.f32 %v2197, 0.0
        %v2909 = vmax.f32 %v2375, 0.0
        %v2910 = vmax.f32 %v2553, 0.0
        %v2911 = vmax.f32 %v2731, 0.0
        %v2912 = vmax.f32 %v1488, 0.0
        %v2913 = vmax.f32 %v1666, 0.0
        %v2914 = vmax.f32 %v1844, 0.0
        %v2915 = vmax.f32 %v2022, 0.0
        %v2916 = vmax.f32 %v2200, 0.0
        %v2917 = vmax.f32 %v2378, 0.0
        %v2918 = vmax.f32 %v2556, 0.0
        %v2919 = vmax.f32 %v2734, 0.0
        %v2920 = vmax.f32 %v1490, 0.0
        %v2921 = vmax.f32 %v1668, 0.0
        %v2922 = vmax.f32 %v1846, 0.0
        %v2923 = vmax.f32 %v2024, 0.0
        %v2924 = vmax.f32 %v2202, 0.0
        %v2925 = vmax.f32 %v2380, 0.0
        %v2926 = vmax.f32 %v2558, 0.0
        %v2927 = vmax.f32 %v2736, 0.0
        %v2928 = vmax.f32 %v1493, 0.0
        %v2929 = vmax.f32 %v1671, 0.0
        %v2930 = vmax.f32 %v1849, 0.0
        %v2931 = vmax.f32 %v2027, 0.0
        %v2932 = vmax.f32 %v2205, 0.0
        %v2933 = vmax.f32 %v2383, 0.0
        %v2934 = vmax.f32 %v2561, 0.0
        %v2935 = vmax.f32 %v2739, 0.0
        %v2936 = vmax.f32 %v1495, 0.0
        %v2937 = vmax.f32 %v1673, 0.0
        %v2938 = vmax.f32 %v1851, 0.0
        %v2939 = vmax.f32 %v2029, 0.0
        %v2940 = vmax.f32 %v2207, 0.0
        %v2941 = vmax.f32 %v2385, 0.0
        %v2942 = vmax.f32 %v2563, 0.0
        %v2943 = vmax.f32 %v2741, 0.0
        %v2944 = vmax.f32 %v1498, 0.0
        %v2945 = vmax.f32 %v1676, 0.0
        %v2946 = vmax.f32 %v1854, 0.0
        %v2947 = vmax.f32 %v2032, 0.0
        %v2948 = vmax.f32 %v2210, 0.0
        %v2949 = vmax.f32 %v2388, 0.0
        %v2950 = vmax.f32 %v2566, 0.0
        %v2951 = vmax.f32 %v2744, 0.0
        %v2952 = vmax.f32 %v1500, 0.0
        %v2953 = vmax.f32 %v1678, 0.0
        %v2954 = vmax.f32 %v1856, 0.0
        %v2955 = vmax.f32 %v2034, 0.0
        %v2956 = vmax.f32 %v2212, 0.0
        %v2957 = vmax.f32 %v2390, 0.0
        %v2958 = vmax.f32 %v2568, 0.0
        %v2959 = vmax.f32 %v2746, 0.0
        %v2960 = vmax.f32 %v1503, 0.0
        %v2961 = vmax.f32 %v1681, 0.0
        %v2962 = vmax.f32 %v1859, 0.0
        %v2963 = vmax.f32 %v2037, 0.0
        %v2964 = vmax.f32 %v2215, 0.0
        %v2965 = vmax.f32 %v2393, 0.0
        %v2966 = vmax.f32 %v2571, 0.0
        %v2967 = vmax.f32 %v2749, 0.0
        %v2968 = vmax.f32 %v1505, 0.0
        %v2969 = vmax.f32 %v1683, 0.0
        %v2970 = vmax.f32 %v1861, 0.0
        %v2971 = vmax.f32 %v2039, 0.0
        %v2972 = vmax.f32 %v2217, 0.0
        %v2973 = vmax.f32 %v2395, 0.0
        %v2974 = vmax.f32 %v2573, 0.0
        %v2975 = vmax.f32 %v2751, 0.0
        %v2976 = vmax.f32 %v1508, 0.0
        %v2977 = vmax.f32 %v1686, 0.0
        %v2978 = vmax.f32 %v1864, 0.0
        %v2979 = vmax.f32 %v2042, 0.0
        %v2980 = vmax.f32 %v2220, 0.0
        %v2981 = vmax.f32 %v2398, 0.0
        %v2982 = vmax.f32 %v2576, 0.0
        %v2983 = vmax.f32 %v2754, 0.0
        %v2984 = vmax.f32 %v1510, 0.0
        %v2985 = vmax.f32 %v1688, 0.0
        %v2986 = vmax.f32 %v1866, 0.0
        %v2987 = vmax.f32 %v2044, 0.0
        %v2988 = vmax.f32 %v2222, 0.0
        %v2989 = vmax.f32 %v2400, 0.0
        %v2990 = vmax.f32 %v2578, 0.0
        %v2991 = vmax.f32 %v2756, 0.0
        %v2992 = vmax.f32 %v1513, 0.0
        %v2993 = vmax.f32 %v1691, 0.0
        %v2994 = vmax.f32 %v1869, 0.0
        %v2995 = vmax.f32 %v2047, 0.0
        %v2996 = vmax.f32 %v2225, 0.0
        %v2997 = vmax.f32 %v2403, 0.0
        %v2998 = vmax.f32 %v2581, 0.0
        %v2999 = vmax.f32 %v2759, 0.0
        %v3000 = vmax.f32 %v1515, 0.0
        %v3001 = vmax.f32 %v1693, 0.0
        %v3002 = vmax.f32 %v1871, 0.0
        %v3003 = vmax.f32 %v2049, 0.0
        %v3004 = vmax.f32 %v2227, 0.0
        %v3005 = vmax.f32 %v2405, 0.0
        %v3006 = vmax.f32 %v2583, 0.0
        %v3007 = vmax.f32 %v2761, 0.0
        %v3008 = vmax.f32 %v1518, 0.0
        %v3009 = vmax.f32 %v1696, 0.0
        %v3010 = vmax.f32 %v1874, 0.0
        %v3011 = vmax.f32 %v2052, 0.0
        %v3012 = vmax.f32 %v2230, 0.0
        %v3013 = vmax.f32 %v2408, 0.0
        %v3014 = vmax.f32 %v2586, 0.0
        %v3015 = vmax.f32 %v2764, 0.0
        %v3016 = vmax.f32 %v1520, 0.0
        %v3017 = vmax.f32 %v1698, 0.0
        %v3018 = vmax.f32 %v1876, 0.0
        %v3019 = vmax.f32 %v2054, 0.0
        %v3020 = vmax.f32 %v2232, 0.0
        %v3021 = vmax.f32 %v2410, 0.0
        %v3022 = vmax.f32 %v2588, 0.0
        %v3023 = vmax.f32 %v2766, 0.0
        %v3024 = vpack.c.bf16 %v2776, %v2768
        %v3025 = vpack.c.bf16 %v2777, %v2769
        %v3026 = vpack.c.bf16 %v2778, %v2770
        %v3027 = vpack.c.bf16 %v2779, %v2771
        %v3028 = vpack.c.bf16 %v2780, %v2772
        %v3029 = vpack.c.bf16 %v2781, %v2773
        %v3030 = vpack.c.bf16 %v2782, %v2774
        %v3031 = vpack.c.bf16 %v2783, %v2775
        %v3032 = vpack.c.bf16 %v2792, %v2784
        %v3033 = vpack.c.bf16 %v2793, %v2785
        %v3034 = vpack.c.bf16 %v2794, %v2786
        %v3035 = vpack.c.bf16 %v2795, %v2787
        %v3036 = vpack.c.bf16 %v2796, %v2788
        %v3037 = vpack.c.bf16 %v2797, %v2789
        %v3038 = vpack.c.bf16 %v2798, %v2790
        %v3039 = vpack.c.bf16 %v2799, %v2791
        %v3040 = vpack.c.bf16 %v2808, %v2800
        %v3041 = vpack.c.bf16 %v2809, %v2801
        %v3042 = vpack.c.bf16 %v2810, %v2802
        %v3043 = vpack.c.bf16 %v2811, %v2803
        %v3044 = vpack.c.bf16 %v2812, %v2804
        %v3045 = vpack.c.bf16 %v2813, %v2805
        %v3046 = vpack.c.bf16 %v2814, %v2806
        %v3047 = vpack.c.bf16 %v2815, %v2807
        %v3048 = vpack.c.bf16 %v2824, %v2816
        %v3049 = vpack.c.bf16 %v2825, %v2817
        %v3050 = vpack.c.bf16 %v2826, %v2818
        %v3051 = vpack.c.bf16 %v2827, %v2819
        %v3052 = vpack.c.bf16 %v2828, %v2820
        %v3053 = vpack.c.bf16 %v2829, %v2821
        %v3054 = vpack.c.bf16 %v2830, %v2822
        %v3055 = vpack.c.bf16 %v2831, %v2823
        %v3056 = vpack.c.bf16 %v2840, %v2832
        %v3057 = vpack.c.bf16 %v2841, %v2833
        %v3058 = vpack.c.bf16 %v2842, %v2834
        %v3059 = vpack.c.bf16 %v2843, %v2835
        %v3060 = vpack.c.bf16 %v2844, %v2836
        %v3061 = vpack.c.bf16 %v2845, %v2837
        %v3062 = vpack.c.bf16 %v2846, %v2838
        %v3063 = vpack.c.bf16 %v2847, %v2839
        %v3064 = vpack.c.bf16 %v2856, %v2848
        %v3065 = vpack.c.bf16 %v2857, %v2849
        %v3066 = vpack.c.bf16 %v2858, %v2850
        %v3067 = vpack.c.bf16 %v2859, %v2851
        %v3068 = vpack.c.bf16 %v2860, %v2852
        %v3069 = vpack.c.bf16 %v2861, %v2853
        %v3070 = vpack.c.bf16 %v2862, %v2854
        %v3071 = vpack.c.bf16 %v2863, %v2855
        %v3072 = vpack.c.bf16 %v2872, %v2864
        %v3073 = vpack.c.bf16 %v2873, %v2865
        %v3074 = vpack.c.bf16 %v2874, %v2866
        %v3075 = vpack.c.bf16 %v2875, %v2867
        %v3076 = vpack.c.bf16 %v2876, %v2868
        %v3077 = vpack.c.bf16 %v2877, %v2869
        %v3078 = vpack.c.bf16 %v2878, %v2870
        %v3079 = vpack.c.bf16 %v2879, %v2871
        %v3080 = vpack.c.bf16 %v2888, %v2880
        %v3081 = vpack.c.bf16 %v2889, %v2881
        %v3082 = vpack.c.bf16 %v2890, %v2882
        %v3083 = vpack.c.bf16 %v2891, %v2883
        %v3084 = vpack.c.bf16 %v2892, %v2884
        %v3085 = vpack.c.bf16 %v2893, %v2885
        %v3086 = vpack.c.bf16 %v2894, %v2886
        %v3087 = vpack.c.bf16 %v2895, %v2887
        %v3088 = vpack.c.bf16 %v2904, %v2896
        %v3089 = vpack.c.bf16 %v2905, %v2897
        %v3090 = vpack.c.bf16 %v2906, %v2898
        %v3091 = vpack.c.bf16 %v2907, %v2899
        %v3092 = vpack.c.bf16 %v2908, %v2900
        %v3093 = vpack.c.bf16 %v2909, %v2901
        %v3094 = vpack.c.bf16 %v2910, %v2902
        %v3095 = vpack.c.bf16 %v2911, %v2903
        %v3096 = vpack.c.bf16 %v2920, %v2912
        %v3097 = vpack.c.bf16 %v2921, %v2913
        %v3098 = vpack.c.bf16 %v2922, %v2914
        %v3099 = vpack.c.bf16 %v2923, %v2915
        %v3100 = vpack.c.bf16 %v2924, %v2916
        %v3101 = vpack.c.bf16 %v2925, %v2917
        %v3102 = vpack.c.bf16 %v2926, %v2918
        %v3103 = vpack.c.bf16 %v2927, %v2919
        %v3104 = vpack.c.bf16 %v2936, %v2928
        %v3105 = vpack.c.bf16 %v2937, %v2929
        %v3106 = vpack.c.bf16 %v2938, %v2930
        %v3107 = vpack.c.bf16 %v2939, %v2931
        %v3108 = vpack.c.bf16 %v2940, %v2932
        %v3109 = vpack.c.bf16 %v2941, %v2933
        %v3110 = vpack.c.bf16 %v2942, %v2934
        %v3111 = vpack.c.bf16 %v2943, %v2935
        %v3112 = vpack.c.bf16 %v2952, %v2944
        %v3113 = vpack.c.bf16 %v2953, %v2945
        %v3114 = vpack.c.bf16 %v2954, %v2946
        %v3115 = vpack.c.bf16 %v2955, %v2947
        %v3116 = vpack.c.bf16 %v2956, %v2948
        %v3117 = vpack.c.bf16 %v2957, %v2949
        %v3118 = vpack.c.bf16 %v2958, %v2950
        %v3119 = vpack.c.bf16 %v2959, %v2951
        %v3120 = vpack.c.bf16 %v2968, %v2960
        %v3121 = vpack.c.bf16 %v2969, %v2961
        %v3122 = vpack.c.bf16 %v2970, %v2962
        %v3123 = vpack.c.bf16 %v2971, %v2963
        %v3124 = vpack.c.bf16 %v2972, %v2964
        %v3125 = vpack.c.bf16 %v2973, %v2965
        %v3126 = vpack.c.bf16 %v2974, %v2966
        %v3127 = vpack.c.bf16 %v2975, %v2967
        %v3128 = vpack.c.bf16 %v2984, %v2976
        %v3129 = vpack.c.bf16 %v2985, %v2977
        %v3130 = vpack.c.bf16 %v2986, %v2978
        %v3131 = vpack.c.bf16 %v2987, %v2979
        %v3132 = vpack.c.bf16 %v2988, %v2980
        %v3133 = vpack.c.bf16 %v2989, %v2981
        %v3134 = vpack.c.bf16 %v2990, %v2982
        %v3135 = vpack.c.bf16 %v2991, %v2983
        %v3136 = vpack.c.bf16 %v3000, %v2992
        %v3137 = vpack.c.bf16 %v3001, %v2993
        %v3138 = vpack.c.bf16 %v3002, %v2994
        %v3139 = vpack.c.bf16 %v3003, %v2995
        %v3140 = vpack.c.bf16 %v3004, %v2996
        %v3141 = vpack.c.bf16 %v3005, %v2997
        %v3142 = vpack.c.bf16 %v3006, %v2998
        %v3143 = vpack.c.bf16 %v3007, %v2999
        %v3144 = vpack.c.bf16 %v3016, %v3008
        %v3145 = vpack.c.bf16 %v3017, %v3009
        %v3146 = vpack.c.bf16 %v3018, %v3010
        %v3147 = vpack.c.bf16 %v3019, %v3011
        %v3148 = vpack.c.bf16 %v3020, %v3012
        %v3149 = vpack.c.bf16 %v3021, %v3013
        %v3150 = vpack.c.bf16 %v3022, %v3014
        %v3151 = vpack.c.bf16 %v3023, %v3015
        %v3152 = vld [vmem:[#allocation8] sm:$0xf]
        %v3153 = vld [vmem:[#allocation8 + $0x4] sm:$0xf]
        %v3154 = vld [vmem:[#allocation8 + $0x8] sm:$0xf]
        %v3155 = vld [vmem:[#allocation8 + $0xc] sm:$0xf]
        %v3156 = vld [vmem:[#allocation8 + $0x10] sm:$0xf]
        %v3157 = vld [vmem:[#allocation8 + $0x14] sm:$0xf]
        %v3158 = vld [vmem:[#allocation8 + $0x18] sm:$0xf]
        %v3159 = vld [vmem:[#allocation8 + $0x1c] sm:$0xf]
        %v3160 = vld [vmem:[#allocation8 + $0x20] sm:$0xf]
        %v3161 = vld [vmem:[#allocation8 + $0x24] sm:$0xf]
        %v3162 = vld [vmem:[#allocation8 + $0x28] sm:$0xf]
        %v3163 = vld [vmem:[#allocation8 + $0x2c] sm:$0xf]
        %v3164 = vld [vmem:[#allocation8 + $0x30] sm:$0xf]
        %v3165 = vld [vmem:[#allocation8 + $0x34] sm:$0xf]
        %v3166 = vld [vmem:[#allocation8 + $0x38] sm:$0xf]
        %v3167 = vld [vmem:[#allocation8 + $0x3c] sm:$0xf]
        %v3168 = vld [vmem:[#allocation8 + $0x40] sm:$0xf]
        %v3169 = vld [vmem:[#allocation8 + $0x44] sm:$0xf]
        %v3170 = vld [vmem:[#allocation8 + $0x48] sm:$0xf]
        %v3171 = vld [vmem:[#allocation8 + $0x4c] sm:$0xf]
        %v3172 = vld [vmem:[#allocation8 + $0x50] sm:$0xf]
        %v3173 = vld [vmem:[#allocation8 + $0x54] sm:$0xf]
        %v3174 = vld [vmem:[#allocation8 + $0x58] sm:$0xf]
        %v3175 = vld [vmem:[#allocation8 + $0x5c] sm:$0xf]
        %v3176 = vld [vmem:[#allocation8 + $0x60] sm:$0xf]
        %v3177 = vld [vmem:[#allocation8 + $0x64] sm:$0xf]
        %v3178 = vld [vmem:[#allocation8 + $0x68] sm:$0xf]
        %v3179 = vld [vmem:[#allocation8 + $0x6c] sm:$0xf]
        %v3180 = vld [vmem:[#allocation8 + $0x70] sm:$0xf]
        %v3181 = vld [vmem:[#allocation8 + $0x74] sm:$0xf]
        %v3182 = vld [vmem:[#allocation8 + $0x78] sm:$0xf]
        %v3183 = vld [vmem:[#allocation8 + $0x7c] sm:$0xf]
        %v3184 = vld [vmem:[#allocation8 + $0x80] sm:$0xf]
        %v3185 = vld [vmem:[#allocation8 + $0x84] sm:$0xf]
        %v3186 = vld [vmem:[#allocation8 + $0x88] sm:$0xf]
        %v3187 = vld [vmem:[#allocation8 + $0x8c] sm:$0xf]
        %v3188 = vld [vmem:[#allocation8 + $0x90] sm:$0xf]
        %v3189 = vld [vmem:[#allocation8 + $0x94] sm:$0xf]
        %v3190 = vld [vmem:[#allocation8 + $0x98] sm:$0xf]
        %v3191 = vld [vmem:[#allocation8 + $0x9c] sm:$0xf]
        %v3192 = vld [vmem:[#allocation8 + $0xa0] sm:$0xf]
        %v3193 = vld [vmem:[#allocation8 + $0xa4] sm:$0xf]
        %v3194 = vld [vmem:[#allocation8 + $0xa8] sm:$0xf]
        %v3195 = vld [vmem:[#allocation8 + $0xac] sm:$0xf]
        %v3196 = vld [vmem:[#allocation8 + $0xb0] sm:$0xf]
        %v3197 = vld [vmem:[#allocation8 + $0xb4] sm:$0xf]
        %v3198 = vld [vmem:[#allocation8 + $0xb8] sm:$0xf]
        %v3199 = vld [vmem:[#allocation8 + $0xbc] sm:$0xf]
        %v3200 = vld [vmem:[#allocation8 + $0xc0] sm:$0xf]
        %v3201 = vld [vmem:[#allocation8 + $0xc4] sm:$0xf]
        %v3202 = vld [vmem:[#allocation8 + $0xc8] sm:$0xf]
        %v3203 = vld [vmem:[#allocation8 + $0xcc] sm:$0xf]
        %v3204 = vld [vmem:[#allocation8 + $0xd0] sm:$0xf]
        %v3205 = vld [vmem:[#allocation8 + $0xd4] sm:$0xf]
        %v3206 = vld [vmem:[#allocation8 + $0xd8] sm:$0xf]
        %v3207 = vld [vmem:[#allocation8 + $0xdc] sm:$0xf]
        %v3208 = vld [vmem:[#allocation8 + $0xe0] sm:$0xf]
        %v3209 = vld [vmem:[#allocation8 + $0xe4] sm:$0xf]
        %v3210 = vld [vmem:[#allocation8 + $0xe8] sm:$0xf]
        %v3211 = vld [vmem:[#allocation8 + $0xec] sm:$0xf]
        %v3212 = vld [vmem:[#allocation8 + $0xf0] sm:$0xf]
        %v3213 = vld [vmem:[#allocation8 + $0xf4] sm:$0xf]
        %v3214 = vld [vmem:[#allocation8 + $0xf8] sm:$0xf]
        %v3215 = vld [vmem:[#allocation8 + $0xfc] sm:$0xf]
        %v3216 = vld [vmem:[#allocation8 + $0x100] sm:$0xf]
        %v3217 = vld [vmem:[#allocation8 + $0x104] sm:$0xf]
        %v3218 = vld [vmem:[#allocation8 + $0x108] sm:$0xf]
        %v3219 = vld [vmem:[#allocation8 + $0x10c] sm:$0xf]
        %v3220 = vld [vmem:[#allocation8 + $0x110] sm:$0xf]
        %v3221 = vld [vmem:[#allocation8 + $0x114] sm:$0xf]
        %v3222 = vld [vmem:[#allocation8 + $0x118] sm:$0xf]
        %v3223 = vld [vmem:[#allocation8 + $0x11c] sm:$0xf]
        %v3224 = vld [vmem:[#allocation8 + $0x120] sm:$0xf]
        %v3225 = vld [vmem:[#allocation8 + $0x124] sm:$0xf]
        %v3226 = vld [vmem:[#allocation8 + $0x128] sm:$0xf]
        %v3227 = vld [vmem:[#allocation8 + $0x12c] sm:$0xf]
        %v3228 = vld [vmem:[#allocation8 + $0x130] sm:$0xf]
        %v3229 = vld [vmem:[#allocation8 + $0x134] sm:$0xf]
        %v3230 = vld [vmem:[#allocation8 + $0x138] sm:$0xf]
        %v3231 = vld [vmem:[#allocation8 + $0x13c] sm:$0xf]
        %v3232 = vld [vmem:[#allocation8 + $0x140] sm:$0xf]
        %v3233 = vld [vmem:[#allocation8 + $0x144] sm:$0xf]
        %v3234 = vld [vmem:[#allocation8 + $0x148] sm:$0xf]
        %v3235 = vld [vmem:[#allocation8 + $0x14c] sm:$0xf]
        %v3236 = vld [vmem:[#allocation8 + $0x150] sm:$0xf]
        %v3237 = vld [vmem:[#allocation8 + $0x154] sm:$0xf]
        %v3238 = vld [vmem:[#allocation8 + $0x158] sm:$0xf]
        %v3239 = vld [vmem:[#allocation8 + $0x15c] sm:$0xf]
        %v3240 = vld [vmem:[#allocation8 + $0x160] sm:$0xf]
        %v3241 = vld [vmem:[#allocation8 + $0x164] sm:$0xf]
        %v3242 = vld [vmem:[#allocation8 + $0x168] sm:$0xf]
        %v3243 = vld [vmem:[#allocation8 + $0x16c] sm:$0xf]
        %v3244 = vld [vmem:[#allocation8 + $0x170] sm:$0xf]
        %v3245 = vld [vmem:[#allocation8 + $0x174] sm:$0xf]
        %v3246 = vld [vmem:[#allocation8 + $0x178] sm:$0xf]
        %v3247 = vld [vmem:[#allocation8 + $0x17c] sm:$0xf]
        %v3248 = vld [vmem:[#allocation8 + $0x180] sm:$0xf]
        %v3249 = vld [vmem:[#allocation8 + $0x184] sm:$0xf]
        %v3250 = vld [vmem:[#allocation8 + $0x188] sm:$0xf]
        %v3251 = vld [vmem:[#allocation8 + $0x18c] sm:$0xf]
        %v3252 = vld [vmem:[#allocation8 + $0x190] sm:$0xf]
        %v3253 = vld [vmem:[#allocation8 + $0x194] sm:$0xf]
        %v3254 = vld [vmem:[#allocation8 + $0x198] sm:$0xf]
        %v3255 = vld [vmem:[#allocation8 + $0x19c] sm:$0xf]
        %v3256 = vld [vmem:[#allocation8 + $0x1a0] sm:$0xf]
        %v3257 = vld [vmem:[#allocation8 + $0x1a4] sm:$0xf]
        %v3258 = vld [vmem:[#allocation8 + $0x1a8] sm:$0xf]
        %v3259 = vld [vmem:[#allocation8 + $0x1ac] sm:$0xf]
        %v3260 = vld [vmem:[#allocation8 + $0x1b0] sm:$0xf]
        %v3261 = vld [vmem:[#allocation8 + $0x1b4] sm:$0xf]
        %v3262 = vld [vmem:[#allocation8 + $0x1b8] sm:$0xf]
        %v3263 = vld [vmem:[#allocation8 + $0x1bc] sm:$0xf]
        %v3264 = vld [vmem:[#allocation8 + $0x1c0] sm:$0xf]
        %v3265 = vld [vmem:[#allocation8 + $0x1c4] sm:$0xf]
        %v3266 = vld [vmem:[#allocation8 + $0x1c8] sm:$0xf]
        %v3267 = vld [vmem:[#allocation8 + $0x1cc] sm:$0xf]
        %v3268 = vld [vmem:[#allocation8 + $0x1d0] sm:$0xf]
        %v3269 = vld [vmem:[#allocation8 + $0x1d4] sm:$0xf]
        %v3270 = vld [vmem:[#allocation8 + $0x1d8] sm:$0xf]
        %v3271 = vld [vmem:[#allocation8 + $0x1dc] sm:$0xf]
        %v3272 = vld [vmem:[#allocation8 + $0x1e0] sm:$0xf]
        %v3273 = vld [vmem:[#allocation8 + $0x1e4] sm:$0xf]
        %v3274 = vld [vmem:[#allocation8 + $0x1e8] sm:$0xf]
        %v3275 = vld [vmem:[#allocation8 + $0x1ec] sm:$0xf]
        %v3276 = vld [vmem:[#allocation8 + $0x1f0] sm:$0xf]
        %v3277 = vld [vmem:[#allocation8 + $0x1f4] sm:$0xf]
        %v3278 = vld [vmem:[#allocation8 + $0x1f8] sm:$0xf]
        %v3279 = vld [vmem:[#allocation8 + $0x1fc] sm:$0xf]
        %v3280 = vld [vmem:[%s4] sm:$0x1]
        %v3282 = vperm.slane %v3280, 0
        %v3412 = vunpack.c.l.b16 %v3152
        %v3413 = vunpack.c.l.b16 %v3153
        %v3414 = vunpack.c.l.b16 %v3154
        %v3415 = vunpack.c.l.b16 %v3155
        %v3416 = vunpack.c.l.b16 %v3156
        %v3417 = vunpack.c.l.b16 %v3157
        %v3418 = vunpack.c.l.b16 %v3158
        %v3419 = vunpack.c.l.b16 %v3159
        %v3420 = vunpack.c.l.b16 %v3160
        %v3421 = vunpack.c.l.b16 %v3161
        %v3422 = vunpack.c.l.b16 %v3162
        %v3423 = vunpack.c.l.b16 %v3163
        %v3424 = vunpack.c.l.b16 %v3164
        %v3425 = vunpack.c.l.b16 %v3165
        %v3426 = vunpack.c.l.b16 %v3166
        %v3427 = vunpack.c.l.b16 %v3167
        %v3428 = vunpack.c.l.b16 %v3168
        %v3429 = vunpack.c.l.b16 %v3169
        %v3430 = vunpack.c.l.b16 %v3170
        %v3431 = vunpack.c.l.b16 %v3171
        %v3432 = vunpack.c.l.b16 %v3172
        %v3433 = vunpack.c.l.b16 %v3173
        %v3434 = vunpack.c.l.b16 %v3174
        %v3435 = vunpack.c.l.b16 %v3175
        %v3436 = vunpack.c.l.b16 %v3176
        %v3437 = vunpack.c.l.b16 %v3177
        %v3438 = vunpack.c.l.b16 %v3178
        %v3439 = vunpack.c.l.b16 %v3179
        %v3440 = vunpack.c.l.b16 %v3180
        %v3441 = vunpack.c.l.b16 %v3181
        %v3442 = vunpack.c.l.b16 %v3182
        %v3443 = vunpack.c.l.b16 %v3183
        %v3444 = vunpack.c.l.b16 %v3184
        %v3445 = vunpack.c.l.b16 %v3185
        %v3446 = vunpack.c.l.b16 %v3186
        %v3447 = vunpack.c.l.b16 %v3187
        %v3448 = vunpack.c.l.b16 %v3188
        %v3449 = vunpack.c.l.b16 %v3189
        %v3450 = vunpack.c.l.b16 %v3190
        %v3451 = vunpack.c.l.b16 %v3191
        %v3452 = vunpack.c.l.b16 %v3192
        %v3453 = vunpack.c.l.b16 %v3193
        %v3454 = vunpack.c.l.b16 %v3194
        %v3455 = vunpack.c.l.b16 %v3195
        %v3456 = vunpack.c.l.b16 %v3196
        %v3457 = vunpack.c.l.b16 %v3197
        %v3458 = vunpack.c.l.b16 %v3198
        %v3459 = vunpack.c.l.b16 %v3199
        %v3460 = vunpack.c.l.b16 %v3200
        %v3461 = vunpack.c.l.b16 %v3201
        %v3462 = vunpack.c.l.b16 %v3202
        %v3463 = vunpack.c.l.b16 %v3203
        %v3464 = vunpack.c.l.b16 %v3204
        %v3465 = vunpack.c.l.b16 %v3205
        %v3466 = vunpack.c.l.b16 %v3206
        %v3467 = vunpack.c.l.b16 %v3207
        %v3468 = vunpack.c.l.b16 %v3208
        %v3469 = vunpack.c.l.b16 %v3209
        %v3470 = vunpack.c.l.b16 %v3210
        %v3471 = vunpack.c.l.b16 %v3211
        %v3472 = vunpack.c.l.b16 %v3212
        %v3473 = vunpack.c.l.b16 %v3213
        %v3474 = vunpack.c.l.b16 %v3214
        %v3475 = vunpack.c.l.b16 %v3215
        %v3476 = vunpack.c.l.b16 %v3216
        %v3477 = vunpack.c.l.b16 %v3217
        %v3478 = vunpack.c.l.b16 %v3218
        %v3479 = vunpack.c.l.b16 %v3219
        %v3480 = vunpack.c.l.b16 %v3220
        %v3481 = vunpack.c.l.b16 %v3221
        %v3482 = vunpack.c.l.b16 %v3222
        %v3483 = vunpack.c.l.b16 %v3223
        %v3484 = vunpack.c.l.b16 %v3224
        %v3485 = vunpack.c.l.b16 %v3225
        %v3486 = vunpack.c.l.b16 %v3226
        %v3487 = vunpack.c.l.b16 %v3227
        %v3488 = vunpack.c.l.b16 %v3228
        %v3489 = vunpack.c.l.b16 %v3229
        %v3490 = vunpack.c.l.b16 %v3230
        %v3491 = vunpack.c.l.b16 %v3231
        %v3492 = vunpack.c.l.b16 %v3232
        %v3493 = vunpack.c.l.b16 %v3233
        %v3494 = vunpack.c.l.b16 %v3234
        %v3495 = vunpack.c.l.b16 %v3235
        %v3496 = vunpack.c.l.b16 %v3236
        %v3497 = vunpack.c.l.b16 %v3237
        %v3498 = vunpack.c.l.b16 %v3238
        %v3499 = vunpack.c.l.b16 %v3239
        %v3500 = vunpack.c.l.b16 %v3240
        %v3501 = vunpack.c.l.b16 %v3241
        %v3502 = vunpack.c.l.b16 %v3242
        %v3503 = vunpack.c.l.b16 %v3243
        %v3504 = vunpack.c.l.b16 %v3244
        %v3505 = vunpack.c.l.b16 %v3245
        %v3506 = vunpack.c.l.b16 %v3246
        %v3507 = vunpack.c.l.b16 %v3247
        %v3508 = vunpack.c.l.b16 %v3248
        %v3509 = vunpack.c.l.b16 %v3249
        %v3510 = vunpack.c.l.b16 %v3250
        %v3511 = vunpack.c.l.b16 %v3251
        %v3512 = vunpack.c.l.b16 %v3252
        %v3513 = vunpack.c.l.b16 %v3253
        %v3514 = vunpack.c.l.b16 %v3254
        %v3515 = vunpack.c.l.b16 %v3255
        %v3516 = vunpack.c.l.b16 %v3256
        %v3517 = vunpack.c.l.b16 %v3257
        %v3518 = vunpack.c.l.b16 %v3258
        %v3519 = vunpack.c.l.b16 %v3259
        %v3520 = vunpack.c.l.b16 %v3260
        %v3521 = vunpack.c.l.b16 %v3261
        %v3522 = vunpack.c.l.b16 %v3262
        %v3523 = vunpack.c.l.b16 %v3263
        %v3524 = vunpack.c.l.b16 %v3264
        %v3525 = vunpack.c.l.b16 %v3265
        %v3526 = vunpack.c.l.b16 %v3266
        %v3527 = vunpack.c.l.b16 %v3267
        %v3528 = vunpack.c.l.b16 %v3268
        %v3529 = vunpack.c.l.b16 %v3269
        %v3530 = vunpack.c.l.b16 %v3270
        %v3531 = vunpack.c.l.b16 %v3271
        %v3532 = vunpack.c.l.b16 %v3272
        %v3533 = vunpack.c.l.b16 %v3273
        %v3534 = vunpack.c.l.b16 %v3274
        %v3535 = vunpack.c.l.b16 %v3275
        %v3536 = vunpack.c.l.b16 %v3276
        %v3537 = vunpack.c.l.b16 %v3277
        %v3538 = vunpack.c.l.b16 %v3278
        %v3539 = vunpack.c.l.b16 %v3279
        %v3540 = vpack.c.b16 %v3413, %v3412
        %v3541 = vpack.c.b16 %v3415, %v3414
        %v3542 = vpack.c.b16 %v3417, %v3416
        %v3543 = vpack.c.b16 %v3419, %v3418
        %v3544 = vpack.c.b16 %v3421, %v3420
        %v3545 = vpack.c.b16 %v3423, %v3422
        %v3546 = vpack.c.b16 %v3425, %v3424
        %v3547 = vpack.c.b16 %v3427, %v3426
        %v3548 = vpack.c.b16 %v3429, %v3428
        %v3549 = vpack.c.b16 %v3431, %v3430
        %v3550 = vpack.c.b16 %v3433, %v3432
        %v3551 = vpack.c.b16 %v3435, %v3434
        %v3552 = vpack.c.b16 %v3437, %v3436
        %v3553 = vpack.c.b16 %v3439, %v3438
        %v3554 = vpack.c.b16 %v3441, %v3440
        %v3555 = vpack.c.b16 %v3443, %v3442
        %v3556 = vpack.c.b16 %v3445, %v3444
        %v3557 = vpack.c.b16 %v3447, %v3446
        %v3558 = vpack.c.b16 %v3449, %v3448
        %v3559 = vpack.c.b16 %v3451, %v3450
        %v3560 = vpack.c.b16 %v3453, %v3452
        %v3561 = vpack.c.b16 %v3455, %v3454
        %v3562 = vpack.c.b16 %v3457, %v3456
        %v3563 = vpack.c.b16 %v3459, %v3458
        %v3564 = vpack.c.b16 %v3461, %v3460
        %v3565 = vpack.c.b16 %v3463, %v3462
        %v3566 = vpack.c.b16 %v3465, %v3464
        %v3567 = vpack.c.b16 %v3467, %v3466
        %v3568 = vpack.c.b16 %v3469, %v3468
        %v3569 = vpack.c.b16 %v3471, %v3470
        %v3570 = vpack.c.b16 %v3473, %v3472
        %v3571 = vpack.c.b16 %v3475, %v3474
        %v3572 = vpack.c.b16 %v3477, %v3476
        %v3573 = vpack.c.b16 %v3479, %v3478
        %v3574 = vpack.c.b16 %v3481, %v3480
        %v3575 = vpack.c.b16 %v3483, %v3482
        %v3576 = vpack.c.b16 %v3485, %v3484
        %v3577 = vpack.c.b16 %v3487, %v3486
        %v3578 = vpack.c.b16 %v3489, %v3488
        %v3579 = vpack.c.b16 %v3491, %v3490
        %v3580 = vpack.c.b16 %v3493, %v3492
        %v3581 = vpack.c.b16 %v3495, %v3494
        %v3582 = vpack.c.b16 %v3497, %v3496
        %v3583 = vpack.c.b16 %v3499, %v3498
        %v3584 = vpack.c.b16 %v3501, %v3500
        %v3585 = vpack.c.b16 %v3503, %v3502
        %v3586 = vpack.c.b16 %v3505, %v3504
        %v3587 = vpack.c.b16 %v3507, %v3506
        %v3588 = vpack.c.b16 %v3509, %v3508
        %v3589 = vpack.c.b16 %v3511, %v3510
        %v3590 = vpack.c.b16 %v3513, %v3512
        %v3591 = vpack.c.b16 %v3515, %v3514
        %v3592 = vpack.c.b16 %v3517, %v3516
        %v3593 = vpack.c.b16 %v3519, %v3518
        %v3594 = vpack.c.b16 %v3521, %v3520
        %v3595 = vpack.c.b16 %v3523, %v3522
        %v3596 = vpack.c.b16 %v3525, %v3524
        %v3597 = vpack.c.b16 %v3527, %v3526
        %v3598 = vpack.c.b16 %v3529, %v3528
        %v3599 = vpack.c.b16 %v3531, %v3530
        %v3600 = vpack.c.b16 %v3533, %v3532
        %v3601 = vpack.c.b16 %v3535, %v3534
        %v3602 = vpack.c.b16 %v3537, %v3536
        %v3603 = vpack.c.b16 %v3539, %v3538
        %3668 = vmatpush.bf16.msra.mxu0 %v3547
        %3669 = vmatpush.bf16.msra.mxu0 %v3546
        %3670 = vmatpush.bf16.msra.mxu0 %v3545
        %3671 = vmatpush.bf16.msra.mxu0 %v3544
        %3672 = vmatpush.bf16.msra.mxu0 %v3543
        %3673 = vmatpush.bf16.msra.mxu0 %v3542
        %3674 = vmatpush.bf16.msra.mxu0 %v3541
        %3675 = vmatpush.bf16.msra.mxu0 %v3540
        %3676 = vmatmul.bf16.gmra.mxu0 %v3024
        %v3677 = vpop.f32.mrf.mxu0
        %v3678 = vadd.f32 %v3282, %v3677
        %v3679 = vpop.f32.mrf.mxu0
        %v3680 = vadd.f32 %v3282, %v3679
        %3681 = vmatmul.bf16.gmra.mxu0 %v3032
        %v3682 = vpop.f32.mrf.mxu0
        %v3683 = vadd.f32 %v3282, %v3682
        %v3684 = vpop.f32.mrf.mxu0
        %v3685 = vadd.f32 %v3282, %v3684
        %3686 = vmatmul.bf16.gmra.mxu0 %v3040
        %v3687 = vpop.f32.mrf.mxu0
        %v3688 = vadd.f32 %v3282, %v3687
        %v3689 = vpop.f32.mrf.mxu0
        %v3690 = vadd.f32 %v3282, %v3689
        %3691 = vmatmul.bf16.gmra.mxu0 %v3048
        %v3692 = vpop.f32.mrf.mxu0
        %v3693 = vadd.f32 %v3282, %v3692
        %v3694 = vpop.f32.mrf.mxu0
        %v3695 = vadd.f32 %v3282, %v3694
        %3696 = vmatmul.bf16.gmra.mxu0 %v3056
        %v3697 = vpop.f32.mrf.mxu0
        %v3698 = vadd.f32 %v3282, %v3697
        %v3699 = vpop.f32.mrf.mxu0
        %v3700 = vadd.f32 %v3282, %v3699
        %3701 = vmatmul.bf16.gmra.mxu0 %v3064
        %v3702 = vpop.f32.mrf.mxu0
        %v3703 = vadd.f32 %v3282, %v3702
        %v3704 = vpop.f32.mrf.mxu0
        %v3705 = vadd.f32 %v3282, %v3704
        %3706 = vmatmul.bf16.gmra.mxu0 %v3072
        %v3707 = vpop.f32.mrf.mxu0
        %v3708 = vadd.f32 %v3282, %v3707
        %v3709 = vpop.f32.mrf.mxu0
        %v3710 = vadd.f32 %v3282, %v3709
        %3711 = vmatmul.bf16.gmra.mxu0 %v3080
        %v3712 = vpop.f32.mrf.mxu0
        %v3713 = vadd.f32 %v3282, %v3712
        %v3714 = vpop.f32.mrf.mxu0
        %v3715 = vadd.f32 %v3282, %v3714
        %3716 = vmatmul.bf16.gmra.mxu0 %v3088
        %v3717 = vpop.f32.mrf.mxu0
        %v3718 = vadd.f32 %v3282, %v3717
        %v3719 = vpop.f32.mrf.mxu0
        %v3720 = vadd.f32 %v3282, %v3719
        %3721 = vmatmul.bf16.gmra.mxu0 %v3096
        %v3722 = vpop.f32.mrf.mxu0
        %v3723 = vadd.f32 %v3282, %v3722
        %v3724 = vpop.f32.mrf.mxu0
        %v3725 = vadd.f32 %v3282, %v3724
        %3726 = vmatmul.bf16.gmra.mxu0 %v3104
        %v3727 = vpop.f32.mrf.mxu0
        %v3728 = vadd.f32 %v3282, %v3727
        %v3729 = vpop.f32.mrf.mxu0
        %v3730 = vadd.f32 %v3282, %v3729
        %3731 = vmatmul.bf16.gmra.mxu0 %v3112
        %v3732 = vpop.f32.mrf.mxu0
        %v3733 = vadd.f32 %v3282, %v3732
        %v3734 = vpop.f32.mrf.mxu0
        %v3735 = vadd.f32 %v3282, %v3734
        %3736 = vmatmul.bf16.gmra.mxu0 %v3120
        %v3737 = vpop.f32.mrf.mxu0
        %v3738 = vadd.f32 %v3282, %v3737
        %v3739 = vpop.f32.mrf.mxu0
        %v3740 = vadd.f32 %v3282, %v3739
        %3741 = vmatmul.bf16.gmra.mxu0 %v3128
        %v3742 = vpop.f32.mrf.mxu0
        %v3743 = vadd.f32 %v3282, %v3742
        %v3744 = vpop.f32.mrf.mxu0
        %v3745 = vadd.f32 %v3282, %v3744
        %3746 = vmatmul.bf16.gmra.mxu0 %v3136
        %v3747 = vpop.f32.mrf.mxu0
        %v3748 = vadd.f32 %v3282, %v3747
        %v3749 = vpop.f32.mrf.mxu0
        %v3750 = vadd.f32 %v3282, %v3749
        %3751 = vmatmul.bf16.gmra.mxu0 %v3144
        %v3752 = vpop.f32.mrf.mxu0
        %v3753 = vadd.f32 %v3282, %v3752
        %v3754 = vpop.f32.mrf.mxu0
        %v3755 = vadd.f32 %v3282, %v3754
        %3756 = vdwg.mxu0
        %3757 = vmatpush.bf16.msra.mxu0 %v3555
        %3758 = vmatpush.bf16.msra.mxu0 %v3554
        %3759 = vmatpush.bf16.msra.mxu0 %v3553
        %3760 = vmatpush.bf16.msra.mxu0 %v3552
        %3761 = vmatpush.bf16.msra.mxu0 %v3551
        %3762 = vmatpush.bf16.msra.mxu0 %v3550
        %3763 = vmatpush.bf16.msra.mxu0 %v3549
        %3764 = vmatpush.bf16.msra.mxu0 %v3548
        %3765 = vmatmul.bf16.gmra.mxu0 %v3025
        %v3766 = vpop.f32.mrf.mxu0
        %v3767 = vadd.f32 %v3678, %v3766
        %v3768 = vpop.f32.mrf.mxu0
        %v3769 = vadd.f32 %v3680, %v3768
        %3770 = vmatmul.bf16.gmra.mxu0 %v3033
        %v3771 = vpop.f32.mrf.mxu0
        %v3772 = vadd.f32 %v3683, %v3771
        %v3773 = vpop.f32.mrf.mxu0
        %v3774 = vadd.f32 %v3685, %v3773
        %3775 = vmatmul.bf16.gmra.mxu0 %v3041
        %v3776 = vpop.f32.mrf.mxu0
        %v3777 = vadd.f32 %v3688, %v3776
        %v3778 = vpop.f32.mrf.mxu0
        %v3779 = vadd.f32 %v3690, %v3778
        %3780 = vmatmul.bf16.gmra.mxu0 %v3049
        %v3781 = vpop.f32.mrf.mxu0
        %v3782 = vadd.f32 %v3693, %v3781
        %v3783 = vpop.f32.mrf.mxu0
        %v3784 = vadd.f32 %v3695, %v3783
        %3785 = vmatmul.bf16.gmra.mxu0 %v3057
        %v3786 = vpop.f32.mrf.mxu0
        %v3787 = vadd.f32 %v3698, %v3786
        %v3788 = vpop.f32.mrf.mxu0
        %v3789 = vadd.f32 %v3700, %v3788
        %3790 = vmatmul.bf16.gmra.mxu0 %v3065
        %v3791 = vpop.f32.mrf.mxu0
        %v3792 = vadd.f32 %v3703, %v3791
        %v3793 = vpop.f32.mrf.mxu0
        %v3794 = vadd.f32 %v3705, %v3793
        %3795 = vmatmul.bf16.gmra.mxu0 %v3073
        %v3796 = vpop.f32.mrf.mxu0
        %v3797 = vadd.f32 %v3708, %v3796
        %v3798 = vpop.f32.mrf.mxu0
        %v3799 = vadd.f32 %v3710, %v3798
        %3800 = vmatmul.bf16.gmra.mxu0 %v3081
        %v3801 = vpop.f32.mrf.mxu0
        %v3802 = vadd.f32 %v3713, %v3801
        %v3803 = vpop.f32.mrf.mxu0
        %v3804 = vadd.f32 %v3715, %v3803
        %3805 = vmatmul.bf16.gmra.mxu0 %v3089
        %v3806 = vpop.f32.mrf.mxu0
        %v3807 = vadd.f32 %v3718, %v3806
        %v3808 = vpop.f32.mrf.mxu0
        %v3809 = vadd.f32 %v3720, %v3808
        %3810 = vmatmul.bf16.gmra.mxu0 %v3097
        %v3811 = vpop.f32.mrf.mxu0
        %v3812 = vadd.f32 %v3723, %v3811
        %v3813 = vpop.f32.mrf.mxu0
        %v3814 = vadd.f32 %v3725, %v3813
        %3815 = vmatmul.bf16.gmra.mxu0 %v3105
        %v3816 = vpop.f32.mrf.mxu0
        %v3817 = vadd.f32 %v3728, %v3816
        %v3818 = vpop.f32.mrf.mxu0
        %v3819 = vadd.f32 %v3730, %v3818
        %3820 = vmatmul.bf16.gmra.mxu0 %v3113
        %v3821 = vpop.f32.mrf.mxu0
        %v3822 = vadd.f32 %v3733, %v3821
        %v3823 = vpop.f32.mrf.mxu0
        %v3824 = vadd.f32 %v3735, %v3823
        %3825 = vmatmul.bf16.gmra.mxu0 %v3121
        %v3826 = vpop.f32.mrf.mxu0
        %v3827 = vadd.f32 %v3738, %v3826
        %v3828 = vpop.f32.mrf.mxu0
        %v3829 = vadd.f32 %v3740, %v3828
        %3830 = vmatmul.bf16.gmra.mxu0 %v3129
        %v3831 = vpop.f32.mrf.mxu0
        %v3832 = vadd.f32 %v3743, %v3831
        %v3833 = vpop.f32.mrf.mxu0
        %v3834 = vadd.f32 %v3745, %v3833
        %3835 = vmatmul.bf16.gmra.mxu0 %v3137
        %v3836 = vpop.f32.mrf.mxu0
        %v3837 = vadd.f32 %v3748, %v3836
        %v3838 = vpop.f32.mrf.mxu0
        %v3839 = vadd.f32 %v3750, %v3838
        %3840 = vmatmul.bf16.gmra.mxu0 %v3145
        %v3841 = vpop.f32.mrf.mxu0
        %v3842 = vadd.f32 %v3753, %v3841
        %v3843 = vpop.f32.mrf.mxu0
        %v3844 = vadd.f32 %v3755, %v3843
        %3845 = vdwg.mxu0
        %3846 = vmatpush.bf16.msra.mxu0 %v3563
        %3847 = vmatpush.bf16.msra.mxu0 %v3562
        %3848 = vmatpush.bf16.msra.mxu0 %v3561
        %3849 = vmatpush.bf16.msra.mxu0 %v3560
        %3850 = vmatpush.bf16.msra.mxu0 %v3559
        %3851 = vmatpush.bf16.msra.mxu0 %v3558
        %3852 = vmatpush.bf16.msra.mxu0 %v3557
        %3853 = vmatpush.bf16.msra.mxu0 %v3556
        %3854 = vmatmul.bf16.gmra.mxu0 %v3026
        %v3855 = vpop.f32.mrf.mxu0
        %v3856 = vadd.f32 %v3767, %v3855
        %v3857 = vpop.f32.mrf.mxu0
        %v3858 = vadd.f32 %v3769, %v3857
        %3859 = vmatmul.bf16.gmra.mxu0 %v3034
        %v3860 = vpop.f32.mrf.mxu0
        %v3861 = vadd.f32 %v3772, %v3860
        %v3862 = vpop.f32.mrf.mxu0
        %v3863 = vadd.f32 %v3774, %v3862
        %3864 = vmatmul.bf16.gmra.mxu0 %v3042
        %v3865 = vpop.f32.mrf.mxu0
        %v3866 = vadd.f32 %v3777, %v3865
        %v3867 = vpop.f32.mrf.mxu0
        %v3868 = vadd.f32 %v3779, %v3867
        %3869 = vmatmul.bf16.gmra.mxu0 %v3050
        %v3870 = vpop.f32.mrf.mxu0
        %v3871 = vadd.f32 %v3782, %v3870
        %v3872 = vpop.f32.mrf.mxu0
        %v3873 = vadd.f32 %v3784, %v3872
        %3874 = vmatmul.bf16.gmra.mxu0 %v3058
        %v3875 = vpop.f32.mrf.mxu0
        %v3876 = vadd.f32 %v3787, %v3875
        %v3877 = vpop.f32.mrf.mxu0
        %v3878 = vadd.f32 %v3789, %v3877
        %3879 = vmatmul.bf16.gmra.mxu0 %v3066
        %v3880 = vpop.f32.mrf.mxu0
        %v3881 = vadd.f32 %v3792, %v3880
        %v3882 = vpop.f32.mrf.mxu0
        %v3883 = vadd.f32 %v3794, %v3882
        %3884 = vmatmul.bf16.gmra.mxu0 %v3074
        %v3885 = vpop.f32.mrf.mxu0
        %v3886 = vadd.f32 %v3797, %v3885
        %v3887 = vpop.f32.mrf.mxu0
        %v3888 = vadd.f32 %v3799, %v3887
        %3889 = vmatmul.bf16.gmra.mxu0 %v3082
        %v3890 = vpop.f32.mrf.mxu0
        %v3891 = vadd.f32 %v3802, %v3890
        %v3892 = vpop.f32.mrf.mxu0
        %v3893 = vadd.f32 %v3804, %v3892
        %3894 = vmatmul.bf16.gmra.mxu0 %v3090
        %v3895 = vpop.f32.mrf.mxu0
        %v3896 = vadd.f32 %v3807, %v3895
        %v3897 = vpop.f32.mrf.mxu0
        %v3898 = vadd.f32 %v3809, %v3897
        %3899 = vmatmul.bf16.gmra.mxu0 %v3098
        %v3900 = vpop.f32.mrf.mxu0
        %v3901 = vadd.f32 %v3812, %v3900
        %v3902 = vpop.f32.mrf.mxu0
        %v3903 = vadd.f32 %v3814, %v3902
        %3904 = vmatmul.bf16.gmra.mxu0 %v3106
        %v3905 = vpop.f32.mrf.mxu0
        %v3906 = vadd.f32 %v3817, %v3905
        %v3907 = vpop.f32.mrf.mxu0
        %v3908 = vadd.f32 %v3819, %v3907
        %3909 = vmatmul.bf16.gmra.mxu0 %v3114
        %v3910 = vpop.f32.mrf.mxu0
        %v3911 = vadd.f32 %v3822, %v3910
        %v3912 = vpop.f32.mrf.mxu0
        %v3913 = vadd.f32 %v3824, %v3912
        %3914 = vmatmul.bf16.gmra.mxu0 %v3122
        %v3915 = vpop.f32.mrf.mxu0
        %v3916 = vadd.f32 %v3827, %v3915
        %v3917 = vpop.f32.mrf.mxu0
        %v3918 = vadd.f32 %v3829, %v3917
        %3919 = vmatmul.bf16.gmra.mxu0 %v3130
        %v3920 = vpop.f32.mrf.mxu0
        %v3921 = vadd.f32 %v3832, %v3920
        %v3922 = vpop.f32.mrf.mxu0
        %v3923 = vadd.f32 %v3834, %v3922
        %3924 = vmatmul.bf16.gmra.mxu0 %v3138
        %v3925 = vpop.f32.mrf.mxu0
        %v3926 = vadd.f32 %v3837, %v3925
        %v3927 = vpop.f32.mrf.mxu0
        %v3928 = vadd.f32 %v3839, %v3927
        %3929 = vmatmul.bf16.gmra.mxu0 %v3146
        %v3930 = vpop.f32.mrf.mxu0
        %v3931 = vadd.f32 %v3842, %v3930
        %v3932 = vpop.f32.mrf.mxu0
        %v3933 = vadd.f32 %v3844, %v3932
        %3934 = vdwg.mxu0
        %3935 = vmatpush.bf16.msra.mxu0 %v3571
        %3936 = vmatpush.bf16.msra.mxu0 %v3570
        %3937 = vmatpush.bf16.msra.mxu0 %v3569
        %3938 = vmatpush.bf16.msra.mxu0 %v3568
        %3939 = vmatpush.bf16.msra.mxu0 %v3567
        %3940 = vmatpush.bf16.msra.mxu0 %v3566
        %3941 = vmatpush.bf16.msra.mxu0 %v3565
        %3942 = vmatpush.bf16.msra.mxu0 %v3564
        %3943 = vmatmul.bf16.gmra.mxu0 %v3027
        %v3944 = vpop.f32.mrf.mxu0
        %v3945 = vadd.f32 %v3856, %v3944
        %v3946 = vpop.f32.mrf.mxu0
        %v3947 = vadd.f32 %v3858, %v3946
        %3948 = vmatmul.bf16.gmra.mxu0 %v3035
        %v3949 = vpop.f32.mrf.mxu0
        %v3950 = vadd.f32 %v3861, %v3949
        %v3951 = vpop.f32.mrf.mxu0
        %v3952 = vadd.f32 %v3863, %v3951
        %3953 = vmatmul.bf16.gmra.mxu0 %v3043
        %v3954 = vpop.f32.mrf.mxu0
        %v3955 = vadd.f32 %v3866, %v3954
        %v3956 = vpop.f32.mrf.mxu0
        %v3957 = vadd.f32 %v3868, %v3956
        %3958 = vmatmul.bf16.gmra.mxu0 %v3051
        %v3959 = vpop.f32.mrf.mxu0
        %v3960 = vadd.f32 %v3871, %v3959
        %v3961 = vpop.f32.mrf.mxu0
        %v3962 = vadd.f32 %v3873, %v3961
        %3963 = vmatmul.bf16.gmra.mxu0 %v3059
        %v3964 = vpop.f32.mrf.mxu0
        %v3965 = vadd.f32 %v3876, %v3964
        %v3966 = vpop.f32.mrf.mxu0
        %v3967 = vadd.f32 %v3878, %v3966
        %3968 = vmatmul.bf16.gmra.mxu0 %v3067
        %v3969 = vpop.f32.mrf.mxu0
        %v3970 = vadd.f32 %v3881, %v3969
        %v3971 = vpop.f32.mrf.mxu0
        %v3972 = vadd.f32 %v3883, %v3971
        %3973 = vmatmul.bf16.gmra.mxu0 %v3075
        %v3974 = vpop.f32.mrf.mxu0
        %v3975 = vadd.f32 %v3886, %v3974
        %v3976 = vpop.f32.mrf.mxu0
        %v3977 = vadd.f32 %v3888, %v3976
        %3978 = vmatmul.bf16.gmra.mxu0 %v3083
        %v3979 = vpop.f32.mrf.mxu0
        %v3980 = vadd.f32 %v3891, %v3979
        %v3981 = vpop.f32.mrf.mxu0
        %v3982 = vadd.f32 %v3893, %v3981
        %3983 = vmatmul.bf16.gmra.mxu0 %v3091
        %v3984 = vpop.f32.mrf.mxu0
        %v3985 = vadd.f32 %v3896, %v3984
        %v3986 = vpop.f32.mrf.mxu0
        %v3987 = vadd.f32 %v3898, %v3986
        %3988 = vmatmul.bf16.gmra.mxu0 %v3099
        %v3989 = vpop.f32.mrf.mxu0
        %v3990 = vadd.f32 %v3901, %v3989
        %v3991 = vpop.f32.mrf.mxu0
        %v3992 = vadd.f32 %v3903, %v3991
        %3993 = vmatmul.bf16.gmra.mxu0 %v3107
        %v3994 = vpop.f32.mrf.mxu0
        %v3995 = vadd.f32 %v3906, %v3994
        %v3996 = vpop.f32.mrf.mxu0
        %v3997 = vadd.f32 %v3908, %v3996
        %3998 = vmatmul.bf16.gmra.mxu0 %v3115
        %v3999 = vpop.f32.mrf.mxu0
        %v4000 = vadd.f32 %v3911, %v3999
        %v4001 = vpop.f32.mrf.mxu0
        %v4002 = vadd.f32 %v3913, %v4001
        %4003 = vmatmul.bf16.gmra.mxu0 %v3123
        %v4004 = vpop.f32.mrf.mxu0
        %v4005 = vadd.f32 %v3916, %v4004
        %v4006 = vpop.f32.mrf.mxu0
        %v4007 = vadd.f32 %v3918, %v4006
        %4008 = vmatmul.bf16.gmra.mxu0 %v3131
        %v4009 = vpop.f32.mrf.mxu0
        %v4010 = vadd.f32 %v3921, %v4009
        %v4011 = vpop.f32.mrf.mxu0
        %v4012 = vadd.f32 %v3923, %v4011
        %4013 = vmatmul.bf16.gmra.mxu0 %v3139
        %v4014 = vpop.f32.mrf.mxu0
        %v4015 = vadd.f32 %v3926, %v4014
        %v4016 = vpop.f32.mrf.mxu0
        %v4017 = vadd.f32 %v3928, %v4016
        %4018 = vmatmul.bf16.gmra.mxu0 %v3147
        %v4019 = vpop.f32.mrf.mxu0
        %v4020 = vadd.f32 %v3931, %v4019
        %v4021 = vpop.f32.mrf.mxu0
        %v4022 = vadd.f32 %v3933, %v4021
        %4023 = vdwg.mxu0
        %4024 = vmatpush.bf16.msra.mxu0 %v3579
        %4025 = vmatpush.bf16.msra.mxu0 %v3578
        %4026 = vmatpush.bf16.msra.mxu0 %v3577
        %4027 = vmatpush.bf16.msra.mxu0 %v3576
        %4028 = vmatpush.bf16.msra.mxu0 %v3575
        %4029 = vmatpush.bf16.msra.mxu0 %v3574
        %4030 = vmatpush.bf16.msra.mxu0 %v3573
        %4031 = vmatpush.bf16.msra.mxu0 %v3572
        %4032 = vmatmul.bf16.gmra.mxu0 %v3028
        %v4033 = vpop.f32.mrf.mxu0
        %v4034 = vadd.f32 %v3945, %v4033
        %v4035 = vpop.f32.mrf.mxu0
        %v4036 = vadd.f32 %v3947, %v4035
        %4037 = vmatmul.bf16.gmra.mxu0 %v3036
        %v4038 = vpop.f32.mrf.mxu0
        %v4039 = vadd.f32 %v3950, %v4038
        %v4040 = vpop.f32.mrf.mxu0
        %v4041 = vadd.f32 %v3952, %v4040
        %4042 = vmatmul.bf16.gmra.mxu0 %v3044
        %v4043 = vpop.f32.mrf.mxu0
        %v4044 = vadd.f32 %v3955, %v4043
        %v4045 = vpop.f32.mrf.mxu0
        %v4046 = vadd.f32 %v3957, %v4045
        %4047 = vmatmul.bf16.gmra.mxu0 %v3052
        %v4048 = vpop.f32.mrf.mxu0
        %v4049 = vadd.f32 %v3960, %v4048
        %v4050 = vpop.f32.mrf.mxu0
        %v4051 = vadd.f32 %v3962, %v4050
        %4052 = vmatmul.bf16.gmra.mxu0 %v3060
        %v4053 = vpop.f32.mrf.mxu0
        %v4054 = vadd.f32 %v3965, %v4053
        %v4055 = vpop.f32.mrf.mxu0
        %v4056 = vadd.f32 %v3967, %v4055
        %4057 = vmatmul.bf16.gmra.mxu0 %v3068
        %v4058 = vpop.f32.mrf.mxu0
        %v4059 = vadd.f32 %v3970, %v4058
        %v4060 = vpop.f32.mrf.mxu0
        %v4061 = vadd.f32 %v3972, %v4060
        %4062 = vmatmul.bf16.gmra.mxu0 %v3076
        %v4063 = vpop.f32.mrf.mxu0
        %v4064 = vadd.f32 %v3975, %v4063
        %v4065 = vpop.f32.mrf.mxu0
        %v4066 = vadd.f32 %v3977, %v4065
        %4067 = vmatmul.bf16.gmra.mxu0 %v3084
        %v4068 = vpop.f32.mrf.mxu0
        %v4069 = vadd.f32 %v3980, %v4068
        %v4070 = vpop.f32.mrf.mxu0
        %v4071 = vadd.f32 %v3982, %v4070
        %4072 = vmatmul.bf16.gmra.mxu0 %v3092
        %v4073 = vpop.f32.mrf.mxu0
        %v4074 = vadd.f32 %v3985, %v4073
        %v4075 = vpop.f32.mrf.mxu0
        %v4076 = vadd.f32 %v3987, %v4075
        %4077 = vmatmul.bf16.gmra.mxu0 %v3100
        %v4078 = vpop.f32.mrf.mxu0
        %v4079 = vadd.f32 %v3990, %v4078
        %v4080 = vpop.f32.mrf.mxu0
        %v4081 = vadd.f32 %v3992, %v4080
        %4082 = vmatmul.bf16.gmra.mxu0 %v3108
        %v4083 = vpop.f32.mrf.mxu0
        %v4084 = vadd.f32 %v3995, %v4083
        %v4085 = vpop.f32.mrf.mxu0
        %v4086 = vadd.f32 %v3997, %v4085
        %4087 = vmatmul.bf16.gmra.mxu0 %v3116
        %v4088 = vpop.f32.mrf.mxu0
        %v4089 = vadd.f32 %v4000, %v4088
        %v4090 = vpop.f32.mrf.mxu0
        %v4091 = vadd.f32 %v4002, %v4090
        %4092 = vmatmul.bf16.gmra.mxu0 %v3124
        %v4093 = vpop.f32.mrf.mxu0
        %v4094 = vadd.f32 %v4005, %v4093
        %v4095 = vpop.f32.mrf.mxu0
        %v4096 = vadd.f32 %v4007, %v4095
        %4097 = vmatmul.bf16.gmra.mxu0 %v3132
        %v4098 = vpop.f32.mrf.mxu0
        %v4099 = vadd.f32 %v4010, %v4098
        %v4100 = vpop.f32.mrf.mxu0
        %v4101 = vadd.f32 %v4012, %v4100
        %4102 = vmatmul.bf16.gmra.mxu0 %v3140
        %v4103 = vpop.f32.mrf.mxu0
        %v4104 = vadd.f32 %v4015, %v4103
        %v4105 = vpop.f32.mrf.mxu0
        %v4106 = vadd.f32 %v4017, %v4105
        %4107 = vmatmul.bf16.gmra.mxu0 %v3148
        %v4108 = vpop.f32.mrf.mxu0
        %v4109 = vadd.f32 %v4020, %v4108
        %v4110 = vpop.f32.mrf.mxu0
        %v4111 = vadd.f32 %v4022, %v4110
        %4112 = vdwg.mxu0
        %4113 = vmatpush.bf16.msra.mxu0 %v3587
        %4114 = vmatpush.bf16.msra.mxu0 %v3586
        %4115 = vmatpush.bf16.msra.mxu0 %v3585
        %4116 = vmatpush.bf16.msra.mxu0 %v3584
        %4117 = vmatpush.bf16.msra.mxu0 %v3583
        %4118 = vmatpush.bf16.msra.mxu0 %v3582
        %4119 = vmatpush.bf16.msra.mxu0 %v3581
        %4120 = vmatpush.bf16.msra.mxu0 %v3580
        %4121 = vmatmul.bf16.gmra.mxu0 %v3029
        %v4122 = vpop.f32.mrf.mxu0
        %v4123 = vadd.f32 %v4034, %v4122
        %v4124 = vpop.f32.mrf.mxu0
        %v4125 = vadd.f32 %v4036, %v4124
        %4126 = vmatmul.bf16.gmra.mxu0 %v3037
        %v4127 = vpop.f32.mrf.mxu0
        %v4128 = vadd.f32 %v4039, %v4127
        %v4129 = vpop.f32.mrf.mxu0
        %v4130 = vadd.f32 %v4041, %v4129
        %4131 = vmatmul.bf16.gmra.mxu0 %v3045
        %v4132 = vpop.f32.mrf.mxu0
        %v4133 = vadd.f32 %v4044, %v4132
        %v4134 = vpop.f32.mrf.mxu0
        %v4135 = vadd.f32 %v4046, %v4134
        %4136 = vmatmul.bf16.gmra.mxu0 %v3053
        %v4137 = vpop.f32.mrf.mxu0
        %v4138 = vadd.f32 %v4049, %v4137
        %v4139 = vpop.f32.mrf.mxu0
        %v4140 = vadd.f32 %v4051, %v4139
        %4141 = vmatmul.bf16.gmra.mxu0 %v3061
        %v4142 = vpop.f32.mrf.mxu0
        %v4143 = vadd.f32 %v4054, %v4142
        %v4144 = vpop.f32.mrf.mxu0
        %v4145 = vadd.f32 %v4056, %v4144
        %4146 = vmatmul.bf16.gmra.mxu0 %v3069
        %v4147 = vpop.f32.mrf.mxu0
        %v4148 = vadd.f32 %v4059, %v4147
        %v4149 = vpop.f32.mrf.mxu0
        %v4150 = vadd.f32 %v4061, %v4149
        %4151 = vmatmul.bf16.gmra.mxu0 %v3077
        %v4152 = vpop.f32.mrf.mxu0
        %v4153 = vadd.f32 %v4064, %v4152
        %v4154 = vpop.f32.mrf.mxu0
        %v4155 = vadd.f32 %v4066, %v4154
        %4156 = vmatmul.bf16.gmra.mxu0 %v3085
        %v4157 = vpop.f32.mrf.mxu0
        %v4158 = vadd.f32 %v4069, %v4157
        %v4159 = vpop.f32.mrf.mxu0
        %v4160 = vadd.f32 %v4071, %v4159
        %4161 = vmatmul.bf16.gmra.mxu0 %v3093
        %v4162 = vpop.f32.mrf.mxu0
        %v4163 = vadd.f32 %v4074, %v4162
        %v4164 = vpop.f32.mrf.mxu0
        %v4165 = vadd.f32 %v4076, %v4164
        %4166 = vmatmul.bf16.gmra.mxu0 %v3101
        %v4167 = vpop.f32.mrf.mxu0
        %v4168 = vadd.f32 %v4079, %v4167
        %v4169 = vpop.f32.mrf.mxu0
        %v4170 = vadd.f32 %v4081, %v4169
        %4171 = vmatmul.bf16.gmra.mxu0 %v3109
        %v4172 = vpop.f32.mrf.mxu0
        %v4173 = vadd.f32 %v4084, %v4172
        %v4174 = vpop.f32.mrf.mxu0
        %v4175 = vadd.f32 %v4086, %v4174
        %4176 = vmatmul.bf16.gmra.mxu0 %v3117
        %v4177 = vpop.f32.mrf.mxu0
        %v4178 = vadd.f32 %v4089, %v4177
        %v4179 = vpop.f32.mrf.mxu0
        %v4180 = vadd.f32 %v4091, %v4179
        %4181 = vmatmul.bf16.gmra.mxu0 %v3125
        %v4182 = vpop.f32.mrf.mxu0
        %v4183 = vadd.f32 %v4094, %v4182
        %v4184 = vpop.f32.mrf.mxu0
        %v4185 = vadd.f32 %v4096, %v4184
        %4186 = vmatmul.bf16.gmra.mxu0 %v3133
        %v4187 = vpop.f32.mrf.mxu0
        %v4188 = vadd.f32 %v4099, %v4187
        %v4189 = vpop.f32.mrf.mxu0
        %v4190 = vadd.f32 %v4101, %v4189
        %4191 = vmatmul.bf16.gmra.mxu0 %v3141
        %v4192 = vpop.f32.mrf.mxu0
        %v4193 = vadd.f32 %v4104, %v4192
        %v4194 = vpop.f32.mrf.mxu0
        %v4195 = vadd.f32 %v4106, %v4194
        %4196 = vmatmul.bf16.gmra.mxu0 %v3149
        %v4197 = vpop.f32.mrf.mxu0
        %v4198 = vadd.f32 %v4109, %v4197
        %v4199 = vpop.f32.mrf.mxu0
        %v4200 = vadd.f32 %v4111, %v4199
        %4201 = vdwg.mxu0
        %4202 = vmatpush.bf16.msra.mxu0 %v3595
        %4203 = vmatpush.bf16.msra.mxu0 %v3594
        %4204 = vmatpush.bf16.msra.mxu0 %v3593
        %4205 = vmatpush.bf16.msra.mxu0 %v3592
        %4206 = vmatpush.bf16.msra.mxu0 %v3591
        %4207 = vmatpush.bf16.msra.mxu0 %v3590
        %4208 = vmatpush.bf16.msra.mxu0 %v3589
        %4209 = vmatpush.bf16.msra.mxu0 %v3588
        %4210 = vmatmul.bf16.gmra.mxu0 %v3030
        %v4211 = vpop.f32.mrf.mxu0
        %v4212 = vadd.f32 %v4123, %v4211
        %v4213 = vpop.f32.mrf.mxu0
        %v4214 = vadd.f32 %v4125, %v4213
        %4215 = vmatmul.bf16.gmra.mxu0 %v3038
        %v4216 = vpop.f32.mrf.mxu0
        %v4217 = vadd.f32 %v4128, %v4216
        %v4218 = vpop.f32.mrf.mxu0
        %v4219 = vadd.f32 %v4130, %v4218
        %4220 = vmatmul.bf16.gmra.mxu0 %v3046
        %v4221 = vpop.f32.mrf.mxu0
        %v4222 = vadd.f32 %v4133, %v4221
        %v4223 = vpop.f32.mrf.mxu0
        %v4224 = vadd.f32 %v4135, %v4223
        %4225 = vmatmul.bf16.gmra.mxu0 %v3054
        %v4226 = vpop.f32.mrf.mxu0
        %v4227 = vadd.f32 %v4138, %v4226
        %v4228 = vpop.f32.mrf.mxu0
        %v4229 = vadd.f32 %v4140, %v4228
        %4230 = vmatmul.bf16.gmra.mxu0 %v3062
        %v4231 = vpop.f32.mrf.mxu0
        %v4232 = vadd.f32 %v4143, %v4231
        %v4233 = vpop.f32.mrf.mxu0
        %v4234 = vadd.f32 %v4145, %v4233
        %4235 = vmatmul.bf16.gmra.mxu0 %v3070
        %v4236 = vpop.f32.mrf.mxu0
        %v4237 = vadd.f32 %v4148, %v4236
        %v4238 = vpop.f32.mrf.mxu0
        %v4239 = vadd.f32 %v4150, %v4238
        %4240 = vmatmul.bf16.gmra.mxu0 %v3078
        %v4241 = vpop.f32.mrf.mxu0
        %v4242 = vadd.f32 %v4153, %v4241
        %v4243 = vpop.f32.mrf.mxu0
        %v4244 = vadd.f32 %v4155, %v4243
        %4245 = vmatmul.bf16.gmra.mxu0 %v3086
        %v4246 = vpop.f32.mrf.mxu0
        %v4247 = vadd.f32 %v4158, %v4246
        %v4248 = vpop.f32.mrf.mxu0
        %v4249 = vadd.f32 %v4160, %v4248
        %4250 = vmatmul.bf16.gmra.mxu0 %v3094
        %v4251 = vpop.f32.mrf.mxu0
        %v4252 = vadd.f32 %v4163, %v4251
        %v4253 = vpop.f32.mrf.mxu0
        %v4254 = vadd.f32 %v4165, %v4253
        %4255 = vmatmul.bf16.gmra.mxu0 %v3102
        %v4256 = vpop.f32.mrf.mxu0
        %v4257 = vadd.f32 %v4168, %v4256
        %v4258 = vpop.f32.mrf.mxu0
        %v4259 = vadd.f32 %v4170, %v4258
        %4260 = vmatmul.bf16.gmra.mxu0 %v3110
        %v4261 = vpop.f32.mrf.mxu0
        %v4262 = vadd.f32 %v4173, %v4261
        %v4263 = vpop.f32.mrf.mxu0
        %v4264 = vadd.f32 %v4175, %v4263
        %4265 = vmatmul.bf16.gmra.mxu0 %v3118
        %v4266 = vpop.f32.mrf.mxu0
        %v4267 = vadd.f32 %v4178, %v4266
        %v4268 = vpop.f32.mrf.mxu0
        %v4269 = vadd.f32 %v4180, %v4268
        %4270 = vmatmul.bf16.gmra.mxu0 %v3126
        %v4271 = vpop.f32.mrf.mxu0
        %v4272 = vadd.f32 %v4183, %v4271
        %v4273 = vpop.f32.mrf.mxu0
        %v4274 = vadd.f32 %v4185, %v4273
        %4275 = vmatmul.bf16.gmra.mxu0 %v3134
        %v4276 = vpop.f32.mrf.mxu0
        %v4277 = vadd.f32 %v4188, %v4276
        %v4278 = vpop.f32.mrf.mxu0
        %v4279 = vadd.f32 %v4190, %v4278
        %4280 = vmatmul.bf16.gmra.mxu0 %v3142
        %v4281 = vpop.f32.mrf.mxu0
        %v4282 = vadd.f32 %v4193, %v4281
        %v4283 = vpop.f32.mrf.mxu0
        %v4284 = vadd.f32 %v4195, %v4283
        %4285 = vmatmul.bf16.gmra.mxu0 %v3150
        %v4286 = vpop.f32.mrf.mxu0
        %v4287 = vadd.f32 %v4198, %v4286
        %v4288 = vpop.f32.mrf.mxu0
        %v4289 = vadd.f32 %v4200, %v4288
        %4290 = vdwg.mxu0
        %4291 = vmatpush.bf16.msra.mxu0 %v3603
        %4292 = vmatpush.bf16.msra.mxu0 %v3602
        %4293 = vmatpush.bf16.msra.mxu0 %v3601
        %4294 = vmatpush.bf16.msra.mxu0 %v3600
        %4295 = vmatpush.bf16.msra.mxu0 %v3599
        %4296 = vmatpush.bf16.msra.mxu0 %v3598
        %4297 = vmatpush.bf16.msra.mxu0 %v3597
        %4298 = vmatpush.bf16.msra.mxu0 %v3596
        %4299 = vmatmul.bf16.gmra.mxu0 %v3031
        %v4300 = vpop.f32.mrf.mxu0
        %v4301 = vadd.f32 %v4212, %v4300
        %v4302 = vpop.f32.mrf.mxu0
        %v4303 = vadd.f32 %v4214, %v4302
        %4304 = vmatmul.bf16.gmra.mxu0 %v3039
        %v4305 = vpop.f32.mrf.mxu0
        %v4306 = vadd.f32 %v4217, %v4305
        %v4307 = vpop.f32.mrf.mxu0
        %v4308 = vadd.f32 %v4219, %v4307
        %4309 = vmatmul.bf16.gmra.mxu0 %v3047
        %v4310 = vpop.f32.mrf.mxu0
        %v4311 = vadd.f32 %v4222, %v4310
        %v4312 = vpop.f32.mrf.mxu0
        %v4313 = vadd.f32 %v4224, %v4312
        %4314 = vmatmul.bf16.gmra.mxu0 %v3055
        %v4315 = vpop.f32.mrf.mxu0
        %v4316 = vadd.f32 %v4227, %v4315
        %v4317 = vpop.f32.mrf.mxu0
        %v4318 = vadd.f32 %v4229, %v4317
        %4319 = vmatmul.bf16.gmra.mxu0 %v3063
        %v4320 = vpop.f32.mrf.mxu0
        %v4321 = vadd.f32 %v4232, %v4320
        %v4322 = vpop.f32.mrf.mxu0
        %v4323 = vadd.f32 %v4234, %v4322
        %4324 = vmatmul.bf16.gmra.mxu0 %v3071
        %v4325 = vpop.f32.mrf.mxu0
        %v4326 = vadd.f32 %v4237, %v4325
        %v4327 = vpop.f32.mrf.mxu0
        %v4328 = vadd.f32 %v4239, %v4327
        %4329 = vmatmul.bf16.gmra.mxu0 %v3079
        %v4330 = vpop.f32.mrf.mxu0
        %v4331 = vadd.f32 %v4242, %v4330
        %v4332 = vpop.f32.mrf.mxu0
        %v4333 = vadd.f32 %v4244, %v4332
        %4334 = vmatmul.bf16.gmra.mxu0 %v3087
        %v4335 = vpop.f32.mrf.mxu0
        %v4336 = vadd.f32 %v4247, %v4335
        %v4337 = vpop.f32.mrf.mxu0
        %v4338 = vadd.f32 %v4249, %v4337
        %4339 = vmatmul.bf16.gmra.mxu0 %v3095
        %v4340 = vpop.f32.mrf.mxu0
        %v4341 = vadd.f32 %v4252, %v4340
        %v4342 = vpop.f32.mrf.mxu0
        %v4343 = vadd.f32 %v4254, %v4342
        %4344 = vmatmul.bf16.gmra.mxu0 %v3103
        %v4345 = vpop.f32.mrf.mxu0
        %v4346 = vadd.f32 %v4257, %v4345
        %v4347 = vpop.f32.mrf.mxu0
        %v4348 = vadd.f32 %v4259, %v4347
        %4349 = vmatmul.bf16.gmra.mxu0 %v3111
        %v4350 = vpop.f32.mrf.mxu0
        %v4351 = vadd.f32 %v4262, %v4350
        %v4352 = vpop.f32.mrf.mxu0
        %v4353 = vadd.f32 %v4264, %v4352
        %4354 = vmatmul.bf16.gmra.mxu0 %v3119
        %v4355 = vpop.f32.mrf.mxu0
        %v4356 = vadd.f32 %v4267, %v4355
        %v4357 = vpop.f32.mrf.mxu0
        %v4358 = vadd.f32 %v4269, %v4357
        %4359 = vmatmul.bf16.gmra.mxu0 %v3127
        %v4360 = vpop.f32.mrf.mxu0
        %v4361 = vadd.f32 %v4272, %v4360
        %v4362 = vpop.f32.mrf.mxu0
        %v4363 = vadd.f32 %v4274, %v4362
        %4364 = vmatmul.bf16.gmra.mxu0 %v3135
        %v4365 = vpop.f32.mrf.mxu0
        %v4366 = vadd.f32 %v4277, %v4365
        %v4367 = vpop.f32.mrf.mxu0
        %v4368 = vadd.f32 %v4279, %v4367
        %4369 = vmatmul.bf16.gmra.mxu0 %v3143
        %v4370 = vpop.f32.mrf.mxu0
        %v4371 = vadd.f32 %v4282, %v4370
        %v4372 = vpop.f32.mrf.mxu0
        %v4373 = vadd.f32 %v4284, %v4372
        %4374 = vmatmul.bf16.gmra.mxu0 %v3151
        %v4375 = vpop.f32.mrf.mxu0
        %v4376 = vadd.f32 %v4287, %v4375
        %v4377 = vpop.f32.mrf.mxu0
        %v4378 = vadd.f32 %v4289, %v4377
        %4379 = vdwg.mxu0
        %v4380 = vmax.f32 %v4301, 0.0
        %v4381 = vmax.f32 %v4303, 0.0
        %v4382 = vmax.f32 %v4306, 0.0
        %v4383 = vmax.f32 %v4308, 0.0
        %v4384 = vmax.f32 %v4311, 0.0
        %v4385 = vmax.f32 %v4313, 0.0
        %v4386 = vmax.f32 %v4316, 0.0
        %v4387 = vmax.f32 %v4318, 0.0
        %v4388 = vmax.f32 %v4321, 0.0
        %v4389 = vmax.f32 %v4323, 0.0
        %v4390 = vmax.f32 %v4326, 0.0
        %v4391 = vmax.f32 %v4328, 0.0
        %v4392 = vmax.f32 %v4331, 0.0
        %v4393 = vmax.f32 %v4333, 0.0
        %v4394 = vmax.f32 %v4336, 0.0
        %v4395 = vmax.f32 %v4338, 0.0
        %v4396 = vmax.f32 %v4341, 0.0
        %v4397 = vmax.f32 %v4343, 0.0
        %v4398 = vmax.f32 %v4346, 0.0
        %v4399 = vmax.f32 %v4348, 0.0
        %v4400 = vmax.f32 %v4351, 0.0
        %v4401 = vmax.f32 %v4353, 0.0
        %v4402 = vmax.f32 %v4356, 0.0
        %v4403 = vmax.f32 %v4358, 0.0
        %v4404 = vmax.f32 %v4361, 0.0
        %v4405 = vmax.f32 %v4363, 0.0
        %v4406 = vmax.f32 %v4366, 0.0
        %v4407 = vmax.f32 %v4368, 0.0
        %v4408 = vmax.f32 %v4371, 0.0
        %v4409 = vmax.f32 %v4373, 0.0
        %v4410 = vmax.f32 %v4376, 0.0
        %v4411 = vmax.f32 %v4378, 0.0
        %v4412 = vpack.c.bf16 %v4381, %v4380
        %v4413 = vpack.c.bf16 %v4383, %v4382
        %v4414 = vpack.c.bf16 %v4385, %v4384
        %v4415 = vpack.c.bf16 %v4387, %v4386
        %v4416 = vpack.c.bf16 %v4389, %v4388
        %v4417 = vpack.c.bf16 %v4391, %v4390
        %v4418 = vpack.c.bf16 %v4393, %v4392
        %v4419 = vpack.c.bf16 %v4395, %v4394
        %v4420 = vpack.c.bf16 %v4397, %v4396
        %v4421 = vpack.c.bf16 %v4399, %v4398
        %v4422 = vpack.c.bf16 %v4401, %v4400
        %v4423 = vpack.c.bf16 %v4403, %v4402
        %v4424 = vpack.c.bf16 %v4405, %v4404
        %v4425 = vpack.c.bf16 %v4407, %v4406
        %v4426 = vpack.c.bf16 %v4409, %v4408
        %v4427 = vpack.c.bf16 %v4411, %v4410
        %v4428 = vld [vmem:[#allocation10] sm:$0xf]
        %v4429 = vld [vmem:[#allocation10 + $0x4] sm:$0xf]
        %v4430 = vld [vmem:[#allocation10 + $0x8] sm:$0xf]
        %v4431 = vld [vmem:[#allocation10 + $0xc] sm:$0xf]
        %v4432 = vld [vmem:[#allocation10 + $0x10] sm:$0xf]
        %v4433 = vld [vmem:[#allocation10 + $0x14] sm:$0xf]
        %v4434 = vld [vmem:[#allocation10 + $0x18] sm:$0xf]
        %v4435 = vld [vmem:[#allocation10 + $0x1c] sm:$0xf]
        %v4436 = vld [vmem:[#allocation10 + $0x20] sm:$0xf]
        %v4437 = vld [vmem:[#allocation10 + $0x24] sm:$0xf]
        %v4438 = vld [vmem:[#allocation10 + $0x28] sm:$0xf]
        %v4439 = vld [vmem:[#allocation10 + $0x2c] sm:$0xf]
        %v4440 = vld [vmem:[#allocation10 + $0x30] sm:$0xf]
        %v4441 = vld [vmem:[#allocation10 + $0x34] sm:$0xf]
        %v4442 = vld [vmem:[#allocation10 + $0x38] sm:$0xf]
        %v4443 = vld [vmem:[#allocation10 + $0x3c] sm:$0xf]
        %v4444 = vld [vmem:[%s6] sm:$0x1]
        %v4446 = vperm.slane %v4444, 0
        %v4464 = vunpack.c.l.b16 %v4428
        %v4465 = vunpack.c.l.b16 %v4429
        %v4466 = vunpack.c.l.b16 %v4430
        %v4467 = vunpack.c.l.b16 %v4431
        %v4468 = vunpack.c.l.b16 %v4432
        %v4469 = vunpack.c.l.b16 %v4433
        %v4470 = vunpack.c.l.b16 %v4434
        %v4471 = vunpack.c.l.b16 %v4435
        %v4472 = vunpack.c.l.b16 %v4436
        %v4473 = vunpack.c.l.b16 %v4437
        %v4474 = vunpack.c.l.b16 %v4438
        %v4475 = vunpack.c.l.b16 %v4439
        %v4476 = vunpack.c.l.b16 %v4440
        %v4477 = vunpack.c.l.b16 %v4441
        %v4478 = vunpack.c.l.b16 %v4442
        %v4479 = vunpack.c.l.b16 %v4443
        %v4480 = vpack.c.b16 %v4465, %v4464
        %v4481 = vpack.c.b16 %v4467, %v4466
        %v4482 = vpack.c.b16 %v4469, %v4468
        %v4483 = vpack.c.b16 %v4471, %v4470
        %v4484 = vpack.c.b16 %v4473, %v4472
        %v4485 = vpack.c.b16 %v4475, %v4474
        %v4486 = vpack.c.b16 %v4477, %v4476
        %v4487 = vpack.c.b16 %v4479, %v4478
        %4496 = vmatpush.bf16.msra.mxu0 %v4487
        %4497 = vmatpush.bf16.msra.mxu0 %v4486
        %4498 = vmatpush.bf16.msra.mxu0 %v4485
        %4499 = vmatpush.bf16.msra.mxu0 %v4484
        %4500 = vmatpush.bf16.msra.mxu0 %v4483
        %4501 = vmatpush.bf16.msra.mxu0 %v4482
        %4502 = vmatpush.bf16.msra.mxu0 %v4481
        %4503 = vmatpush.bf16.msra.mxu0 %v4480
        %4504 = vmatmul.bf16.gmra.mxu0 %v4412
        %v4505 = vpop.f32.mrf.mxu0
        %v4506 = vadd.f32 %v4446, %v4505
        %v4507 = vpop.f32.mrf.mxu0
        %v4508 = vadd.f32 %v4446, %v4507
        %4509 = vmatmul.bf16.gmra.mxu0 %v4413
        %v4510 = vpop.f32.mrf.mxu0
        %v4511 = vadd.f32 %v4446, %v4510
        %v4512 = vpop.f32.mrf.mxu0
        %v4513 = vadd.f32 %v4446, %v4512
        %4514 = vmatmul.bf16.gmra.mxu0 %v4414
        %v4515 = vpop.f32.mrf.mxu0
        %v4516 = vadd.f32 %v4446, %v4515
        %v4517 = vpop.f32.mrf.mxu0
        %v4518 = vadd.f32 %v4446, %v4517
        %4519 = vmatmul.bf16.gmra.mxu0 %v4415
        %v4520 = vpop.f32.mrf.mxu0
        %v4521 = vadd.f32 %v4446, %v4520
        %v4522 = vpop.f32.mrf.mxu0
        %v4523 = vadd.f32 %v4446, %v4522
        %4524 = vmatmul.bf16.gmra.mxu0 %v4416
        %v4525 = vpop.f32.mrf.mxu0
        %v4526 = vadd.f32 %v4446, %v4525
        %v4527 = vpop.f32.mrf.mxu0
        %v4528 = vadd.f32 %v4446, %v4527
        %4529 = vmatmul.bf16.gmra.mxu0 %v4417
        %v4530 = vpop.f32.mrf.mxu0
        %v4531 = vadd.f32 %v4446, %v4530
        %v4532 = vpop.f32.mrf.mxu0
        %v4533 = vadd.f32 %v4446, %v4532
        %4534 = vmatmul.bf16.gmra.mxu0 %v4418
        %v4535 = vpop.f32.mrf.mxu0
        %v4536 = vadd.f32 %v4446, %v4535
        %v4537 = vpop.f32.mrf.mxu0
        %v4538 = vadd.f32 %v4446, %v4537
        %4539 = vmatmul.bf16.gmra.mxu0 %v4419
        %v4540 = vpop.f32.mrf.mxu0
        %v4541 = vadd.f32 %v4446, %v4540
        %v4542 = vpop.f32.mrf.mxu0
        %v4543 = vadd.f32 %v4446, %v4542
        %4544 = vmatmul.bf16.gmra.mxu0 %v4420
        %v4545 = vpop.f32.mrf.mxu0
        %v4546 = vadd.f32 %v4446, %v4545
        %v4547 = vpop.f32.mrf.mxu0
        %v4548 = vadd.f32 %v4446, %v4547
        %4549 = vmatmul.bf16.gmra.mxu0 %v4421
        %v4550 = vpop.f32.mrf.mxu0
        %v4551 = vadd.f32 %v4446, %v4550
        %v4552 = vpop.f32.mrf.mxu0
        %v4553 = vadd.f32 %v4446, %v4552
        %4554 = vmatmul.bf16.gmra.mxu0 %v4422
        %v4555 = vpop.f32.mrf.mxu0
        %v4556 = vadd.f32 %v4446, %v4555
        %v4557 = vpop.f32.mrf.mxu0
        %v4558 = vadd.f32 %v4446, %v4557
        %4559 = vmatmul.bf16.gmra.mxu0 %v4423
        %v4560 = vpop.f32.mrf.mxu0
        %v4561 = vadd.f32 %v4446, %v4560
        %v4562 = vpop.f32.mrf.mxu0
        %v4563 = vadd.f32 %v4446, %v4562
        %4564 = vmatmul.bf16.gmra.mxu0 %v4424
        %v4565 = vpop.f32.mrf.mxu0
        %v4566 = vadd.f32 %v4446, %v4565
        %v4567 = vpop.f32.mrf.mxu0
        %v4568 = vadd.f32 %v4446, %v4567
        %4569 = vmatmul.bf16.gmra.mxu0 %v4425
        %v4570 = vpop.f32.mrf.mxu0
        %v4571 = vadd.f32 %v4446, %v4570
        %v4572 = vpop.f32.mrf.mxu0
        %v4573 = vadd.f32 %v4446, %v4572
        %4574 = vmatmul.bf16.gmra.mxu0 %v4426
        %v4575 = vpop.f32.mrf.mxu0
        %v4576 = vadd.f32 %v4446, %v4575
        %v4577 = vpop.f32.mrf.mxu0
        %v4578 = vadd.f32 %v4446, %v4577
        %4579 = vmatmul.bf16.gmra.mxu0 %v4427
        %v4580 = vpop.f32.mrf.mxu0
        %v4581 = vadd.f32 %v4446, %v4580
        %v4582 = vpop.f32.mrf.mxu0
        %v4583 = vadd.f32 %v4446, %v4582
        %4584 = vdwg.mxu0
        %v4585 = vmax.f32 %v4506, 0.0
        %v4586 = vmax.f32 %v4508, 0.0
        %v4587 = vmax.f32 %v4511, 0.0
        %v4588 = vmax.f32 %v4513, 0.0
        %v4589 = vmax.f32 %v4516, 0.0
        %v4590 = vmax.f32 %v4518, 0.0
        %v4591 = vmax.f32 %v4521, 0.0
        %v4592 = vmax.f32 %v4523, 0.0
        %v4593 = vmax.f32 %v4526, 0.0
        %v4594 = vmax.f32 %v4528, 0.0
        %v4595 = vmax.f32 %v4531, 0.0
        %v4596 = vmax.f32 %v4533, 0.0
        %v4597 = vmax.f32 %v4536, 0.0
        %v4598 = vmax.f32 %v4538, 0.0
        %v4599 = vmax.f32 %v4541, 0.0
        %v4600 = vmax.f32 %v4543, 0.0
        %v4601 = vmax.f32 %v4546, 0.0
        %v4602 = vmax.f32 %v4548, 0.0
        %v4603 = vmax.f32 %v4551, 0.0
        %v4604 = vmax.f32 %v4553, 0.0
        %v4605 = vmax.f32 %v4556, 0.0
        %v4606 = vmax.f32 %v4558, 0.0
        %v4607 = vmax.f32 %v4561, 0.0
        %v4608 = vmax.f32 %v4563, 0.0
        %v4609 = vmax.f32 %v4566, 0.0
        %v4610 = vmax.f32 %v4568, 0.0
        %v4611 = vmax.f32 %v4571, 0.0
        %v4612 = vmax.f32 %v4573, 0.0
        %v4613 = vmax.f32 %v4576, 0.0
        %v4614 = vmax.f32 %v4578, 0.0
        %v4615 = vmax.f32 %v4581, 0.0
        %v4616 = vmax.f32 %v4583, 0.0
        %4617 = vst [vmem:[%s363] sm:$0xff] %v4585
        %4618 = vst [vmem:[%s363 + $0x8] sm:$0xff] %v4586
        %4619 = vst [vmem:[%s363 + $0x10] sm:$0xff] %v4587
        %4620 = vst [vmem:[%s363 + $0x18] sm:$0xff] %v4588
        %4621 = vst [vmem:[%s363 + $0x20] sm:$0xff] %v4589
        %4622 = vst [vmem:[%s363 + $0x28] sm:$0xff] %v4590
        %4623 = vst [vmem:[%s363 + $0x30] sm:$0xff] %v4591
        %4624 = vst [vmem:[%s363 + $0x38] sm:$0xff] %v4592
        %4625 = vst [vmem:[%s363 + $0x40] sm:$0xff] %v4593
        %4626 = vst [vmem:[%s363 + $0x48] sm:$0xff] %v4594
        %4627 = vst [vmem:[%s363 + $0x50] sm:$0xff] %v4595
        %4628 = vst [vmem:[%s363 + $0x58] sm:$0xff] %v4596
        %4629 = vst [vmem:[%s363 + $0x60] sm:$0xff] %v4597
        %4630 = vst [vmem:[%s363 + $0x68] sm:$0xff] %v4598
        %4631 = vst [vmem:[%s363 + $0x70] sm:$0xff] %v4599
        %4632 = vst [vmem:[%s363 + $0x78] sm:$0xff] %v4600
        %4633 = vst [vmem:[%s363 + $0x80] sm:$0xff] %v4601
        %4634 = vst [vmem:[%s363 + $0x88] sm:$0xff] %v4602
        %4635 = vst [vmem:[%s363 + $0x90] sm:$0xff] %v4603
        %4636 = vst [vmem:[%s363 + $0x98] sm:$0xff] %v4604
        %4637 = vst [vmem:[%s363 + $0xa0] sm:$0xff] %v4605
        %4638 = vst [vmem:[%s363 + $0xa8] sm:$0xff] %v4606
        %4639 = vst [vmem:[%s363 + $0xb0] sm:$0xff] %v4607
        %4640 = vst [vmem:[%s363 + $0xb8] sm:$0xff] %v4608
        %4641 = vst [vmem:[%s363 + $0xc0] sm:$0xff] %v4609
        %4642 = vst [vmem:[%s363 + $0xc8] sm:$0xff] %v4610
        %4643 = vst [vmem:[%s363 + $0xd0] sm:$0xff] %v4611
        %4644 = vst [vmem:[%s363 + $0xd8] sm:$0xff] %v4612
        %4645 = vst [vmem:[%s363 + $0xe0] sm:$0xff] %v4613
        %4646 = vst [vmem:[%s363 + $0xe8] sm:$0xff] %v4614
        %4647 = vst [vmem:[%s363 + $0xf0] sm:$0xff] %v4615
        %4648 = vst [vmem:[%s363 + $0xf8] sm:$0xff] %v4616
        %s4649 = sand.u32 %s186, 1
        %s4650 = scalar_lea.sflag [#allocation4], %s4649
        %s4651 = sand.u32 %s186, 1
        %s4652 = smul.addr %s4651, 256
        %s4653 = scalar_lea.vmem [#allocation11], %s4652
        // Predicated region
        $region69: #{tpu_custom_call.1} parent=47 // pred_check
          %p4654 = pneg %p196
        $region70: #{tpu_custom_call.1} parent=47 // pred_check_branch
          %4656 = sbr.rel (%p4654) target = $region72
        $region71: #{tpu_custom_call.1} parent=47 // pred_region
          %s4657 = smul.u32 32, %s26
          %4659 = vsyncadd %s4650, 0
          %s4660 = smul.addr %s4657, 8
          %s4661 = scalar_lea.hbm %s7, %s4660
          %s4662 = sshll.u32 %s4653, 4
          %s4663 = int_to_ptr.vmem [resolvable:$true] %s4662
          %s4664 = sshll.u32 %s4661, 4
          %s4665 = int_to_ptr.hbm [resolvable:$true] %s4664
          %4670 = dma.vmem_to_hbm [thread:$0]  %s4663, 4096, %s4665, %s4650, 128, 128, 8
        $region72: #{tpu_custom_call.1} parent=47 // pred_fallthru
          _
      $region48: #{tpu_custom_call.1} parent=5 // pred_fallthru
        _
      %p4671 = scmp.le.s32.totalorder 2, %s21
      // Predicated region
      $region73: #{tpu_custom_call.1} parent=5 // pred_check
        %p4672 = pneg %p4671
      $region74: #{tpu_custom_call.1} parent=5 // pred_check_branch
        %4674 = sbr.rel (%p4672) target = $region76
      $region75: #{tpu_custom_call.1} parent=5 // pred_region
        %s4675 = ssub.s32 %s21, 2
        // Predicated region
        $region77: #{tpu_custom_call.1} parent=75 // pred_check
          %p4676 = pneg %p202
        $region78: #{tpu_custom_call.1} parent=75 // pred_check_branch
          %4678 = sbr.rel (%p4676) target = $region80
        $region79: #{tpu_custom_call.1} parent=75 // pred_region
          %s4679 = sand.u32 %s187, 1
          %s4680 = scalar_lea.sflag [#allocation4], %s4679
          %s4681 = sand.u32 %s187, 1
          %s4682 = smul.addr %s4681, 256
          %s4683 = scalar_lea.vmem [#allocation11], %s4682
          %4685 = dma.done %s4680, 4096
        $region80: #{tpu_custom_call.1} parent=75 // pred_fallthru
          _
      $region76: #{tpu_custom_call.1} parent=5 // pred_fallthru
        _
    $region6: #{tpu_custom_call.1} parent=1 // loop_footer
      %s25 = sadd.s32 1, %s21
    $region7: #{tpu_custom_call.1} parent=1 // loop_footer_branch
      %20 = sbr.rel target = $region3
    $region8: #{tpu_custom_call.1} parent=1 // loop_exit
      _
    %4686 = vsyncpa [#allocation3], 1
    %s4687 = scalar_lea.sflag [#allocation3], 1
    %4688 = vsyncpa %s4687, 1
    %4689 = vsyncpa [#allocation6], 1
    %4690 = vsyncpa [#allocation9], 1
    %4691 = vsyncpa [#allocation4], 1
    %s4692 = scalar_lea.sflag [#allocation4], 1
    %4693 = vsyncpa %s4692, 1

</llo_original>
